<compile_context>
chip_gen: v7x
topology: tpu7x:2x2x1
jax: 0.10.0
libtpu: 0.0.40
codegen_flags: <defaults>
</compile_context>

<pallas_src>
import functools

import jax
import jax.numpy as jnp
from jax import lax
from jax.experimental import pallas as pl
from jax.experimental.pallas import tpu as pltpu


def _capsule_routing_kernel(x_ref, w_ref, out_ref, *, num_iterations):
    # x_ref  : (TB, IC, R)     -- batch tile, lane-dense in R
    # w_ref  : (1, IC, R, OC)  -- one capsule's route weights
    # out_ref: (1, 1, TB, OC)
    TB, IC, R = x_ref.shape
    OC = w_ref.shape[-1]
    inv_r = 1.0 / float(R)

    # Routing logits are constant along the out_channel axis in the reference
    # implementation (they start at zero and are updated by a (..., 1)-shaped
    # delta that broadcasts over OC), so we carry them as (TB, R).  `None`
    # encodes "identically zero" (iteration 0), which lets us skip the first
    # softmax entirely (probs == 1/R).
    logits = None
    outputs = None

    for it in range(num_iterations):                  # statically unrolled
        if logits is None:
            probs = None                              # uniform 1/R
        else:
            m = jnp.max(logits, axis=-1, keepdims=True)
            e = jnp.exp(logits - m)
            denom = jnp.sum(e, axis=-1, keepdims=True)           # (TB, 1)
            probs = e * pl.reciprocal(denom, approx=True)        # (TB, R)

        # s[b, o] = sum_{i,r} probs[b,r] * x[b,i,r] * w[o,i,r]
        # IC-unrolled MXU matmuls over lane-dense (TB, R) @ (R, OC) tiles;
        # no priors temporary is ever built.
        s = None
        for i in range(IC):
            xi = x_ref[:, i, :]                                  # (TB, R)
            pxi = xi if probs is None else probs * xi
            term = jnp.dot(pxi, w_ref[0, i],
                           preferred_element_type=jnp.float32)   # (TB, OC)
            s = term if s is None else s + term
        if probs is None:
            s = s * inv_r

        # squash along out_channels:
        #   (sq/(1+sq)) * s / sqrt(sq)  ==  s * sqrt(sq) / (1 + sq)
        sq = jnp.sum(s * s, axis=-1, keepdims=True)              # (TB, 1)
        scale = jnp.sqrt(sq) * pl.reciprocal(1.0 + sq, approx=True)
        outputs = s * scale                                      # (TB, OC)

        if it != num_iterations - 1:
            # delta[b, r] = sum_o priors[b,o,r] * outputs[b,o]
            #             = sum_i x[b,i,r] * (outputs @ w[i]^T)[b, r]
            delta = None
            for i in range(IC):
                zi = lax.dot_general(
                    outputs, w_ref[0, i],
                    dimension_numbers=(((1,), (1,)), ((), ())),   # A @ B^T
                    preferred_element_type=jnp.float32)           # (TB, R)
                term = zi * x_ref[:, i, :]
                delta = term if delta is None else delta + term
            logits = delta if logits is None else logits + delta

    out_ref[0, 0] = outputs.astype(out_ref.dtype)


def _vmem_estimate_bytes(tb, IC, R, OC):
    """Rough per-grid-step VMEM working set (f32, double-buffered blocks)."""
    x_blk = 2 * tb * IC * R * 4          # x input block (double-buffered)
    w_blk = 2 * IC * R * OC * 4          # per-capsule weight block
    o_blk = 2 * tb * OC * 4              # output block
    tmp = 4 * tb * R * 4 + 4 * tb * OC * 4   # probs/logits/delta/px + s/outputs
    return x_blk + w_blk + o_blk + tmp


def _pick_batch_tile(B, IC, R, OC, vmem_budget_bytes):
    """Largest batch tile (divisor of B, multiple of 8 unless == B) that fits."""
    tb = B
    while (tb % 2 == 0 and (tb // 2) % 8 == 0
           and _vmem_estimate_bytes(tb, IC, R, OC) > vmem_budget_bytes):
        tb //= 2
    # Give v7x's second TensorCore an independent batch tile even when the
    # whole batch would fit; the extra per-tile weight re-stream is hidden
    # behind the MXU work at CapsNet shapes.
    if tb == B and B >= 16 and (B // 2) % 8 == 0:
        tb = B // 2
    return tb


def capsule_layer_forward(x, route_weights, num_iterations,
                          batch_tile=None, vmem_budget_bytes=24 * 2**20):
    """Routing branch of CapsuleLayer.forward.

    x:             (B, R, IC)     float32
    route_weights: (C, R, IC, OC) float32
    returns:       (C, B, 1, 1, OC) float32  (same as the PyTorch module)
    """
    B, R, IC = x.shape
    C, R2, IC2, OC = route_weights.shape
    assert R == R2 and IC == IC2

    if batch_tile is None:
        batch_tile = _pick_batch_tile(B, IC, R, OC, vmem_budget_bytes)
    assert B % batch_tile == 0
    # (8, 128) block rule: the batch-tile dim of the output block must be a
    # multiple of 8 (f32 sublane) or equal the full batch.
    assert batch_tile % 8 == 0 or batch_tile == B
    nb = B // batch_tile

    # Raise the scoped-VMEM limit past v5e's 16 MiB default while staying well
    # under v7x's 64 MiB physical VMEM.
    est = _vmem_estimate_bytes(batch_tile, IC, R, OC)
    vmem_limit = int(min(max(2 * est, 32 * 2**20), 48 * 2**20))

    # Lane-dense layout plumbing, once, outside the kernel: route-node axis R
    # last for x (softmax / elementwise over R), and (IC, R, OC) per capsule
    # for the weights so each w[i] is a ready-to-use (R, OC) matmul operand.
    x_t = jnp.transpose(x, (0, 2, 1))                    # (B, IC, R)
    w_t = jnp.transpose(route_weights, (0, 2, 1, 3))     # (C, IC, R, OC)

    kernel = functools.partial(_capsule_routing_kernel,
                               num_iterations=num_iterations)

    out = pl.pallas_call(
        kernel,
        out_shape=jax.ShapeDtypeStruct((C, nb, batch_tile, OC), jnp.float32),
        grid_spec=pltpu.PrefetchScalarGridSpec(
            num_scalar_prefetch=0,
            # Batch tile on the OUTER axis, capsule on the INNER axis: the
            # large x block is indexed only by the outer axis so it stays
            # VMEM-resident across all C capsules; only the small per-capsule
            # weight block is re-fetched on the inner axis.
            grid=(nb, C),
            in_specs=[
                pl.BlockSpec((batch_tile, IC, R), lambda b, c: (b, 0, 0)),
                pl.BlockSpec((1, IC, R, OC), lambda b, c: (c, 0, 0, 0)),
            ],
            out_specs=pl.BlockSpec((1, 1, batch_tile, OC),
                                   lambda b, c: (c, b, 0, 0)),
        ),
        compiler_params=pltpu.CompilerParams(
            dimension_semantics=("parallel", "parallel"),
            vmem_limit_bytes=vmem_limit),
    )(x_t, w_t)

    return out.reshape(C, B, 1, 1, OC)


def _reference_forward(x, route_weights, num_iterations):
    """Pure-JAX replica of the PyTorch routing branch, for verification."""
    # priors: (C, B, R, 1, OC)
    priors = jnp.matmul(x[None, :, :, None, :],
                        route_weights[:, None, :, :, :])
    logits = jnp.zeros_like(priors)

    def squash(t, axis=-1):
        sq = jnp.sum(t * t, axis=axis, keepdims=True)
        return (sq / (1.0 + sq)) * t / jnp.sqrt(sq)

    outputs = None
    for i in range(num_iterations):
        probs = jax.nn.softmax(logits, axis=2)
        outputs = squash(jnp.sum(probs * priors, axis=2, keepdims=True))
        if i != num_iterations - 1:
            delta = jnp.sum(priors * outputs, axis=-1, keepdims=True)
            logits = logits + delta
    return outputs


if __name__ == "__main__":
    # Small shapes consistent with the routing branch of CapsuleLayer.
    B = 2            # batch
    C = 4            # num_capsules
    R = 128          # num_route_nodes (lane-dense axis)
    IC = 8           # in_channels
    OC = 16          # out_channels
    NUM_ITERS = 3    # num_iterations

    key = jax.random.PRNGKey(0)
    kx, kw = jax.random.split(key)
    x = jax.random.normal(kx, (B, R, IC), dtype=jnp.float32)
    # nn.Parameter(torch.randn(num_capsules, num_route_nodes, in_channels, out_channels))
    route_weights = jax.random.normal(kw, (C, R, IC, OC), dtype=jnp.float32)

    out = capsule_layer_forward(x, route_weights, NUM_ITERS)
    out = jax.block_until_ready(out)

    ref = _reference_forward(x, route_weights, NUM_ITERS)
    assert out.shape == (C, B, 1, 1, OC), out.shape
    # Tolerance loosened vs. the pure-VPU version: approx-reciprocal softmax /
    # squash denominators and MXU multi-pass f32 matmuls (per the review's
    # correctness note).  Structural bugs would produce O(1) errors.
    assert jnp.allclose(out, ref, rtol=2e-2, atol=5e-3), \
        float(jnp.max(jnp.abs(out - ref)))

    print("KERNEL_OK")
</pallas_src>

<mosaic_0001>
module attributes {stable_mosaic.version = 11 : i64} {
  func.func @_capsule_routing_kernel(%arg0: i32, %arg1: i32, %arg2: memref<2x8x128xf32, #tpu.memory_space<vmem>>, %arg3: memref<1x8x128x16xf32, #tpu.memory_space<vmem>>, %arg4: memref<1x1x2x16xf32, #tpu.memory_space<vmem>>) attributes {dimension_semantics = [#tpu.dimension_semantics<parallel>, #tpu.dimension_semantics<parallel>], iteration_bounds = array<i64: 1, 4>, scalar_prefetch = 0 : i64, scratch_operands = 0 : i64, tpu.core_type = #tpu.core_type<tc>, window_params = [{transform_indices = @transform_0, window_bounds = array<i64: 2, 8, 128>}, {transform_indices = @transform_1, window_bounds = array<i64: 1, 8, 128, 16>}, {transform_indices = @transform_2, window_bounds = array<i64: 1, 1, 2, 16>}]} {
    %c0 = arith.constant 0 : index
    %c0_0 = arith.constant 0 : index
    %c0_1 = arith.constant 0 : index
    %0 = vector.load %arg2[%c0, %c0_0, %c0_1] : memref<2x8x128xf32, #tpu.memory_space<vmem>>, vector<2x1x128xf32>
    %1 = vector.shape_cast %0 : vector<2x1x128xf32> to vector<2x128xf32>
    %c0_2 = arith.constant 0 : index
    %c0_3 = arith.constant 0 : index
    %c0_4 = arith.constant 0 : index
    %c0_5 = arith.constant 0 : index
    %2 = vector.load %arg3[%c0_2, %c0_3, %c0_4, %c0_5] : memref<1x8x128x16xf32, #tpu.memory_space<vmem>>, vector<1x1x128x16xf32>
    %3 = vector.shape_cast %2 : vector<1x1x128x16xf32> to vector<128x16xf32>
    %cst = arith.constant dense<0.000000e+00> : vector<2x16xf32>
    %4 = tpu.matmul %1, %3, %cst {dimension_numbers = #tpu.dot_dimension_numbers<[1], [0], [0], [1], [0, 0, 1, 1], [], []>} : vector<2x128xf32>, vector<128x16xf32>, vector<2x16xf32> -> vector<2x16xf32>
    %c0_6 = arith.constant 0 : index
    %c1 = arith.constant 1 : index
    %c0_7 = arith.constant 0 : index
    %5 = vector.load %arg2[%c0_6, %c1, %c0_7] : memref<2x8x128xf32, #tpu.memory_space<vmem>>, vector<2x1x128xf32>
    %6 = vector.shape_cast %5 : vector<2x1x128xf32> to vector<2x128xf32>
    %c0_8 = arith.constant 0 : index
    %c1_9 = arith.constant 1 : index
    %c0_10 = arith.constant 0 : index
    %c0_11 = arith.constant 0 : index
    %7 = vector.load %arg3[%c0_8, %c1_9, %c0_10, %c0_11] : memref<1x8x128x16xf32, #tpu.memory_space<vmem>>, vector<1x1x128x16xf32>
    %8 = vector.shape_cast %7 : vector<1x1x128x16xf32> to vector<128x16xf32>
    %cst_12 = arith.constant dense<0.000000e+00> : vector<2x16xf32>
    %9 = tpu.matmul %6, %8, %cst_12 {dimension_numbers = #tpu.dot_dimension_numbers<[1], [0], [0], [1], [0, 0, 1, 1], [], []>} : vector<2x128xf32>, vector<128x16xf32>, vector<2x16xf32> -> vector<2x16xf32>
    %10 = arith.addf %4, %9 : vector<2x16xf32>
    %c0_13 = arith.constant 0 : index
    %c2 = arith.constant 2 : index
    %c0_14 = arith.constant 0 : index
    %11 = vector.load %arg2[%c0_13, %c2, %c0_14] : memref<2x8x128xf32, #tpu.memory_space<vmem>>, vector<2x1x128xf32>
    %12 = vector.shape_cast %11 : vector<2x1x128xf32> to vector<2x128xf32>
    %c0_15 = arith.constant 0 : index
    %c2_16 = arith.constant 2 : index
    %c0_17 = arith.constant 0 : index
    %c0_18 = arith.constant 0 : index
    %13 = vector.load %arg3[%c0_15, %c2_16, %c0_17, %c0_18] : memref<1x8x128x16xf32, #tpu.memory_space<vmem>>, vector<1x1x128x16xf32>
    %14 = vector.shape_cast %13 : vector<1x1x128x16xf32> to vector<128x16xf32>
    %cst_19 = arith.constant dense<0.000000e+00> : vector<2x16xf32>
    %15 = tpu.matmul %12, %14, %cst_19 {dimension_numbers = #tpu.dot_dimension_numbers<[1], [0], [0], [1], [0, 0, 1, 1], [], []>} : vector<2x128xf32>, vector<128x16xf32>, vector<2x16xf32> -> vector<2x16xf32>
    %16 = arith.addf %10, %15 : vector<2x16xf32>
    %c0_20 = arith.constant 0 : index
    %c3 = arith.constant 3 : index
    %c0_21 = arith.constant 0 : index
    %17 = vector.load %arg2[%c0_20, %c3, %c0_21] : memref<2x8x128xf32, #tpu.memory_space<vmem>>, vector<2x1x128xf32>
    %18 = vector.shape_cast %17 : vector<2x1x128xf32> to vector<2x128xf32>
    %c0_22 = arith.constant 0 : index
    %c3_23 = arith.constant 3 : index
    %c0_24 = arith.constant 0 : index
    %c0_25 = arith.constant 0 : index
    %19 = vector.load %arg3[%c0_22, %c3_23, %c0_24, %c0_25] : memref<1x8x128x16xf32, #tpu.memory_space<vmem>>, vector<1x1x128x16xf32>
    %20 = vector.shape_cast %19 : vector<1x1x128x16xf32> to vector<128x16xf32>
    %cst_26 = arith.constant dense<0.000000e+00> : vector<2x16xf32>
    %21 = tpu.matmul %18, %20, %cst_26 {dimension_numbers = #tpu.dot_dimension_numbers<[1], [0], [0], [1], [0, 0, 1, 1], [], []>} : vector<2x128xf32>, vector<128x16xf32>, vector<2x16xf32> -> vector<2x16xf32>
    %22 = arith.addf %16, %21 : vector<2x16xf32>
    %c0_27 = arith.constant 0 : index
    %c4 = arith.constant 4 : index
    %c0_28 = arith.constant 0 : index
    %23 = vector.load %arg2[%c0_27, %c4, %c0_28] : memref<2x8x128xf32, #tpu.memory_space<vmem>>, vector<2x1x128xf32>
    %24 = vector.shape_cast %23 : vector<2x1x128xf32> to vector<2x128xf32>
    %c0_29 = arith.constant 0 : index
    %c4_30 = arith.constant 4 : index
    %c0_31 = arith.constant 0 : index
    %c0_32 = arith.constant 0 : index
    %25 = vector.load %arg3[%c0_29, %c4_30, %c0_31, %c0_32] : memref<1x8x128x16xf32, #tpu.memory_space<vmem>>, vector<1x1x128x16xf32>
    %26 = vector.shape_cast %25 : vector<1x1x128x16xf32> to vector<128x16xf32>
    %cst_33 = arith.constant dense<0.000000e+00> : vector<2x16xf32>
    %27 = tpu.matmul %24, %26, %cst_33 {dimension_numbers = #tpu.dot_dimension_numbers<[1], [0], [0], [1], [0, 0, 1, 1], [], []>} : vector<2x128xf32>, vector<128x16xf32>, vector<2x16xf32> -> vector<2x16xf32>
    %28 = arith.addf %22, %27 : vector<2x16xf32>
    %c0_34 = arith.constant 0 : index
    %c5 = arith.constant 5 : index
    %c0_35 = arith.constant 0 : index
    %29 = vector.load %arg2[%c0_34, %c5, %c0_35] : memref<2x8x128xf32, #tpu.memory_space<vmem>>, vector<2x1x128xf32>
    %30 = vector.shape_cast %29 : vector<2x1x128xf32> to vector<2x128xf32>
    %c0_36 = arith.constant 0 : index
    %c5_37 = arith.constant 5 : index
    %c0_38 = arith.constant 0 : index
    %c0_39 = arith.constant 0 : index
    %31 = vector.load %arg3[%c0_36, %c5_37, %c0_38, %c0_39] : memref<1x8x128x16xf32, #tpu.memory_space<vmem>>, vector<1x1x128x16xf32>
    %32 = vector.shape_cast %31 : vector<1x1x128x16xf32> to vector<128x16xf32>
    %cst_40 = arith.constant dense<0.000000e+00> : vector<2x16xf32>
    %33 = tpu.matmul %30, %32, %cst_40 {dimension_numbers = #tpu.dot_dimension_numbers<[1], [0], [0], [1], [0, 0, 1, 1], [], []>} : vector<2x128xf32>, vector<128x16xf32>, vector<2x16xf32> -> vector<2x16xf32>
    %34 = arith.addf %28, %33 : vector<2x16xf32>
    %c0_41 = arith.constant 0 : index
    %c6 = arith.constant 6 : index
    %c0_42 = arith.constant 0 : index
    %35 = vector.load %arg2[%c0_41, %c6, %c0_42] : memref<2x8x128xf32, #tpu.memory_space<vmem>>, vector<2x1x128xf32>
    %36 = vector.shape_cast %35 : vector<2x1x128xf32> to vector<2x128xf32>
    %c0_43 = arith.constant 0 : index
    %c6_44 = arith.constant 6 : index
    %c0_45 = arith.constant 0 : index
    %c0_46 = arith.constant 0 : index
    %37 = vector.load %arg3[%c0_43, %c6_44, %c0_45, %c0_46] : memref<1x8x128x16xf32, #tpu.memory_space<vmem>>, vector<1x1x128x16xf32>
    %38 = vector.shape_cast %37 : vector<1x1x128x16xf32> to vector<128x16xf32>
    %cst_47 = arith.constant dense<0.000000e+00> : vector<2x16xf32>
    %39 = tpu.matmul %36, %38, %cst_47 {dimension_numbers = #tpu.dot_dimension_numbers<[1], [0], [0], [1], [0, 0, 1, 1], [], []>} : vector<2x128xf32>, vector<128x16xf32>, vector<2x16xf32> -> vector<2x16xf32>
    %40 = arith.addf %34, %39 : vector<2x16xf32>
    %c0_48 = arith.constant 0 : index
    %c7 = arith.constant 7 : index
    %c0_49 = arith.constant 0 : index
    %41 = vector.load %arg2[%c0_48, %c7, %c0_49] : memref<2x8x128xf32, #tpu.memory_space<vmem>>, vector<2x1x128xf32>
    %42 = vector.shape_cast %41 : vector<2x1x128xf32> to vector<2x128xf32>
    %c0_50 = arith.constant 0 : index
    %c7_51 = arith.constant 7 : index
    %c0_52 = arith.constant 0 : index
    %c0_53 = arith.constant 0 : index
    %43 = vector.load %arg3[%c0_50, %c7_51, %c0_52, %c0_53] : memref<1x8x128x16xf32, #tpu.memory_space<vmem>>, vector<1x1x128x16xf32>
    %44 = vector.shape_cast %43 : vector<1x1x128x16xf32> to vector<128x16xf32>
    %cst_54 = arith.constant dense<0.000000e+00> : vector<2x16xf32>
    %45 = tpu.matmul %42, %44, %cst_54 {dimension_numbers = #tpu.dot_dimension_numbers<[1], [0], [0], [1], [0, 0, 1, 1], [], []>} : vector<2x128xf32>, vector<128x16xf32>, vector<2x16xf32> -> vector<2x16xf32>
    %46 = arith.addf %40, %45 : vector<2x16xf32>
    %cst_55 = arith.constant 7.812500e-03 : f32
    %47 = vector.broadcast %cst_55 : f32 to vector<2x16xf32>
    %48 = arith.mulf %46, %47 : vector<2x16xf32>
    %49 = arith.mulf %48, %48 : vector<2x16xf32>
    %cst_56 = arith.constant dense<0.000000e+00> : vector<2xf32>
    %50 = vector.multi_reduction <add>, %49, %cst_56 [1] : vector<2x16xf32> to vector<2xf32>
    %51 = vector.shape_cast %50 : vector<2xf32> to vector<2x1xf32>
    %52 = math.sqrt %51 : vector<2x1xf32>
    %cst_57 = arith.constant 1.000000e+00 : f32
    %53 = vector.broadcast %cst_57 : f32 to vector<2x1xf32>
    %54 = arith.addf %53, %51 : vector<2x1xf32>
    %55 = tpu.reciprocal %54 {approx = true} : vector<2x1xf32> -> vector<2x1xf32>
    %56 = arith.mulf %52, %55 : vector<2x1xf32>
    %57 = vector.broadcast %56 : vector<2x1xf32> to vector<2x16xf32>
    %58 = arith.mulf %48, %57 : vector<2x16xf32>
    %c0_58 = arith.constant 0 : index
    %c0_59 = arith.constant 0 : index
    %c0_60 = arith.constant 0 : index
    %c0_61 = arith.constant 0 : index
    %59 = vector.load %arg3[%c0_58, %c0_59, %c0_60, %c0_61] : memref<1x8x128x16xf32, #tpu.memory_space<vmem>>, vector<1x1x128x16xf32>
    %60 = vector.shape_cast %59 : vector<1x1x128x16xf32> to vector<128x16xf32>
    %cst_62 = arith.constant dense<0.000000e+00> : vector<2x128xf32>
    %61 = tpu.matmul %58, %60, %cst_62 {dimension_numbers = #tpu.dot_dimension_numbers<[1], [1], [0], [0], [0, 0, 1, 0], [], []>} : vector<2x16xf32>, vector<128x16xf32>, vector<2x128xf32> -> vector<2x128xf32>
    %c0_63 = arith.constant 0 : index
    %c0_64 = arith.constant 0 : index
    %c0_65 = arith.constant 0 : index
    %62 = vector.load %arg2[%c0_63, %c0_64, %c0_65] : memref<2x8x128xf32, #tpu.memory_space<vmem>>, vector<2x1x128xf32>
    %63 = vector.shape_cast %62 : vector<2x1x128xf32> to vector<2x128xf32>
    %64 = arith.mulf %61, %63 : vector<2x128xf32>
    %c0_66 = arith.constant 0 : index
    %c1_67 = arith.constant 1 : index
    %c0_68 = arith.constant 0 : index
    %c0_69 = arith.constant 0 : index
    %65 = vector.load %arg3[%c0_66, %c1_67, %c0_68, %c0_69] : memref<1x8x128x16xf32, #tpu.memory_space<vmem>>, vector<1x1x128x16xf32>
    %66 = vector.shape_cast %65 : vector<1x1x128x16xf32> to vector<128x16xf32>
    %cst_70 = arith.constant dense<0.000000e+00> : vector<2x128xf32>
    %67 = tpu.matmul %58, %66, %cst_70 {dimension_numbers = #tpu.dot_dimension_numbers<[1], [1], [0], [0], [0, 0, 1, 0], [], []>} : vector<2x16xf32>, vector<128x16xf32>, vector<2x128xf32> -> vector<2x128xf32>
    %c0_71 = arith.constant 0 : index
    %c1_72 = arith.constant 1 : index
    %c0_73 = arith.constant 0 : index
    %68 = vector.load %arg2[%c0_71, %c1_72, %c0_73] : memref<2x8x128xf32, #tpu.memory_space<vmem>>, vector<2x1x128xf32>
    %69 = vector.shape_cast %68 : vector<2x1x128xf32> to vector<2x128xf32>
    %70 = arith.mulf %67, %69 : vector<2x128xf32>
    %71 = arith.addf %64, %70 : vector<2x128xf32>
    %c0_74 = arith.constant 0 : index
    %c2_75 = arith.constant 2 : index
    %c0_76 = arith.constant 0 : index
    %c0_77 = arith.constant 0 : index
    %72 = vector.load %arg3[%c0_74, %c2_75, %c0_76, %c0_77] : memref<1x8x128x16xf32, #tpu.memory_space<vmem>>, vector<1x1x128x16xf32>
    %73 = vector.shape_cast %72 : vector<1x1x128x16xf32> to vector<128x16xf32>
    %cst_78 = arith.constant dense<0.000000e+00> : vector<2x128xf32>
    %74 = tpu.matmul %58, %73, %cst_78 {dimension_numbers = #tpu.dot_dimension_numbers<[1], [1], [0], [0], [0, 0, 1, 0], [], []>} : vector<2x16xf32>, vector<128x16xf32>, vector<2x128xf32> -> vector<2x128xf32>
    %c0_79 = arith.constant 0 : index
    %c2_80 = arith.constant 2 : index
    %c0_81 = arith.constant 0 : index
    %75 = vector.load %arg2[%c0_79, %c2_80, %c0_81] : memref<2x8x128xf32, #tpu.memory_space<vmem>>, vector<2x1x128xf32>
    %76 = vector.shape_cast %75 : vector<2x1x128xf32> to vector<2x128xf32>
    %77 = arith.mulf %74, %76 : vector<2x128xf32>
    %78 = arith.addf %71, %77 : vector<2x128xf32>
    %c0_82 = arith.constant 0 : index
    %c3_83 = arith.constant 3 : index
    %c0_84 = arith.constant 0 : index
    %c0_85 = arith.constant 0 : index
    %79 = vector.load %arg3[%c0_82, %c3_83, %c0_84, %c0_85] : memref<1x8x128x16xf32, #tpu.memory_space<vmem>>, vector<1x1x128x16xf32>
    %80 = vector.shape_cast %79 : vector<1x1x128x16xf32> to vector<128x16xf32>
    %cst_86 = arith.constant dense<0.000000e+00> : vector<2x128xf32>
    %81 = tpu.matmul %58, %80, %cst_86 {dimension_numbers = #tpu.dot_dimension_numbers<[1], [1], [0], [0], [0, 0, 1, 0], [], []>} : vector<2x16xf32>, vector<128x16xf32>, vector<2x128xf32> -> vector<2x128xf32>
    %c0_87 = arith.constant 0 : index
    %c3_88 = arith.constant 3 : index
    %c0_89 = arith.constant 0 : index
    %82 = vector.load %arg2[%c0_87, %c3_88, %c0_89] : memref<2x8x128xf32, #tpu.memory_space<vmem>>, vector<2x1x128xf32>
    %83 = vector.shape_cast %82 : vector<2x1x128xf32> to vector<2x128xf32>
    %84 = arith.mulf %81, %83 : vector<2x128xf32>
    %85 = arith.addf %78, %84 : vector<2x128xf32>
    %c0_90 = arith.constant 0 : index
    %c4_91 = arith.constant 4 : index
    %c0_92 = arith.constant 0 : index
    %c0_93 = arith.constant 0 : index
    %86 = vector.load %arg3[%c0_90, %c4_91, %c0_92, %c0_93] : memref<1x8x128x16xf32, #tpu.memory_space<vmem>>, vector<1x1x128x16xf32>
    %87 = vector.shape_cast %86 : vector<1x1x128x16xf32> to vector<128x16xf32>
    %cst_94 = arith.constant dense<0.000000e+00> : vector<2x128xf32>
    %88 = tpu.matmul %58, %87, %cst_94 {dimension_numbers = #tpu.dot_dimension_numbers<[1], [1], [0], [0], [0, 0, 1, 0], [], []>} : vector<2x16xf32>, vector<128x16xf32>, vector<2x128xf32> -> vector<2x128xf32>
    %c0_95 = arith.constant 0 : index
    %c4_96 = arith.constant 4 : index
    %c0_97 = arith.constant 0 : index
    %89 = vector.load %arg2[%c0_95, %c4_96, %c0_97] : memref<2x8x128xf32, #tpu.memory_space<vmem>>, vector<2x1x128xf32>
    %90 = vector.shape_cast %89 : vector<2x1x128xf32> to vector<2x128xf32>
    %91 = arith.mulf %88, %90 : vector<2x128xf32>
    %92 = arith.addf %85, %91 : vector<2x128xf32>
    %c0_98 = arith.constant 0 : index
    %c5_99 = arith.constant 5 : index
    %c0_100 = arith.constant 0 : index
    %c0_101 = arith.constant 0 : index
    %93 = vector.load %arg3[%c0_98, %c5_99, %c0_100, %c0_101] : memref<1x8x128x16xf32, #tpu.memory_space<vmem>>, vector<1x1x128x16xf32>
    %94 = vector.shape_cast %93 : vector<1x1x128x16xf32> to vector<128x16xf32>
    %cst_102 = arith.constant dense<0.000000e+00> : vector<2x128xf32>
    %95 = tpu.matmul %58, %94, %cst_102 {dimension_numbers = #tpu.dot_dimension_numbers<[1], [1], [0], [0], [0, 0, 1, 0], [], []>} : vector<2x16xf32>, vector<128x16xf32>, vector<2x128xf32> -> vector<2x128xf32>
    %c0_103 = arith.constant 0 : index
    %c5_104 = arith.constant 5 : index
    %c0_105 = arith.constant 0 : index
    %96 = vector.load %arg2[%c0_103, %c5_104, %c0_105] : memref<2x8x128xf32, #tpu.memory_space<vmem>>, vector<2x1x128xf32>
    %97 = vector.shape_cast %96 : vector<2x1x128xf32> to vector<2x128xf32>
    %98 = arith.mulf %95, %97 : vector<2x128xf32>
    %99 = arith.addf %92, %98 : vector<2x128xf32>
    %c0_106 = arith.constant 0 : index
    %c6_107 = arith.constant 6 : index
    %c0_108 = arith.constant 0 : index
    %c0_109 = arith.constant 0 : index
    %100 = vector.load %arg3[%c0_106, %c6_107, %c0_108, %c0_109] : memref<1x8x128x16xf32, #tpu.memory_space<vmem>>, vector<1x1x128x16xf32>
    %101 = vector.shape_cast %100 : vector<1x1x128x16xf32> to vector<128x16xf32>
    %cst_110 = arith.constant dense<0.000000e+00> : vector<2x128xf32>
    %102 = tpu.matmul %58, %101, %cst_110 {dimension_numbers = #tpu.dot_dimension_numbers<[1], [1], [0], [0], [0, 0, 1, 0], [], []>} : vector<2x16xf32>, vector<128x16xf32>, vector<2x128xf32> -> vector<2x128xf32>
    %c0_111 = arith.constant 0 : index
    %c6_112 = arith.constant 6 : index
    %c0_113 = arith.constant 0 : index
    %103 = vector.load %arg2[%c0_111, %c6_112, %c0_113] : memref<2x8x128xf32, #tpu.memory_space<vmem>>, vector<2x1x128xf32>
    %104 = vector.shape_cast %103 : vector<2x1x128xf32> to vector<2x128xf32>
    %105 = arith.mulf %102, %104 : vector<2x128xf32>
    %106 = arith.addf %99, %105 : vector<2x128xf32>
    %c0_114 = arith.constant 0 : index
    %c7_115 = arith.constant 7 : index
    %c0_116 = arith.constant 0 : index
    %c0_117 = arith.constant 0 : index
    %107 = vector.load %arg3[%c0_114, %c7_115, %c0_116, %c0_117] : memref<1x8x128x16xf32, #tpu.memory_space<vmem>>, vector<1x1x128x16xf32>
    %108 = vector.shape_cast %107 : vector<1x1x128x16xf32> to vector<128x16xf32>
    %cst_118 = arith.constant dense<0.000000e+00> : vector<2x128xf32>
    %109 = tpu.matmul %58, %108, %cst_118 {dimension_numbers = #tpu.dot_dimension_numbers<[1], [1], [0], [0], [0, 0, 1, 0], [], []>} : vector<2x16xf32>, vector<128x16xf32>, vector<2x128xf32> -> vector<2x128xf32>
    %c0_119 = arith.constant 0 : index
    %c7_120 = arith.constant 7 : index
    %c0_121 = arith.constant 0 : index
    %110 = vector.load %arg2[%c0_119, %c7_120, %c0_121] : memref<2x8x128xf32, #tpu.memory_space<vmem>>, vector<2x1x128xf32>
    %111 = vector.shape_cast %110 : vector<2x1x128xf32> to vector<2x128xf32>
    %112 = arith.mulf %109, %111 : vector<2x128xf32>
    %113 = arith.addf %106, %112 : vector<2x128xf32>
    %cst_122 = arith.constant dense<0xFF800000> : vector<2xf32>
    %114 = vector.multi_reduction <maximumf>, %113, %cst_122 [1] : vector<2x128xf32> to vector<2xf32>
    %115 = vector.shape_cast %114 : vector<2xf32> to vector<2x1xf32>
    %116 = vector.broadcast %115 : vector<2x1xf32> to vector<2x128xf32>
    %117 = arith.subf %113, %116 : vector<2x128xf32>
    %118 = math.exp %117 : vector<2x128xf32>
    %cst_123 = arith.constant dense<0.000000e+00> : vector<2xf32>
    %119 = vector.multi_reduction <add>, %118, %cst_123 [1] : vector<2x128xf32> to vector<2xf32>
    %120 = vector.shape_cast %119 : vector<2xf32> to vector<2x1xf32>
    %121 = tpu.reciprocal %120 {approx = true} : vector<2x1xf32> -> vector<2x1xf32>
    %122 = vector.broadcast %121 : vector<2x1xf32> to vector<2x128xf32>
    %123 = arith.mulf %118, %122 : vector<2x128xf32>
    %c0_124 = arith.constant 0 : index
    %c0_125 = arith.constant 0 : index
    %c0_126 = arith.constant 0 : index
    %124 = vector.load %arg2[%c0_124, %c0_125, %c0_126] : memref<2x8x128xf32, #tpu.memory_space<vmem>>, vector<2x1x128xf32>
    %125 = vector.shape_cast %124 : vector<2x1x128xf32> to vector<2x128xf32>
    %126 = arith.mulf %123, %125 : vector<2x128xf32>
    %c0_127 = arith.constant 0 : index
    %c0_128 = arith.constant 0 : index
    %c0_129 = arith.constant 0 : index
    %c0_130 = arith.constant 0 : index
    %127 = vector.load %arg3[%c0_127, %c0_128, %c0_129, %c0_130] : memref<1x8x128x16xf32, #tpu.memory_space<vmem>>, vector<1x1x128x16xf32>
    %128 = vector.shape_cast %127 : vector<1x1x128x16xf32> to vector<128x16xf32>
    %cst_131 = arith.constant dense<0.000000e+00> : vector<2x16xf32>
    %129 = tpu.matmul %126, %128, %cst_131 {dimension_numbers = #tpu.dot_dimension_numbers<[1], [0], [0], [1], [0, 0, 1, 1], [], []>} : vector<2x128xf32>, vector<128x16xf32>, vector<2x16xf32> -> vector<2x16xf32>
    %c0_132 = arith.constant 0 : index
    %c1_133 = arith.constant 1 : index
    %c0_134 = arith.constant 0 : index
    %130 = vector.load %arg2[%c0_132, %c1_133, %c0_134] : memref<2x8x128xf32, #tpu.memory_space<vmem>>, vector<2x1x128xf32>
    %131 = vector.shape_cast %130 : vector<2x1x128xf32> to vector<2x128xf32>
    %132 = arith.mulf %123, %131 : vector<2x128xf32>
    %c0_135 = arith.constant 0 : index
    %c1_136 = arith.constant 1 : index
    %c0_137 = arith.constant 0 : index
    %c0_138 = arith.constant 0 : index
    %133 = vector.load %arg3[%c0_135, %c1_136, %c0_137, %c0_138] : memref<1x8x128x16xf32, #tpu.memory_space<vmem>>, vector<1x1x128x16xf32>
    %134 = vector.shape_cast %133 : vector<1x1x128x16xf32> to vector<128x16xf32>
    %cst_139 = arith.constant dense<0.000000e+00> : vector<2x16xf32>
    %135 = tpu.matmul %132, %134, %cst_139 {dimension_numbers = #tpu.dot_dimension_numbers<[1], [0], [0], [1], [0, 0, 1, 1], [], []>} : vector<2x128xf32>, vector<128x16xf32>, vector<2x16xf32> -> vector<2x16xf32>
    %136 = arith.addf %129, %135 : vector<2x16xf32>
    %c0_140 = arith.constant 0 : index
    %c2_141 = arith.constant 2 : index
    %c0_142 = arith.constant 0 : index
    %137 = vector.load %arg2[%c0_140, %c2_141, %c0_142] : memref<2x8x128xf32, #tpu.memory_space<vmem>>, vector<2x1x128xf32>
    %138 = vector.shape_cast %137 : vector<2x1x128xf32> to vector<2x128xf32>
    %139 = arith.mulf %123, %138 : vector<2x128xf32>
    %c0_143 = arith.constant 0 : index
    %c2_144 = arith.constant 2 : index
    %c0_145 = arith.constant 0 : index
    %c0_146 = arith.constant 0 : index
    %140 = vector.load %arg3[%c0_143, %c2_144, %c0_145, %c0_146] : memref<1x8x128x16xf32, #tpu.memory_space<vmem>>, vector<1x1x128x16xf32>
    %141 = vector.shape_cast %140 : vector<1x1x128x16xf32> to vector<128x16xf32>
    %cst_147 = arith.constant dense<0.000000e+00> : vector<2x16xf32>
    %142 = tpu.matmul %139, %141, %cst_147 {dimension_numbers = #tpu.dot_dimension_numbers<[1], [0], [0], [1], [0, 0, 1, 1], [], []>} : vector<2x128xf32>, vector<128x16xf32>, vector<2x16xf32> -> vector<2x16xf32>
    %143 = arith.addf %136, %142 : vector<2x16xf32>
    %c0_148 = arith.constant 0 : index
    %c3_149 = arith.constant 3 : index
    %c0_150 = arith.constant 0 : index
    %144 = vector.load %arg2[%c0_148, %c3_149, %c0_150] : memref<2x8x128xf32, #tpu.memory_space<vmem>>, vector<2x1x128xf32>
    %145 = vector.shape_cast %144 : vector<2x1x128xf32> to vector<2x128xf32>
    %146 = arith.mulf %123, %145 : vector<2x128xf32>
    %c0_151 = arith.constant 0 : index
    %c3_152 = arith.constant 3 : index
    %c0_153 = arith.constant 0 : index
    %c0_154 = arith.constant 0 : index
    %147 = vector.load %arg3[%c0_151, %c3_152, %c0_153, %c0_154] : memref<1x8x128x16xf32, #tpu.memory_space<vmem>>, vector<1x1x128x16xf32>
    %148 = vector.shape_cast %147 : vector<1x1x128x16xf32> to vector<128x16xf32>
    %cst_155 = arith.constant dense<0.000000e+00> : vector<2x16xf32>
    %149 = tpu.matmul %146, %148, %cst_155 {dimension_numbers = #tpu.dot_dimension_numbers<[1], [0], [0], [1], [0, 0, 1, 1], [], []>} : vector<2x128xf32>, vector<128x16xf32>, vector<2x16xf32> -> vector<2x16xf32>
    %150 = arith.addf %143, %149 : vector<2x16xf32>
    %c0_156 = arith.constant 0 : index
    %c4_157 = arith.constant 4 : index
    %c0_158 = arith.constant 0 : index
    %151 = vector.load %arg2[%c0_156, %c4_157, %c0_158] : memref<2x8x128xf32, #tpu.memory_space<vmem>>, vector<2x1x128xf32>
    %152 = vector.shape_cast %151 : vector<2x1x128xf32> to vector<2x128xf32>
    %153 = arith.mulf %123, %152 : vector<2x128xf32>
    %c0_159 = arith.constant 0 : index
    %c4_160 = arith.constant 4 : index
    %c0_161 = arith.constant 0 : index
    %c0_162 = arith.constant 0 : index
    %154 = vector.load %arg3[%c0_159, %c4_160, %c0_161, %c0_162] : memref<1x8x128x16xf32, #tpu.memory_space<vmem>>, vector<1x1x128x16xf32>
    %155 = vector.shape_cast %154 : vector<1x1x128x16xf32> to vector<128x16xf32>
    %cst_163 = arith.constant dense<0.000000e+00> : vector<2x16xf32>
    %156 = tpu.matmul %153, %155, %cst_163 {dimension_numbers = #tpu.dot_dimension_numbers<[1], [0], [0], [1], [0, 0, 1, 1], [], []>} : vector<2x128xf32>, vector<128x16xf32>, vector<2x16xf32> -> vector<2x16xf32>
    %157 = arith.addf %150, %156 : vector<2x16xf32>
    %c0_164 = arith.constant 0 : index
    %c5_165 = arith.constant 5 : index
    %c0_166 = arith.constant 0 : index
    %158 = vector.load %arg2[%c0_164, %c5_165, %c0_166] : memref<2x8x128xf32, #tpu.memory_space<vmem>>, vector<2x1x128xf32>
    %159 = vector.shape_cast %158 : vector<2x1x128xf32> to vector<2x128xf32>
    %160 = arith.mulf %123, %159 : vector<2x128xf32>
    %c0_167 = arith.constant 0 : index
    %c5_168 = arith.constant 5 : index
    %c0_169 = arith.constant 0 : index
    %c0_170 = arith.constant 0 : index
    %161 = vector.load %arg3[%c0_167, %c5_168, %c0_169, %c0_170] : memref<1x8x128x16xf32, #tpu.memory_space<vmem>>, vector<1x1x128x16xf32>
    %162 = vector.shape_cast %161 : vector<1x1x128x16xf32> to vector<128x16xf32>
    %cst_171 = arith.constant dense<0.000000e+00> : vector<2x16xf32>
    %163 = tpu.matmul %160, %162, %cst_171 {dimension_numbers = #tpu.dot_dimension_numbers<[1], [0], [0], [1], [0, 0, 1, 1], [], []>} : vector<2x128xf32>, vector<128x16xf32>, vector<2x16xf32> -> vector<2x16xf32>
    %164 = arith.addf %157, %163 : vector<2x16xf32>
    %c0_172 = arith.constant 0 : index
    %c6_173 = arith.constant 6 : index
    %c0_174 = arith.constant 0 : index
    %165 = vector.load %arg2[%c0_172, %c6_173, %c0_174] : memref<2x8x128xf32, #tpu.memory_space<vmem>>, vector<2x1x128xf32>
    %166 = vector.shape_cast %165 : vector<2x1x128xf32> to vector<2x128xf32>
    %167 = arith.mulf %123, %166 : vector<2x128xf32>
    %c0_175 = arith.constant 0 : index
    %c6_176 = arith.constant 6 : index
    %c0_177 = arith.constant 0 : index
    %c0_178 = arith.constant 0 : index
    %168 = vector.load %arg3[%c0_175, %c6_176, %c0_177, %c0_178] : memref<1x8x128x16xf32, #tpu.memory_space<vmem>>, vector<1x1x128x16xf32>
    %169 = vector.shape_cast %168 : vector<1x1x128x16xf32> to vector<128x16xf32>
    %cst_179 = arith.constant dense<0.000000e+00> : vector<2x16xf32>
    %170 = tpu.matmul %167, %169, %cst_179 {dimension_numbers = #tpu.dot_dimension_numbers<[1], [0], [0], [1], [0, 0, 1, 1], [], []>} : vector<2x128xf32>, vector<128x16xf32>, vector<2x16xf32> -> vector<2x16xf32>
    %171 = arith.addf %164, %170 : vector<2x16xf32>
    %c0_180 = arith.constant 0 : index
    %c7_181 = arith.constant 7 : index
    %c0_182 = arith.constant 0 : index
    %172 = vector.load %arg2[%c0_180, %c7_181, %c0_182] : memref<2x8x128xf32, #tpu.memory_space<vmem>>, vector<2x1x128xf32>
    %173 = vector.shape_cast %172 : vector<2x1x128xf32> to vector<2x128xf32>
    %174 = arith.mulf %123, %173 : vector<2x128xf32>
    %c0_183 = arith.constant 0 : index
    %c7_184 = arith.constant 7 : index
    %c0_185 = arith.constant 0 : index
    %c0_186 = arith.constant 0 : index
    %175 = vector.load %arg3[%c0_183, %c7_184, %c0_185, %c0_186] : memref<1x8x128x16xf32, #tpu.memory_space<vmem>>, vector<1x1x128x16xf32>
    %176 = vector.shape_cast %175 : vector<1x1x128x16xf32> to vector<128x16xf32>
    %cst_187 = arith.constant dense<0.000000e+00> : vector<2x16xf32>
    %177 = tpu.matmul %174, %176, %cst_187 {dimension_numbers = #tpu.dot_dimension_numbers<[1], [0], [0], [1], [0, 0, 1, 1], [], []>} : vector<2x128xf32>, vector<128x16xf32>, vector<2x16xf32> -> vector<2x16xf32>
    %178 = arith.addf %171, %177 : vector<2x16xf32>
    %179 = arith.mulf %178, %178 : vector<2x16xf32>
    %cst_188 = arith.constant dense<0.000000e+00> : vector<2xf32>
    %180 = vector.multi_reduction <add>, %179, %cst_188 [1] : vector<2x16xf32> to vector<2xf32>
    %181 = vector.shape_cast %180 : vector<2xf32> to vector<2x1xf32>
    %182 = math.sqrt %181 : vector<2x1xf32>
    %cst_189 = arith.constant 1.000000e+00 : f32
    %183 = vector.broadcast %cst_189 : f32 to vector<2x1xf32>
    %184 = arith.addf %183, %181 : vector<2x1xf32>
    %185 = tpu.reciprocal %184 {approx = true} : vector<2x1xf32> -> vector<2x1xf32>
    %186 = arith.mulf %182, %185 : vector<2x1xf32>
    %187 = vector.broadcast %186 : vector<2x1xf32> to vector<2x16xf32>
    %188 = arith.mulf %178, %187 : vector<2x16xf32>
    %c0_190 = arith.constant 0 : index
    %c0_191 = arith.constant 0 : index
    %c0_192 = arith.constant 0 : index
    %c0_193 = arith.constant 0 : index
    %189 = vector.load %arg3[%c0_190, %c0_191, %c0_192, %c0_193] : memref<1x8x128x16xf32, #tpu.memory_space<vmem>>, vector<1x1x128x16xf32>
    %190 = vector.shape_cast %189 : vector<1x1x128x16xf32> to vector<128x16xf32>
    %cst_194 = arith.constant dense<0.000000e+00> : vector<2x128xf32>
    %191 = tpu.matmul %188, %190, %cst_194 {dimension_numbers = #tpu.dot_dimension_numbers<[1], [1], [0], [0], [0, 0, 1, 0], [], []>} : vector<2x16xf32>, vector<128x16xf32>, vector<2x128xf32> -> vector<2x128xf32>
    %c0_195 = arith.constant 0 : index
    %c0_196 = arith.constant 0 : index
    %c0_197 = arith.constant 0 : index
    %192 = vector.load %arg2[%c0_195, %c0_196, %c0_197] : memref<2x8x128xf32, #tpu.memory_space<vmem>>, vector<2x1x128xf32>
    %193 = vector.shape_cast %192 : vector<2x1x128xf32> to vector<2x128xf32>
    %194 = arith.mulf %191, %193 : vector<2x128xf32>
    %c0_198 = arith.constant 0 : index
    %c1_199 = arith.constant 1 : index
    %c0_200 = arith.constant 0 : index
    %c0_201 = arith.constant 0 : index
    %195 = vector.load %arg3[%c0_198, %c1_199, %c0_200, %c0_201] : memref<1x8x128x16xf32, #tpu.memory_space<vmem>>, vector<1x1x128x16xf32>
    %196 = vector.shape_cast %195 : vector<1x1x128x16xf32> to vector<128x16xf32>
    %cst_202 = arith.constant dense<0.000000e+00> : vector<2x128xf32>
    %197 = tpu.matmul %188, %196, %cst_202 {dimension_numbers = #tpu.dot_dimension_numbers<[1], [1], [0], [0], [0, 0, 1, 0], [], []>} : vector<2x16xf32>, vector<128x16xf32>, vector<2x128xf32> -> vector<2x128xf32>
    %c0_203 = arith.constant 0 : index
    %c1_204 = arith.constant 1 : index
    %c0_205 = arith.constant 0 : index
    %198 = vector.load %arg2[%c0_203, %c1_204, %c0_205] : memref<2x8x128xf32, #tpu.memory_space<vmem>>, vector<2x1x128xf32>
    %199 = vector.shape_cast %198 : vector<2x1x128xf32> to vector<2x128xf32>
    %200 = arith.mulf %197, %199 : vector<2x128xf32>
    %201 = arith.addf %194, %200 : vector<2x128xf32>
    %c0_206 = arith.constant 0 : index
    %c2_207 = arith.constant 2 : index
    %c0_208 = arith.constant 0 : index
    %c0_209 = arith.constant 0 : index
    %202 = vector.load %arg3[%c0_206, %c2_207, %c0_208, %c0_209] : memref<1x8x128x16xf32, #tpu.memory_space<vmem>>, vector<1x1x128x16xf32>
    %203 = vector.shape_cast %202 : vector<1x1x128x16xf32> to vector<128x16xf32>
    %cst_210 = arith.constant dense<0.000000e+00> : vector<2x128xf32>
    %204 = tpu.matmul %188, %203, %cst_210 {dimension_numbers = #tpu.dot_dimension_numbers<[1], [1], [0], [0], [0, 0, 1, 0], [], []>} : vector<2x16xf32>, vector<128x16xf32>, vector<2x128xf32> -> vector<2x128xf32>
    %c0_211 = arith.constant 0 : index
    %c2_212 = arith.constant 2 : index
    %c0_213 = arith.constant 0 : index
    %205 = vector.load %arg2[%c0_211, %c2_212, %c0_213] : memref<2x8x128xf32, #tpu.memory_space<vmem>>, vector<2x1x128xf32>
    %206 = vector.shape_cast %205 : vector<2x1x128xf32> to vector<2x128xf32>
    %207 = arith.mulf %204, %206 : vector<2x128xf32>
    %208 = arith.addf %201, %207 : vector<2x128xf32>
    %c0_214 = arith.constant 0 : index
    %c3_215 = arith.constant 3 : index
    %c0_216 = arith.constant 0 : index
    %c0_217 = arith.constant 0 : index
    %209 = vector.load %arg3[%c0_214, %c3_215, %c0_216, %c0_217] : memref<1x8x128x16xf32, #tpu.memory_space<vmem>>, vector<1x1x128x16xf32>
    %210 = vector.shape_cast %209 : vector<1x1x128x16xf32> to vector<128x16xf32>
    %cst_218 = arith.constant dense<0.000000e+00> : vector<2x128xf32>
    %211 = tpu.matmul %188, %210, %cst_218 {dimension_numbers = #tpu.dot_dimension_numbers<[1], [1], [0], [0], [0, 0, 1, 0], [], []>} : vector<2x16xf32>, vector<128x16xf32>, vector<2x128xf32> -> vector<2x128xf32>
    %c0_219 = arith.constant 0 : index
    %c3_220 = arith.constant 3 : index
    %c0_221 = arith.constant 0 : index
    %212 = vector.load %arg2[%c0_219, %c3_220, %c0_221] : memref<2x8x128xf32, #tpu.memory_space<vmem>>, vector<2x1x128xf32>
    %213 = vector.shape_cast %212 : vector<2x1x128xf32> to vector<2x128xf32>
    %214 = arith.mulf %211, %213 : vector<2x128xf32>
    %215 = arith.addf %208, %214 : vector<2x128xf32>
    %c0_222 = arith.constant 0 : index
    %c4_223 = arith.constant 4 : index
    %c0_224 = arith.constant 0 : index
    %c0_225 = arith.constant 0 : index
    %216 = vector.load %arg3[%c0_222, %c4_223, %c0_224, %c0_225] : memref<1x8x128x16xf32, #tpu.memory_space<vmem>>, vector<1x1x128x16xf32>
    %217 = vector.shape_cast %216 : vector<1x1x128x16xf32> to vector<128x16xf32>
    %cst_226 = arith.constant dense<0.000000e+00> : vector<2x128xf32>
    %218 = tpu.matmul %188, %217, %cst_226 {dimension_numbers = #tpu.dot_dimension_numbers<[1], [1], [0], [0], [0, 0, 1, 0], [], []>} : vector<2x16xf32>, vector<128x16xf32>, vector<2x128xf32> -> vector<2x128xf32>
    %c0_227 = arith.constant 0 : index
    %c4_228 = arith.constant 4 : index
    %c0_229 = arith.constant 0 : index
    %219 = vector.load %arg2[%c0_227, %c4_228, %c0_229] : memref<2x8x128xf32, #tpu.memory_space<vmem>>, vector<2x1x128xf32>
    %220 = vector.shape_cast %219 : vector<2x1x128xf32> to vector<2x128xf32>
    %221 = arith.mulf %218, %220 : vector<2x128xf32>
    %222 = arith.addf %215, %221 : vector<2x128xf32>
    %c0_230 = arith.constant 0 : index
    %c5_231 = arith.constant 5 : index
    %c0_232 = arith.constant 0 : index
    %c0_233 = arith.constant 0 : index
    %223 = vector.load %arg3[%c0_230, %c5_231, %c0_232, %c0_233] : memref<1x8x128x16xf32, #tpu.memory_space<vmem>>, vector<1x1x128x16xf32>
    %224 = vector.shape_cast %223 : vector<1x1x128x16xf32> to vector<128x16xf32>
    %cst_234 = arith.constant dense<0.000000e+00> : vector<2x128xf32>
    %225 = tpu.matmul %188, %224, %cst_234 {dimension_numbers = #tpu.dot_dimension_numbers<[1], [1], [0], [0], [0, 0, 1, 0], [], []>} : vector<2x16xf32>, vector<128x16xf32>, vector<2x128xf32> -> vector<2x128xf32>
    %c0_235 = arith.constant 0 : index
    %c5_236 = arith.constant 5 : index
    %c0_237 = arith.constant 0 : index
    %226 = vector.load %arg2[%c0_235, %c5_236, %c0_237] : memref<2x8x128xf32, #tpu.memory_space<vmem>>, vector<2x1x128xf32>
    %227 = vector.shape_cast %226 : vector<2x1x128xf32> to vector<2x128xf32>
    %228 = arith.mulf %225, %227 : vector<2x128xf32>
    %229 = arith.addf %222, %228 : vector<2x128xf32>
    %c0_238 = arith.constant 0 : index
    %c6_239 = arith.constant 6 : index
    %c0_240 = arith.constant 0 : index
    %c0_241 = arith.constant 0 : index
    %230 = vector.load %arg3[%c0_238, %c6_239, %c0_240, %c0_241] : memref<1x8x128x16xf32, #tpu.memory_space<vmem>>, vector<1x1x128x16xf32>
    %231 = vector.shape_cast %230 : vector<1x1x128x16xf32> to vector<128x16xf32>
    %cst_242 = arith.constant dense<0.000000e+00> : vector<2x128xf32>
    %232 = tpu.matmul %188, %231, %cst_242 {dimension_numbers = #tpu.dot_dimension_numbers<[1], [1], [0], [0], [0, 0, 1, 0], [], []>} : vector<2x16xf32>, vector<128x16xf32>, vector<2x128xf32> -> vector<2x128xf32>
    %c0_243 = arith.constant 0 : index
    %c6_244 = arith.constant 6 : index
    %c0_245 = arith.constant 0 : index
    %233 = vector.load %arg2[%c0_243, %c6_244, %c0_245] : memref<2x8x128xf32, #tpu.memory_space<vmem>>, vector<2x1x128xf32>
    %234 = vector.shape_cast %233 : vector<2x1x128xf32> to vector<2x128xf32>
    %235 = arith.mulf %232, %234 : vector<2x128xf32>
    %236 = arith.addf %229, %235 : vector<2x128xf32>
    %c0_246 = arith.constant 0 : index
    %c7_247 = arith.constant 7 : index
    %c0_248 = arith.constant 0 : index
    %c0_249 = arith.constant 0 : index
    %237 = vector.load %arg3[%c0_246, %c7_247, %c0_248, %c0_249] : memref<1x8x128x16xf32, #tpu.memory_space<vmem>>, vector<1x1x128x16xf32>
    %238 = vector.shape_cast %237 : vector<1x1x128x16xf32> to vector<128x16xf32>
    %cst_250 = arith.constant dense<0.000000e+00> : vector<2x128xf32>
    %239 = tpu.matmul %188, %238, %cst_250 {dimension_numbers = #tpu.dot_dimension_numbers<[1], [1], [0], [0], [0, 0, 1, 0], [], []>} : vector<2x16xf32>, vector<128x16xf32>, vector<2x128xf32> -> vector<2x128xf32>
    %c0_251 = arith.constant 0 : index
    %c7_252 = arith.constant 7 : index
    %c0_253 = arith.constant 0 : index
    %240 = vector.load %arg2[%c0_251, %c7_252, %c0_253] : memref<2x8x128xf32, #tpu.memory_space<vmem>>, vector<2x1x128xf32>
    %241 = vector.shape_cast %240 : vector<2x1x128xf32> to vector<2x128xf32>
    %242 = arith.mulf %239, %241 : vector<2x128xf32>
    %243 = arith.addf %236, %242 : vector<2x128xf32>
    %244 = arith.addf %113, %243 : vector<2x128xf32>
    %cst_254 = arith.constant dense<0xFF800000> : vector<2xf32>
    %245 = vector.multi_reduction <maximumf>, %244, %cst_254 [1] : vector<2x128xf32> to vector<2xf32>
    %246 = vector.shape_cast %245 : vector<2xf32> to vector<2x1xf32>
    %247 = vector.broadcast %246 : vector<2x1xf32> to vector<2x128xf32>
    %248 = arith.subf %244, %247 : vector<2x128xf32>
    %249 = math.exp %248 : vector<2x128xf32>
    %cst_255 = arith.constant dense<0.000000e+00> : vector<2xf32>
    %250 = vector.multi_reduction <add>, %249, %cst_255 [1] : vector<2x128xf32> to vector<2xf32>
    %251 = vector.shape_cast %250 : vector<2xf32> to vector<2x1xf32>
    %252 = tpu.reciprocal %251 {approx = true} : vector<2x1xf32> -> vector<2x1xf32>
    %253 = vector.broadcast %252 : vector<2x1xf32> to vector<2x128xf32>
    %254 = arith.mulf %249, %253 : vector<2x128xf32>
    %c0_256 = arith.constant 0 : index
    %c0_257 = arith.constant 0 : index
    %c0_258 = arith.constant 0 : index
    %255 = vector.load %arg2[%c0_256, %c0_257, %c0_258] : memref<2x8x128xf32, #tpu.memory_space<vmem>>, vector<2x1x128xf32>
    %256 = vector.shape_cast %255 : vector<2x1x128xf32> to vector<2x128xf32>
    %257 = arith.mulf %254, %256 : vector<2x128xf32>
    %c0_259 = arith.constant 0 : index
    %c0_260 = arith.constant 0 : index
    %c0_261 = arith.constant 0 : index
    %c0_262 = arith.constant 0 : index
    %258 = vector.load %arg3[%c0_259, %c0_260, %c0_261, %c0_262] : memref<1x8x128x16xf32, #tpu.memory_space<vmem>>, vector<1x1x128x16xf32>
    %259 = vector.shape_cast %258 : vector<1x1x128x16xf32> to vector<128x16xf32>
    %cst_263 = arith.constant dense<0.000000e+00> : vector<2x16xf32>
    %260 = tpu.matmul %257, %259, %cst_263 {dimension_numbers = #tpu.dot_dimension_numbers<[1], [0], [0], [1], [0, 0, 1, 1], [], []>} : vector<2x128xf32>, vector<128x16xf32>, vector<2x16xf32> -> vector<2x16xf32>
    %c0_264 = arith.constant 0 : index
    %c1_265 = arith.constant 1 : index
    %c0_266 = arith.constant 0 : index
    %261 = vector.load %arg2[%c0_264, %c1_265, %c0_266] : memref<2x8x128xf32, #tpu.memory_space<vmem>>, vector<2x1x128xf32>
    %262 = vector.shape_cast %261 : vector<2x1x128xf32> to vector<2x128xf32>
    %263 = arith.mulf %254, %262 : vector<2x128xf32>
    %c0_267 = arith.constant 0 : index
    %c1_268 = arith.constant 1 : index
    %c0_269 = arith.constant 0 : index
    %c0_270 = arith.constant 0 : index
    %264 = vector.load %arg3[%c0_267, %c1_268, %c0_269, %c0_270] : memref<1x8x128x16xf32, #tpu.memory_space<vmem>>, vector<1x1x128x16xf32>
    %265 = vector.shape_cast %264 : vector<1x1x128x16xf32> to vector<128x16xf32>
    %cst_271 = arith.constant dense<0.000000e+00> : vector<2x16xf32>
    %266 = tpu.matmul %263, %265, %cst_271 {dimension_numbers = #tpu.dot_dimension_numbers<[1], [0], [0], [1], [0, 0, 1, 1], [], []>} : vector<2x128xf32>, vector<128x16xf32>, vector<2x16xf32> -> vector<2x16xf32>
    %267 = arith.addf %260, %266 : vector<2x16xf32>
    %c0_272 = arith.constant 0 : index
    %c2_273 = arith.constant 2 : index
    %c0_274 = arith.constant 0 : index
    %268 = vector.load %arg2[%c0_272, %c2_273, %c0_274] : memref<2x8x128xf32, #tpu.memory_space<vmem>>, vector<2x1x128xf32>
    %269 = vector.shape_cast %268 : vector<2x1x128xf32> to vector<2x128xf32>
    %270 = arith.mulf %254, %269 : vector<2x128xf32>
    %c0_275 = arith.constant 0 : index
    %c2_276 = arith.constant 2 : index
    %c0_277 = arith.constant 0 : index
    %c0_278 = arith.constant 0 : index
    %271 = vector.load %arg3[%c0_275, %c2_276, %c0_277, %c0_278] : memref<1x8x128x16xf32, #tpu.memory_space<vmem>>, vector<1x1x128x16xf32>
    %272 = vector.shape_cast %271 : vector<1x1x128x16xf32> to vector<128x16xf32>
    %cst_279 = arith.constant dense<0.000000e+00> : vector<2x16xf32>
    %273 = tpu.matmul %270, %272, %cst_279 {dimension_numbers = #tpu.dot_dimension_numbers<[1], [0], [0], [1], [0, 0, 1, 1], [], []>} : vector<2x128xf32>, vector<128x16xf32>, vector<2x16xf32> -> vector<2x16xf32>
    %274 = arith.addf %267, %273 : vector<2x16xf32>
    %c0_280 = arith.constant 0 : index
    %c3_281 = arith.constant 3 : index
    %c0_282 = arith.constant 0 : index
    %275 = vector.load %arg2[%c0_280, %c3_281, %c0_282] : memref<2x8x128xf32, #tpu.memory_space<vmem>>, vector<2x1x128xf32>
    %276 = vector.shape_cast %275 : vector<2x1x128xf32> to vector<2x128xf32>
    %277 = arith.mulf %254, %276 : vector<2x128xf32>
    %c0_283 = arith.constant 0 : index
    %c3_284 = arith.constant 3 : index
    %c0_285 = arith.constant 0 : index
    %c0_286 = arith.constant 0 : index
    %278 = vector.load %arg3[%c0_283, %c3_284, %c0_285, %c0_286] : memref<1x8x128x16xf32, #tpu.memory_space<vmem>>, vector<1x1x128x16xf32>
    %279 = vector.shape_cast %278 : vector<1x1x128x16xf32> to vector<128x16xf32>
    %cst_287 = arith.constant dense<0.000000e+00> : vector<2x16xf32>
    %280 = tpu.matmul %277, %279, %cst_287 {dimension_numbers = #tpu.dot_dimension_numbers<[1], [0], [0], [1], [0, 0, 1, 1], [], []>} : vector<2x128xf32>, vector<128x16xf32>, vector<2x16xf32> -> vector<2x16xf32>
    %281 = arith.addf %274, %280 : vector<2x16xf32>
    %c0_288 = arith.constant 0 : index
    %c4_289 = arith.constant 4 : index
    %c0_290 = arith.constant 0 : index
    %282 = vector.load %arg2[%c0_288, %c4_289, %c0_290] : memref<2x8x128xf32, #tpu.memory_space<vmem>>, vector<2x1x128xf32>
    %283 = vector.shape_cast %282 : vector<2x1x128xf32> to vector<2x128xf32>
    %284 = arith.mulf %254, %283 : vector<2x128xf32>
    %c0_291 = arith.constant 0 : index
    %c4_292 = arith.constant 4 : index
    %c0_293 = arith.constant 0 : index
    %c0_294 = arith.constant 0 : index
    %285 = vector.load %arg3[%c0_291, %c4_292, %c0_293, %c0_294] : memref<1x8x128x16xf32, #tpu.memory_space<vmem>>, vector<1x1x128x16xf32>
    %286 = vector.shape_cast %285 : vector<1x1x128x16xf32> to vector<128x16xf32>
    %cst_295 = arith.constant dense<0.000000e+00> : vector<2x16xf32>
    %287 = tpu.matmul %284, %286, %cst_295 {dimension_numbers = #tpu.dot_dimension_numbers<[1], [0], [0], [1], [0, 0, 1, 1], [], []>} : vector<2x128xf32>, vector<128x16xf32>, vector<2x16xf32> -> vector<2x16xf32>
    %288 = arith.addf %281, %287 : vector<2x16xf32>
    %c0_296 = arith.constant 0 : index
    %c5_297 = arith.constant 5 : index
    %c0_298 = arith.constant 0 : index
    %289 = vector.load %arg2[%c0_296, %c5_297, %c0_298] : memref<2x8x128xf32, #tpu.memory_space<vmem>>, vector<2x1x128xf32>
    %290 = vector.shape_cast %289 : vector<2x1x128xf32> to vector<2x128xf32>
    %291 = arith.mulf %254, %290 : vector<2x128xf32>
    %c0_299 = arith.constant 0 : index
    %c5_300 = arith.constant 5 : index
    %c0_301 = arith.constant 0 : index
    %c0_302 = arith.constant 0 : index
    %292 = vector.load %arg3[%c0_299, %c5_300, %c0_301, %c0_302] : memref<1x8x128x16xf32, #tpu.memory_space<vmem>>, vector<1x1x128x16xf32>
    %293 = vector.shape_cast %292 : vector<1x1x128x16xf32> to vector<128x16xf32>
    %cst_303 = arith.constant dense<0.000000e+00> : vector<2x16xf32>
    %294 = tpu.matmul %291, %293, %cst_303 {dimension_numbers = #tpu.dot_dimension_numbers<[1], [0], [0], [1], [0, 0, 1, 1], [], []>} : vector<2x128xf32>, vector<128x16xf32>, vector<2x16xf32> -> vector<2x16xf32>
    %295 = arith.addf %288, %294 : vector<2x16xf32>
    %c0_304 = arith.constant 0 : index
    %c6_305 = arith.constant 6 : index
    %c0_306 = arith.constant 0 : index
    %296 = vector.load %arg2[%c0_304, %c6_305, %c0_306] : memref<2x8x128xf32, #tpu.memory_space<vmem>>, vector<2x1x128xf32>
    %297 = vector.shape_cast %296 : vector<2x1x128xf32> to vector<2x128xf32>
    %298 = arith.mulf %254, %297 : vector<2x128xf32>
    %c0_307 = arith.constant 0 : index
    %c6_308 = arith.constant 6 : index
    %c0_309 = arith.constant 0 : index
    %c0_310 = arith.constant 0 : index
    %299 = vector.load %arg3[%c0_307, %c6_308, %c0_309, %c0_310] : memref<1x8x128x16xf32, #tpu.memory_space<vmem>>, vector<1x1x128x16xf32>
    %300 = vector.shape_cast %299 : vector<1x1x128x16xf32> to vector<128x16xf32>
    %cst_311 = arith.constant dense<0.000000e+00> : vector<2x16xf32>
    %301 = tpu.matmul %298, %300, %cst_311 {dimension_numbers = #tpu.dot_dimension_numbers<[1], [0], [0], [1], [0, 0, 1, 1], [], []>} : vector<2x128xf32>, vector<128x16xf32>, vector<2x16xf32> -> vector<2x16xf32>
    %302 = arith.addf %295, %301 : vector<2x16xf32>
    %c0_312 = arith.constant 0 : index
    %c7_313 = arith.constant 7 : index
    %c0_314 = arith.constant 0 : index
    %303 = vector.load %arg2[%c0_312, %c7_313, %c0_314] : memref<2x8x128xf32, #tpu.memory_space<vmem>>, vector<2x1x128xf32>
    %304 = vector.shape_cast %303 : vector<2x1x128xf32> to vector<2x128xf32>
    %305 = arith.mulf %254, %304 : vector<2x128xf32>
    %c0_315 = arith.constant 0 : index
    %c7_316 = arith.constant 7 : index
    %c0_317 = arith.constant 0 : index
    %c0_318 = arith.constant 0 : index
    %306 = vector.load %arg3[%c0_315, %c7_316, %c0_317, %c0_318] : memref<1x8x128x16xf32, #tpu.memory_space<vmem>>, vector<1x1x128x16xf32>
    %307 = vector.shape_cast %306 : vector<1x1x128x16xf32> to vector<128x16xf32>
    %cst_319 = arith.constant dense<0.000000e+00> : vector<2x16xf32>
    %308 = tpu.matmul %305, %307, %cst_319 {dimension_numbers = #tpu.dot_dimension_numbers<[1], [0], [0], [1], [0, 0, 1, 1], [], []>} : vector<2x128xf32>, vector<128x16xf32>, vector<2x16xf32> -> vector<2x16xf32>
    %309 = arith.addf %302, %308 : vector<2x16xf32>
    %310 = arith.mulf %309, %309 : vector<2x16xf32>
    %cst_320 = arith.constant dense<0.000000e+00> : vector<2xf32>
    %311 = vector.multi_reduction <add>, %310, %cst_320 [1] : vector<2x16xf32> to vector<2xf32>
    %312 = vector.shape_cast %311 : vector<2xf32> to vector<2x1xf32>
    %313 = math.sqrt %312 : vector<2x1xf32>
    %cst_321 = arith.constant 1.000000e+00 : f32
    %314 = vector.broadcast %cst_321 : f32 to vector<2x1xf32>
    %315 = arith.addf %314, %312 : vector<2x1xf32>
    %316 = tpu.reciprocal %315 {approx = true} : vector<2x1xf32> -> vector<2x1xf32>
    %317 = arith.mulf %313, %316 : vector<2x1xf32>
    %318 = vector.broadcast %317 : vector<2x1xf32> to vector<2x16xf32>
    %319 = arith.mulf %309, %318 : vector<2x16xf32>
    %c0_322 = arith.constant 0 : index
    %c0_323 = arith.constant 0 : index
    %c0_324 = arith.constant 0 : index
    %c0_325 = arith.constant 0 : index
    %320 = vector.load %arg4[%c0_322, %c0_323, %c0_324, %c0_325] : memref<1x1x2x16xf32, #tpu.memory_space<vmem>>, vector<1x1x2x16xf32>
    %321 = vector.shape_cast %320 : vector<1x1x2x16xf32> to vector<2x16xf32>
    %322 = vector.shape_cast %319 : vector<2x16xf32> to vector<1x1x2x16xf32>
    tpu.vector_store %arg4[%c0_322, %c0_323, %c0_324, %c0_325], %322 {strides = array<i32>} : memref<1x1x2x16xf32, #tpu.memory_space<vmem>>, vector<1x1x2x16xf32>,
    return
  }
  func.func @transform_0(%arg0: i32, %arg1: i32) -> (i32, i32, i32) {
    %c0_i32 = arith.constant 0 : i32
    %c0_i32_0 = arith.constant 0 : i32
    %c0_i32_1 = arith.constant 0 : i32
    return %arg0, %c0_i32, %c0_i32_0 : i32, i32, i32
  }
  func.func @transform_1(%arg0: i32, %arg1: i32) -> (i32, i32, i32, i32) {
    %c0_i32 = arith.constant 0 : i32
    %c0_i32_0 = arith.constant 0 : i32
    %c0_i32_1 = arith.constant 0 : i32
    %c0_i32_2 = arith.constant 0 : i32
    return %arg1, %c0_i32, %c0_i32_0, %c0_i32_1 : i32, i32, i32, i32
  }
  func.func @transform_2(%arg0: i32, %arg1: i32) -> (i32, i32, i32, i32) {
    %c0_i32 = arith.constant 0 : i32
    %c0_i32_0 = arith.constant 0 : i32
    %c0_i32_1 = arith.constant 0 : i32
    return %arg1, %arg0, %c0_i32, %c0_i32_0 : i32, i32, i32, i32
  }
}

</mosaic_0001>

<llo_original>
// kernel: tpu_custom_call.1
$region0: #{tpu_custom_call.1}
  #allocation0 [shape = 'u32[]', space=smem, size = 0x4, offset = 0x4, fixed_abs, tag = 'smem constant byte address 0x4 - core index']
  #allocation1 [shape = 'u32[144,128]{1,0:T(1,128)}', space=vmem, size = 0x12000, scoped, tag = 'internal scratch']
  %s0 = inlined_call_operand.vmem [shape: f32[2,8,128], index: 0, kind: input, shape index: {}]
  %s1 = inlined_call_operand.vmem [shape: f32[4,8,128,16], index: 1, kind: input, shape index: {}]
  %s2 = inlined_call_operand.hbm [shape: f32[4,1,2,16], index: 2, kind: output, shape index: {}]
  %s3 = sld [smem:[#allocation0]]
  $region41: #{tpu_custom_call.1} parent=0
    _
  %s5 = ssub.s32 1, %s3
  %s6 = scalar_select 0, %s5, %s3
  $region1: #{tpu_custom_call.1} parent=0
    #allocation2 [shape = 'u8[2048]{0}', space=vmem, size = 0x800, scoped, tag = 'output window, operand 0']
    #allocation3 [shape = 's32[2]{0}', space=sflag, size = 0x8, scoped, tag = 'scoped memory for tpu_custom_call.1']
    %7 = vsyncpa [#allocation3], 0
    %s8 = scalar_lea.sflag [#allocation3], 1
    %9 = vsyncpa %s8, 0
    loop: start=0, step=1, limit=6
    $region2: #{tpu_custom_call.1} parent=1 // loop_pre_header
      _
    $region3: #{tpu_custom_call.1} parent=1 // loop_header
      %s11 = sphi 0, %s15
      %p12 = scmp.ge.s32.totalorder %s11, 6
      %s18 = sphi 0, %s30
      %s19 = sphi 0, %s26
      %s20 = sphi 0, %s18
      %s21 = sphi 0, %s19
      %s22 = sphi 0, %s20
      %s23 = sphi 0, %s21
      %s33 = sphi 0, %s35
      %s36 = sphi 0, %s33
      %s37 = sphi 0, %s36
      %s53 = sphi 0, %s37
      %s59 = sphi 0, %s61
      %s62 = sphi 0, %s59
      %s63 = sphi 0, %s62
      %s79 = sphi 0, %s63
      %s87 = sphi 0, %s89
      %s90 = sphi 0, %s87
      %s91 = sphi 0, %s90
      %s107 = sphi 0, %s91
    $region4: #{tpu_custom_call.1} parent=1 // loop_header_branch
      %14 = sbr.rel (%p12) target = $region8
    $region5: #{tpu_custom_call.1} parent=1 // loop_body
      %s16 = ssub.s32 %s11, 1
      %s17 = ssub.s32 %s11, 2
      %s24 = sadd.s32 1, %s19
      %p25 = scmp.ge.s32.totalorder %s24, 4
      %s26 = scalar_select %p25, 0, %s24
      %s27 = sadd.s32 1, %s18
      %s28 = scalar_select %p25, %s27, %s18
      %p29 = scmp.ge.s32.totalorder %s28, 1
      %s30 = scalar_select %p29, 0, %s28
      %s31 = ssub.s32 %s18, %s30
      %p32 = scmp.eq.s32.totalorder %s31, 0
      %s34 = sadd.s32 %s33, 1
      %s35 = scalar_select %p32, %s33, %s34
      %p38 = pneg %p32
      %p39 = scmp.eq.s32.totalorder %s11, 3
      %p40 = por %p38, %p39
      %p41 = scmp.ne.s32.totalorder %s33, %s36
      %p42 = scmp.eq.s32.totalorder %s11, 0
      %p43 = por %p41, %p42
      %p44 = scmp.ne.s32.totalorder %s33, %s36
      %p45 = scmp.eq.s32.totalorder %s16, 3
      %p46 = por %p44, %p45
      %p47 = scmp.ne.s32.totalorder %s36, %s37
      %p48 = scmp.eq.s32.totalorder %s16, 0
      %p49 = por %p47, %p48
      %p50 = scmp.ne.s32.totalorder %s36, %s37
      %p51 = scmp.eq.s32.totalorder %s17, 3
      %p52 = por %p50, %p51
      %p54 = scmp.ne.s32.totalorder %s37, %s53
      %p55 = scmp.eq.s32.totalorder %s17, 0
      %p56 = por %p54, %p55
      %s57 = ssub.s32 %s19, %s26
      %p58 = scmp.eq.s32.totalorder %s57, 0
      %s60 = sadd.s32 %s59, 1
      %s61 = scalar_select %p58, %s59, %s60
      %p64 = pneg %p58
      %p65 = scmp.eq.s32.totalorder %s11, 3
      %p66 = por %p64, %p65
      %p67 = scmp.ne.s32.totalorder %s59, %s62
      %p68 = scmp.eq.s32.totalorder %s11, 0
      %p69 = por %p67, %p68
      %p70 = scmp.ne.s32.totalorder %s59, %s62
      %p71 = scmp.eq.s32.totalorder %s16, 3
      %p72 = por %p70, %p71
      %p73 = scmp.ne.s32.totalorder %s62, %s63
      %p74 = scmp.eq.s32.totalorder %s16, 0
      %p75 = por %p73, %p74
      %p76 = scmp.ne.s32.totalorder %s62, %s63
      %p77 = scmp.eq.s32.totalorder %s17, 3
      %p78 = por %p76, %p77
      %p80 = scmp.ne.s32.totalorder %s63, %s79
      %p81 = scmp.eq.s32.totalorder %s17, 0
      %p82 = por %p80, %p81
      %s83 = ssub.s32 %s19, %s26
      %s84 = ssub.s32 %s18, %s30
      %s85 = sor.u32 %s83, %s84
      %p86 = scmp.eq.s32.totalorder %s85, 0
      %s88 = sadd.s32 %s87, 1
      %s89 = scalar_select %p86, %s87, %s88
      %p92 = pneg %p86
      %p93 = scmp.eq.s32.totalorder %s11, 3
      %p94 = por %p92, %p93
      %p95 = scmp.ne.s32.totalorder %s87, %s90
      %p96 = scmp.eq.s32.totalorder %s11, 0
      %p97 = por %p95, %p96
      %p98 = scmp.ne.s32.totalorder %s87, %s90
      %p99 = scmp.eq.s32.totalorder %s16, 3
      %p100 = por %p98, %p99
      %p101 = scmp.ne.s32.totalorder %s90, %s91
      %p102 = scmp.eq.s32.totalorder %s16, 0
      %p103 = por %p101, %p102
      %p104 = scmp.ne.s32.totalorder %s90, %s91
      %p105 = scmp.eq.s32.totalorder %s17, 3
      %p106 = por %p104, %p105
      %p108 = scmp.ne.s32.totalorder %s91, %s107
      %p109 = scmp.eq.s32.totalorder %s17, 0
      %p110 = por %p108, %p109
      %p111 = scmp.le.s32.totalorder 1, %s11
      %p112 = scmp.lt.s32.totalorder %s11, 5
      %p113 = pnand %p111, %p112
      %p114 = pneg %p113
      // Predicated region
      $region9: #{tpu_custom_call.1} parent=5 // pred_check
        _
      $region10: #{tpu_custom_call.1} parent=5 // pred_check_branch
        %116 = sbr.rel (%p113) target = $region12
      $region11: #{tpu_custom_call.1} parent=5 // pred_region
        %s117 = ssub.s32 %s11, 1
        // Predicated region
        $region13: #{tpu_custom_call.1} parent=11 // pred_check
          %p118 = pneg %p49
        $region14: #{tpu_custom_call.1} parent=11 // pred_check_branch
          %120 = sbr.rel (%p118) target = $region16
        $region15: #{tpu_custom_call.1} parent=11 // pred_region
          %s121 = smul.u32 2, %s20
          %p122 = scmp.lt.s32.totalorder %s121, 1
          %s123 = scalar_select %p122, %s121, 1
          %s124 = smul.addr %s123, 8
          %s125 = scalar_lea.vmem %s0, %s124
          %s126 = smul.u32 2, %s20
        $region16: #{tpu_custom_call.1} parent=11 // pred_fallthru
          _
      $region12: #{tpu_custom_call.1} parent=5 // pred_fallthru
        _
      %p127 = scmp.lt.s32.totalorder %s11, 4
      // Predicated region
      $region17: #{tpu_custom_call.1} parent=5 // pred_check
        %p128 = pneg %p127
      $region18: #{tpu_custom_call.1} parent=5 // pred_check_branch
        %130 = sbr.rel (%p128) target = $region20
      $region19: #{tpu_custom_call.1} parent=5 // pred_region
        // Predicated region
        $region21: #{tpu_custom_call.1} parent=19 // pred_check
          %p131 = pneg %p69
        $region22: #{tpu_custom_call.1} parent=19 // pred_check_branch
          %133 = sbr.rel (%p131) target = $region24
        $region23: #{tpu_custom_call.1} parent=19 // pred_region
          %p134 = scmp.lt.s32.totalorder %s19, 3
          %s135 = scalar_select %p134, %s19, 3
          %s136 = smul.addr %s135, 128
          %s137 = smul.addr %s136, 8
          %s138 = scalar_lea.vmem %s1, %s137
        $region24: #{tpu_custom_call.1} parent=19 // pred_fallthru
          _
      $region20: #{tpu_custom_call.1} parent=5 // pred_fallthru
        _
      %p139 = scmp.le.s32.totalorder 1, %s11
      %p140 = scmp.lt.s32.totalorder %s11, 5
      %p141 = pnand %p139, %p140
      %p142 = pneg %p141
      // Predicated region
      $region25: #{tpu_custom_call.1} parent=5 // pred_check
        _
      $region26: #{tpu_custom_call.1} parent=5 // pred_check_branch
        %144 = sbr.rel (%p141) target = $region28
      $region27: #{tpu_custom_call.1} parent=5 // pred_region
        %s145 = ssub.s32 %s11, 1
        %s146 = smul.u32 2, %s20
        %p147 = scmp.lt.s32.totalorder %s146, 1
        %s148 = scalar_select %p147, %s146, 1
        %s149 = smul.addr %s148, 8
        %s150 = scalar_lea.vmem %s0, %s149
        %p151 = pneg %p49
        %p152 = pneg %p46
        %p153 = scmp.lt.s32.totalorder %s21, 3
        %s154 = scalar_select %p153, %s21, 3
        %s155 = smul.addr %s154, 128
        %s156 = smul.addr %s155, 8
        %s157 = scalar_lea.vmem %s1, %s156
        %p158 = pneg %p75
        %p159 = pneg %p72
        %p160 = pneg %p103
        %p161 = pneg %p100
        %s162 = sand.u32 %s90, 1
        %s163 = scalar_lea.sflag [#allocation3], %s162
        %s164 = sand.u32 %s90, 1
        %s165 = smul.addr %s164, 2
        %s166 = scalar_lea.vmem [#allocation2], %s165
        %s167 = smul.u32 2, %s20
        %p168 = scmp.lt.s32.totalorder %s167, 1
        %s169 = scalar_select %p168, %s167, 1
        %s170 = smul.addr %s169, 8
        %s171 = scalar_lea.vmem %s0, %s170
        %s172 = smul.u32 2, %s20
        %p173 = scmp.lt.s32.totalorder %s21, 3
        %s174 = scalar_select %p173, %s21, 3
        %s175 = smul.addr %s174, 128
        %s176 = smul.addr %s175, 8
        %s177 = scalar_lea.vmem %s1, %s176
        %v178 = vld [vmem:[%s171] sm:$0x1]
        %v179 = vld [vmem:[%s171 + $0x8] sm:$0x1]
        %v180 = vld [vmem:[%s177] sm:$0xff]
        %v181 = vld [vmem:[%s177 + $0x8] sm:$0xff]
        %v182 = vld [vmem:[%s177 + $0x10] sm:$0xff]
        %v183 = vld [vmem:[%s177 + $0x18] sm:$0xff]
        %v184 = vld [vmem:[%s177 + $0x20] sm:$0xff]
        %v185 = vld [vmem:[%s177 + $0x28] sm:$0xff]
        %v186 = vld [vmem:[%s177 + $0x30] sm:$0xff]
        %v187 = vld [vmem:[%s177 + $0x38] sm:$0xff]
        %v188 = vld [vmem:[%s177 + $0x40] sm:$0xff]
        %v189 = vld [vmem:[%s177 + $0x48] sm:$0xff]
        %v190 = vld [vmem:[%s177 + $0x50] sm:$0xff]
        %v191 = vld [vmem:[%s177 + $0x58] sm:$0xff]
        %v192 = vld [vmem:[%s177 + $0x60] sm:$0xff]
        %v193 = vld [vmem:[%s177 + $0x68] sm:$0xff]
        %v194 = vld [vmem:[%s177 + $0x70] sm:$0xff]
        %v195 = vld [vmem:[%s177 + $0x78] sm:$0xff]
        %v196 = vld [vmem:[%s171 + $0x1] sm:$0x1]
        %v197 = vld [vmem:[%s171 + $0x9] sm:$0x1]
        %s198 = scalar_lea.vmem %s177, 128
        %v199 = vld [vmem:[%s198] sm:$0xff]
        %v200 = vld [vmem:[%s198 + $0x8] sm:$0xff]
        %v201 = vld [vmem:[%s198 + $0x10] sm:$0xff]
        %v202 = vld [vmem:[%s198 + $0x18] sm:$0xff]
        %v203 = vld [vmem:[%s198 + $0x20] sm:$0xff]
        %v204 = vld [vmem:[%s198 + $0x28] sm:$0xff]
        %v205 = vld [vmem:[%s198 + $0x30] sm:$0xff]
        %v206 = vld [vmem:[%s198 + $0x38] sm:$0xff]
        %v207 = vld [vmem:[%s198 + $0x40] sm:$0xff]
        %v208 = vld [vmem:[%s198 + $0x48] sm:$0xff]
        %v209 = vld [vmem:[%s198 + $0x50] sm:$0xff]
        %v210 = vld [vmem:[%s198 + $0x58] sm:$0xff]
        %v211 = vld [vmem:[%s198 + $0x60] sm:$0xff]
        %v212 = vld [vmem:[%s198 + $0x68] sm:$0xff]
        %v213 = vld [vmem:[%s198 + $0x70] sm:$0xff]
        %v214 = vld [vmem:[%s198 + $0x78] sm:$0xff]
        %v217 = vrot.slane %v197, 7
        %vm218 = vcmask 1041409
        %v219 = vsel %vm218, %v217, %v196
        %221 = vmatprep.subr.mxu0 0.0
        %222 = vmatpush1.msra.mxu0 %v199
        %223 = vmatprep.subr.mxu0 0.0
        %224 = vmatpush1.msra.mxu0 %v200
        %225 = vmatprep.subr.mxu0 0.0
        %226 = vmatpush1.msra.mxu0 %v201
        %227 = vmatprep.subr.mxu0 0.0
        %228 = vmatpush1.msra.mxu0 %v202
        %229 = vmatprep.subr.mxu0 0.0
        %230 = vmatpush1.msra.mxu0 %v203
        %231 = vmatprep.subr.mxu0 0.0
        %232 = vmatpush1.msra.mxu0 %v204
        %233 = vmatprep.subr.mxu0 0.0
        %234 = vmatpush1.msra.mxu0 %v205
        %235 = vmatprep.subr.mxu0 0.0
        %236 = vmatpush1.msra.mxu0 %v206
        %237 = vmatprep.subr.mxu0 0.0
        %238 = vmatpush1.msra.mxu0 %v207
        %239 = vmatprep.subr.mxu0 0.0
        %240 = vmatpush1.msra.mxu0 %v208
        %241 = vmatprep.subr.mxu0 0.0
        %242 = vmatpush1.msra.mxu0 %v209
        %243 = vmatprep.subr.mxu0 0.0
        %244 = vmatpush1.msra.mxu0 %v210
        %245 = vmatprep.subr.mxu0 0.0
        %246 = vmatpush1.msra.mxu0 %v211
        %247 = vmatprep.subr.mxu0 0.0
        %248 = vmatpush1.msra.mxu0 %v212
        %249 = vmatprep.subr.mxu0 0.0
        %250 = vmatpush1.msra.mxu0 %v213
        %251 = vmatprep.subr.mxu0 0.0
        %252 = vmatpush1.msra.mxu0 %v214
        %253 = vmatprep.subr.mxu0 0.0
        %254 = vmatpush1.msra.mxu0 0.0
        %255 = vmatprep.subr.mxu0 0.0
        %256 = vmatpush1.msra.mxu0 0.0
        %257 = vmatprep.subr.mxu0 0.0
        %258 = vmatpush1.msra.mxu0 0.0
        %259 = vmatprep.subr.mxu0 0.0
        %260 = vmatpush1.msra.mxu0 0.0
        %261 = vmatprep.subr.mxu0 0.0
        %262 = vmatpush1.msra.mxu0 0.0
        %263 = vmatprep.subr.mxu0 0.0
        %264 = vmatpush1.msra.mxu0 0.0
        %265 = vmatprep.subr.mxu0 0.0
        %266 = vmatpush1.msra.mxu0 0.0
        %267 = vmatprep.subr.mxu0 0.0
        %268 = vmatpush1.msra.mxu0 0.0
        %269 = vmatprep.subr.mxu0 0.0
        %270 = vmatpush1.msra.mxu0 0.0
        %271 = vmatprep.subr.mxu0 0.0
        %272 = vmatpush1.msra.mxu0 0.0
        %273 = vmatprep.subr.mxu0 0.0
        %274 = vmatpush1.msra.mxu0 0.0
        %275 = vmatprep.subr.mxu0 0.0
        %276 = vmatpush1.msra.mxu0 0.0
        %277 = vmatprep.subr.mxu0 0.0
        %278 = vmatpush1.msra.mxu0 0.0
        %279 = vmatprep.subr.mxu0 0.0
        %280 = vmatpush1.msra.mxu0 0.0
        %281 = vmatprep.subr.mxu0 0.0
        %282 = vmatpush1.msra.mxu0 0.0
        %283 = vmatprep.subr.mxu0 0.0
        %284 = vmatpush1.msra.mxu0 0.0
        %285 = vmatprep.mubr.f32.mxu0 0.0
        %286 = vmatmul.mubr.f32.gmra.mrb[0].mxu0 %v219
        %v287 = vpop.f32.mrb[0].mxu0
        %v288 = vadd.f32 0.0, %v287
        %v289 = vpop.f32.mrb[0].mxu0
        %290 = vdwg.mxu0
        %v293 = vrot.slane %v179, 7
        %v294 = vsel %vm218, %v293, %v178
        %296 = vmatprep.subr.mxu0 0.0
        %297 = vmatpush1.msra.mxu0 %v180
        %298 = vmatprep.subr.mxu0 0.0
        %299 = vmatpush1.msra.mxu0 %v181
        %300 = vmatprep.subr.mxu0 0.0
        %301 = vmatpush1.msra.mxu0 %v182
        %302 = vmatprep.subr.mxu0 0.0
        %303 = vmatpush1.msra.mxu0 %v183
        %304 = vmatprep.subr.mxu0 0.0
        %305 = vmatpush1.msra.mxu0 %v184
        %306 = vmatprep.subr.mxu0 0.0
        %307 = vmatpush1.msra.mxu0 %v185
        %308 = vmatprep.subr.mxu0 0.0
        %309 = vmatpush1.msra.mxu0 %v186
        %310 = vmatprep.subr.mxu0 0.0
        %311 = vmatpush1.msra.mxu0 %v187
        %312 = vmatprep.subr.mxu0 0.0
        %313 = vmatpush1.msra.mxu0 %v188
        %314 = vmatprep.subr.mxu0 0.0
        %315 = vmatpush1.msra.mxu0 %v189
        %316 = vmatprep.subr.mxu0 0.0
        %317 = vmatpush1.msra.mxu0 %v190
        %318 = vmatprep.subr.mxu0 0.0
        %319 = vmatpush1.msra.mxu0 %v191
        %320 = vmatprep.subr.mxu0 0.0
        %321 = vmatpush1.msra.mxu0 %v192
        %322 = vmatprep.subr.mxu0 0.0
        %323 = vmatpush1.msra.mxu0 %v193
        %324 = vmatprep.subr.mxu0 0.0
        %325 = vmatpush1.msra.mxu0 %v194
        %326 = vmatprep.subr.mxu0 0.0
        %327 = vmatpush1.msra.mxu0 %v195
        %328 = vmatprep.subr.mxu0 0.0
        %329 = vmatpush1.msra.mxu0 0.0
        %330 = vmatprep.subr.mxu0 0.0
        %331 = vmatpush1.msra.mxu0 0.0
        %332 = vmatprep.subr.mxu0 0.0
        %333 = vmatpush1.msra.mxu0 0.0
        %334 = vmatprep.subr.mxu0 0.0
        %335 = vmatpush1.msra.mxu0 0.0
        %336 = vmatprep.subr.mxu0 0.0
        %337 = vmatpush1.msra.mxu0 0.0
        %338 = vmatprep.subr.mxu0 0.0
        %339 = vmatpush1.msra.mxu0 0.0
        %340 = vmatprep.subr.mxu0 0.0
        %341 = vmatpush1.msra.mxu0 0.0
        %342 = vmatprep.subr.mxu0 0.0
        %343 = vmatpush1.msra.mxu0 0.0
        %344 = vmatprep.subr.mxu0 0.0
        %345 = vmatpush1.msra.mxu0 0.0
        %346 = vmatprep.subr.mxu0 0.0
        %347 = vmatpush1.msra.mxu0 0.0
        %348 = vmatprep.subr.mxu0 0.0
        %349 = vmatpush1.msra.mxu0 0.0
        %350 = vmatprep.subr.mxu0 0.0
        %351 = vmatpush1.msra.mxu0 0.0
        %352 = vmatprep.subr.mxu0 0.0
        %353 = vmatpush1.msra.mxu0 0.0
        %354 = vmatprep.subr.mxu0 0.0
        %355 = vmatpush1.msra.mxu0 0.0
        %356 = vmatprep.subr.mxu0 0.0
        %357 = vmatpush1.msra.mxu0 0.0
        %358 = vmatprep.subr.mxu0 0.0
        %359 = vmatpush1.msra.mxu0 0.0
        %360 = vmatprep.mubr.f32.mxu0 0.0
        %361 = vmatmul.mubr.f32.gmra.mrb[0].mxu0 %v294
        %v362 = vpop.f32.mrb[0].mxu0
        %v363 = vadd.f32 %v288, %v362
        %v364 = vpop.f32.mrb[0].mxu0
        %365 = vdwg.mxu0
        %v366 = vld [vmem:[%s171 + $0x2] sm:$0x1]
        %v367 = vld [vmem:[%s171 + $0xa] sm:$0x1]
        %s368 = scalar_lea.vmem %s177, 256
        %v369 = vld [vmem:[%s368] sm:$0xff]
        %v370 = vld [vmem:[%s368 + $0x8] sm:$0xff]
        %v371 = vld [vmem:[%s368 + $0x10] sm:$0xff]
        %v372 = vld [vmem:[%s368 + $0x18] sm:$0xff]
        %v373 = vld [vmem:[%s368 + $0x20] sm:$0xff]
        %v374 = vld [vmem:[%s368 + $0x28] sm:$0xff]
        %v375 = vld [vmem:[%s368 + $0x30] sm:$0xff]
        %v376 = vld [vmem:[%s368 + $0x38] sm:$0xff]
        %v377 = vld [vmem:[%s368 + $0x40] sm:$0xff]
        %v378 = vld [vmem:[%s368 + $0x48] sm:$0xff]
        %v379 = vld [vmem:[%s368 + $0x50] sm:$0xff]
        %v380 = vld [vmem:[%s368 + $0x58] sm:$0xff]
        %v381 = vld [vmem:[%s368 + $0x60] sm:$0xff]
        %v382 = vld [vmem:[%s368 + $0x68] sm:$0xff]
        %v383 = vld [vmem:[%s368 + $0x70] sm:$0xff]
        %v384 = vld [vmem:[%s368 + $0x78] sm:$0xff]
        %v387 = vrot.slane %v367, 7
        %v388 = vsel %vm218, %v387, %v366
        %390 = vmatprep.subr.mxu0 0.0
        %391 = vmatpush1.msra.mxu0 %v369
        %392 = vmatprep.subr.mxu0 0.0
        %393 = vmatpush1.msra.mxu0 %v370
        %394 = vmatprep.subr.mxu0 0.0
        %395 = vmatpush1.msra.mxu0 %v371
        %396 = vmatprep.subr.mxu0 0.0
        %397 = vmatpush1.msra.mxu0 %v372
        %398 = vmatprep.subr.mxu0 0.0
        %399 = vmatpush1.msra.mxu0 %v373
        %400 = vmatprep.subr.mxu0 0.0
        %401 = vmatpush1.msra.mxu0 %v374
        %402 = vmatprep.subr.mxu0 0.0
        %403 = vmatpush1.msra.mxu0 %v375
        %404 = vmatprep.subr.mxu0 0.0
        %405 = vmatpush1.msra.mxu0 %v376
        %406 = vmatprep.subr.mxu0 0.0
        %407 = vmatpush1.msra.mxu0 %v377
        %408 = vmatprep.subr.mxu0 0.0
        %409 = vmatpush1.msra.mxu0 %v378
        %410 = vmatprep.subr.mxu0 0.0
        %411 = vmatpush1.msra.mxu0 %v379
        %412 = vmatprep.subr.mxu0 0.0
        %413 = vmatpush1.msra.mxu0 %v380
        %414 = vmatprep.subr.mxu0 0.0
        %415 = vmatpush1.msra.mxu0 %v381
        %416 = vmatprep.subr.mxu0 0.0
        %417 = vmatpush1.msra.mxu0 %v382
        %418 = vmatprep.subr.mxu0 0.0
        %419 = vmatpush1.msra.mxu0 %v383
        %420 = vmatprep.subr.mxu0 0.0
        %421 = vmatpush1.msra.mxu0 %v384
        %422 = vmatprep.subr.mxu0 0.0
        %423 = vmatpush1.msra.mxu0 0.0
        %424 = vmatprep.subr.mxu0 0.0
        %425 = vmatpush1.msra.mxu0 0.0
        %426 = vmatprep.subr.mxu0 0.0
        %427 = vmatpush1.msra.mxu0 0.0
        %428 = vmatprep.subr.mxu0 0.0
        %429 = vmatpush1.msra.mxu0 0.0
        %430 = vmatprep.subr.mxu0 0.0
        %431 = vmatpush1.msra.mxu0 0.0
        %432 = vmatprep.subr.mxu0 0.0
        %433 = vmatpush1.msra.mxu0 0.0
        %434 = vmatprep.subr.mxu0 0.0
        %435 = vmatpush1.msra.mxu0 0.0
        %436 = vmatprep.subr.mxu0 0.0
        %437 = vmatpush1.msra.mxu0 0.0
        %438 = vmatprep.subr.mxu0 0.0
        %439 = vmatpush1.msra.mxu0 0.0
        %440 = vmatprep.subr.mxu0 0.0
        %441 = vmatpush1.msra.mxu0 0.0
        %442 = vmatprep.subr.mxu0 0.0
        %443 = vmatpush1.msra.mxu0 0.0
        %444 = vmatprep.subr.mxu0 0.0
        %445 = vmatpush1.msra.mxu0 0.0
        %446 = vmatprep.subr.mxu0 0.0
        %447 = vmatpush1.msra.mxu0 0.0
        %448 = vmatprep.subr.mxu0 0.0
        %449 = vmatpush1.msra.mxu0 0.0
        %450 = vmatprep.subr.mxu0 0.0
        %451 = vmatpush1.msra.mxu0 0.0
        %452 = vmatprep.subr.mxu0 0.0
        %453 = vmatpush1.msra.mxu0 0.0
        %454 = vmatprep.mubr.f32.mxu0 0.0
        %455 = vmatmul.mubr.f32.gmra.mrb[0].mxu0 %v388
        %v456 = vpop.f32.mrb[0].mxu0
        %v457 = vadd.f32 0.0, %v456
        %v458 = vpop.f32.mrb[0].mxu0
        %459 = vdwg.mxu0
        %v460 = vadd.f32 %v363, %v457
        %v461 = vld [vmem:[%s171 + $0x3] sm:$0x1]
        %v462 = vld [vmem:[%s171 + $0xb] sm:$0x1]
        %s463 = scalar_lea.vmem %s177, 384
        %v464 = vld [vmem:[%s463] sm:$0xff]
        %v465 = vld [vmem:[%s463 + $0x8] sm:$0xff]
        %v466 = vld [vmem:[%s463 + $0x10] sm:$0xff]
        %v467 = vld [vmem:[%s463 + $0x18] sm:$0xff]
        %v468 = vld [vmem:[%s463 + $0x20] sm:$0xff]
        %v469 = vld [vmem:[%s463 + $0x28] sm:$0xff]
        %v470 = vld [vmem:[%s463 + $0x30] sm:$0xff]
        %v471 = vld [vmem:[%s463 + $0x38] sm:$0xff]
        %v472 = vld [vmem:[%s463 + $0x40] sm:$0xff]
        %v473 = vld [vmem:[%s463 + $0x48] sm:$0xff]
        %v474 = vld [vmem:[%s463 + $0x50] sm:$0xff]
        %v475 = vld [vmem:[%s463 + $0x58] sm:$0xff]
        %v476 = vld [vmem:[%s463 + $0x60] sm:$0xff]
        %v477 = vld [vmem:[%s463 + $0x68] sm:$0xff]
        %v478 = vld [vmem:[%s463 + $0x70] sm:$0xff]
        %v479 = vld [vmem:[%s463 + $0x78] sm:$0xff]
        %v482 = vrot.slane %v462, 7
        %v483 = vsel %vm218, %v482, %v461
        %485 = vmatprep.subr.mxu0 0.0
        %486 = vmatpush1.msra.mxu0 %v464
        %487 = vmatprep.subr.mxu0 0.0
        %488 = vmatpush1.msra.mxu0 %v465
        %489 = vmatprep.subr.mxu0 0.0
        %490 = vmatpush1.msra.mxu0 %v466
        %491 = vmatprep.subr.mxu0 0.0
        %492 = vmatpush1.msra.mxu0 %v467
        %493 = vmatprep.subr.mxu0 0.0
        %494 = vmatpush1.msra.mxu0 %v468
        %495 = vmatprep.subr.mxu0 0.0
        %496 = vmatpush1.msra.mxu0 %v469
        %497 = vmatprep.subr.mxu0 0.0
        %498 = vmatpush1.msra.mxu0 %v470
        %499 = vmatprep.subr.mxu0 0.0
        %500 = vmatpush1.msra.mxu0 %v471
        %501 = vmatprep.subr.mxu0 0.0
        %502 = vmatpush1.msra.mxu0 %v472
        %503 = vmatprep.subr.mxu0 0.0
        %504 = vmatpush1.msra.mxu0 %v473
        %505 = vmatprep.subr.mxu0 0.0
        %506 = vmatpush1.msra.mxu0 %v474
        %507 = vmatprep.subr.mxu0 0.0
        %508 = vmatpush1.msra.mxu0 %v475
        %509 = vmatprep.subr.mxu0 0.0
        %510 = vmatpush1.msra.mxu0 %v476
        %511 = vmatprep.subr.mxu0 0.0
        %512 = vmatpush1.msra.mxu0 %v477
        %513 = vmatprep.subr.mxu0 0.0
        %514 = vmatpush1.msra.mxu0 %v478
        %515 = vmatprep.subr.mxu0 0.0
        %516 = vmatpush1.msra.mxu0 %v479
        %517 = vmatprep.subr.mxu0 0.0
        %518 = vmatpush1.msra.mxu0 0.0
        %519 = vmatprep.subr.mxu0 0.0
        %520 = vmatpush1.msra.mxu0 0.0
        %521 = vmatprep.subr.mxu0 0.0
        %522 = vmatpush1.msra.mxu0 0.0
        %523 = vmatprep.subr.mxu0 0.0
        %524 = vmatpush1.msra.mxu0 0.0
        %525 = vmatprep.subr.mxu0 0.0
        %526 = vmatpush1.msra.mxu0 0.0
        %527 = vmatprep.subr.mxu0 0.0
        %528 = vmatpush1.msra.mxu0 0.0
        %529 = vmatprep.subr.mxu0 0.0
        %530 = vmatpush1.msra.mxu0 0.0
        %531 = vmatprep.subr.mxu0 0.0
        %532 = vmatpush1.msra.mxu0 0.0
        %533 = vmatprep.subr.mxu0 0.0
        %534 = vmatpush1.msra.mxu0 0.0
        %535 = vmatprep.subr.mxu0 0.0
        %536 = vmatpush1.msra.mxu0 0.0
        %537 = vmatprep.subr.mxu0 0.0
        %538 = vmatpush1.msra.mxu0 0.0
        %539 = vmatprep.subr.mxu0 0.0
        %540 = vmatpush1.msra.mxu0 0.0
        %541 = vmatprep.subr.mxu0 0.0
        %542 = vmatpush1.msra.mxu0 0.0
        %543 = vmatprep.subr.mxu0 0.0
        %544 = vmatpush1.msra.mxu0 0.0
        %545 = vmatprep.subr.mxu0 0.0
        %546 = vmatpush1.msra.mxu0 0.0
        %547 = vmatprep.subr.mxu0 0.0
        %548 = vmatpush1.msra.mxu0 0.0
        %549 = vmatprep.mubr.f32.mxu0 0.0
        %550 = vmatmul.mubr.f32.gmra.mrb[0].mxu0 %v483
        %v551 = vpop.f32.mrb[0].mxu0
        %v552 = vadd.f32 0.0, %v551
        %v553 = vpop.f32.mrb[0].mxu0
        %554 = vdwg.mxu0
        %v555 = vadd.f32 %v460, %v552
        %v556 = vld [vmem:[%s171 + $0x4] sm:$0x1]
        %v557 = vld [vmem:[%s171 + $0xc] sm:$0x1]
        %s558 = scalar_lea.vmem %s177, 512
        %v559 = vld [vmem:[%s558] sm:$0xff]
        %v560 = vld [vmem:[%s558 + $0x8] sm:$0xff]
        %v561 = vld [vmem:[%s558 + $0x10] sm:$0xff]
        %v562 = vld [vmem:[%s558 + $0x18] sm:$0xff]
        %v563 = vld [vmem:[%s558 + $0x20] sm:$0xff]
        %v564 = vld [vmem:[%s558 + $0x28] sm:$0xff]
        %v565 = vld [vmem:[%s558 + $0x30] sm:$0xff]
        %v566 = vld [vmem:[%s558 + $0x38] sm:$0xff]
        %v567 = vld [vmem:[%s558 + $0x40] sm:$0xff]
        %v568 = vld [vmem:[%s558 + $0x48] sm:$0xff]
        %v569 = vld [vmem:[%s558 + $0x50] sm:$0xff]
        %v570 = vld [vmem:[%s558 + $0x58] sm:$0xff]
        %v571 = vld [vmem:[%s558 + $0x60] sm:$0xff]
        %v572 = vld [vmem:[%s558 + $0x68] sm:$0xff]
        %v573 = vld [vmem:[%s558 + $0x70] sm:$0xff]
        %v574 = vld [vmem:[%s558 + $0x78] sm:$0xff]
        %v577 = vrot.slane %v557, 7
        %v578 = vsel %vm218, %v577, %v556
        %580 = vmatprep.subr.mxu0 0.0
        %581 = vmatpush1.msra.mxu0 %v559
        %582 = vmatprep.subr.mxu0 0.0
        %583 = vmatpush1.msra.mxu0 %v560
        %584 = vmatprep.subr.mxu0 0.0
        %585 = vmatpush1.msra.mxu0 %v561
        %586 = vmatprep.subr.mxu0 0.0
        %587 = vmatpush1.msra.mxu0 %v562
        %588 = vmatprep.subr.mxu0 0.0
        %589 = vmatpush1.msra.mxu0 %v563
        %590 = vmatprep.subr.mxu0 0.0
        %591 = vmatpush1.msra.mxu0 %v564
        %592 = vmatprep.subr.mxu0 0.0
        %593 = vmatpush1.msra.mxu0 %v565
        %594 = vmatprep.subr.mxu0 0.0
        %595 = vmatpush1.msra.mxu0 %v566
        %596 = vmatprep.subr.mxu0 0.0
        %597 = vmatpush1.msra.mxu0 %v567
        %598 = vmatprep.subr.mxu0 0.0
        %599 = vmatpush1.msra.mxu0 %v568
        %600 = vmatprep.subr.mxu0 0.0
        %601 = vmatpush1.msra.mxu0 %v569
        %602 = vmatprep.subr.mxu0 0.0
        %603 = vmatpush1.msra.mxu0 %v570
        %604 = vmatprep.subr.mxu0 0.0
        %605 = vmatpush1.msra.mxu0 %v571
        %606 = vmatprep.subr.mxu0 0.0
        %607 = vmatpush1.msra.mxu0 %v572
        %608 = vmatprep.subr.mxu0 0.0
        %609 = vmatpush1.msra.mxu0 %v573
        %610 = vmatprep.subr.mxu0 0.0
        %611 = vmatpush1.msra.mxu0 %v574
        %612 = vmatprep.subr.mxu0 0.0
        %613 = vmatpush1.msra.mxu0 0.0
        %614 = vmatprep.subr.mxu0 0.0
        %615 = vmatpush1.msra.mxu0 0.0
        %616 = vmatprep.subr.mxu0 0.0
        %617 = vmatpush1.msra.mxu0 0.0
        %618 = vmatprep.subr.mxu0 0.0
        %619 = vmatpush1.msra.mxu0 0.0
        %620 = vmatprep.subr.mxu0 0.0
        %621 = vmatpush1.msra.mxu0 0.0
        %622 = vmatprep.subr.mxu0 0.0
        %623 = vmatpush1.msra.mxu0 0.0
        %624 = vmatprep.subr.mxu0 0.0
        %625 = vmatpush1.msra.mxu0 0.0
        %626 = vmatprep.subr.mxu0 0.0
        %627 = vmatpush1.msra.mxu0 0.0
        %628 = vmatprep.subr.mxu0 0.0
        %629 = vmatpush1.msra.mxu0 0.0
        %630 = vmatprep.subr.mxu0 0.0
        %631 = vmatpush1.msra.mxu0 0.0
        %632 = vmatprep.subr.mxu0 0.0
        %633 = vmatpush1.msra.mxu0 0.0
        %634 = vmatprep.subr.mxu0 0.0
        %635 = vmatpush1.msra.mxu0 0.0
        %636 = vmatprep.subr.mxu0 0.0
        %637 = vmatpush1.msra.mxu0 0.0
        %638 = vmatprep.subr.mxu0 0.0
        %639 = vmatpush1.msra.mxu0 0.0
        %640 = vmatprep.subr.mxu0 0.0
        %641 = vmatpush1.msra.mxu0 0.0
        %642 = vmatprep.subr.mxu0 0.0
        %643 = vmatpush1.msra.mxu0 0.0
        %644 = vmatprep.mubr.f32.mxu0 0.0
        %645 = vmatmul.mubr.f32.gmra.mrb[0].mxu0 %v578
        %v646 = vpop.f32.mrb[0].mxu0
        %v647 = vadd.f32 0.0, %v646
        %v648 = vpop.f32.mrb[0].mxu0
        %649 = vdwg.mxu0
        %v650 = vadd.f32 %v555, %v647
        %v651 = vld [vmem:[%s171 + $0x5] sm:$0x1]
        %v652 = vld [vmem:[%s171 + $0xd] sm:$0x1]
        %s653 = scalar_lea.vmem %s177, 640
        %v654 = vld [vmem:[%s653] sm:$0xff]
        %v655 = vld [vmem:[%s653 + $0x8] sm:$0xff]
        %v656 = vld [vmem:[%s653 + $0x10] sm:$0xff]
        %v657 = vld [vmem:[%s653 + $0x18] sm:$0xff]
        %v658 = vld [vmem:[%s653 + $0x20] sm:$0xff]
        %v659 = vld [vmem:[%s653 + $0x28] sm:$0xff]
        %v660 = vld [vmem:[%s653 + $0x30] sm:$0xff]
        %v661 = vld [vmem:[%s653 + $0x38] sm:$0xff]
        %v662 = vld [vmem:[%s653 + $0x40] sm:$0xff]
        %v663 = vld [vmem:[%s653 + $0x48] sm:$0xff]
        %v664 = vld [vmem:[%s653 + $0x50] sm:$0xff]
        %v665 = vld [vmem:[%s653 + $0x58] sm:$0xff]
        %v666 = vld [vmem:[%s653 + $0x60] sm:$0xff]
        %v667 = vld [vmem:[%s653 + $0x68] sm:$0xff]
        %v668 = vld [vmem:[%s653 + $0x70] sm:$0xff]
        %v669 = vld [vmem:[%s653 + $0x78] sm:$0xff]
        %v672 = vrot.slane %v652, 7
        %v673 = vsel %vm218, %v672, %v651
        %675 = vmatprep.subr.mxu0 0.0
        %676 = vmatpush1.msra.mxu0 %v654
        %677 = vmatprep.subr.mxu0 0.0
        %678 = vmatpush1.msra.mxu0 %v655
        %679 = vmatprep.subr.mxu0 0.0
        %680 = vmatpush1.msra.mxu0 %v656
        %681 = vmatprep.subr.mxu0 0.0
        %682 = vmatpush1.msra.mxu0 %v657
        %683 = vmatprep.subr.mxu0 0.0
        %684 = vmatpush1.msra.mxu0 %v658
        %685 = vmatprep.subr.mxu0 0.0
        %686 = vmatpush1.msra.mxu0 %v659
        %687 = vmatprep.subr.mxu0 0.0
        %688 = vmatpush1.msra.mxu0 %v660
        %689 = vmatprep.subr.mxu0 0.0
        %690 = vmatpush1.msra.mxu0 %v661
        %691 = vmatprep.subr.mxu0 0.0
        %692 = vmatpush1.msra.mxu0 %v662
        %693 = vmatprep.subr.mxu0 0.0
        %694 = vmatpush1.msra.mxu0 %v663
        %695 = vmatprep.subr.mxu0 0.0
        %696 = vmatpush1.msra.mxu0 %v664
        %697 = vmatprep.subr.mxu0 0.0
        %698 = vmatpush1.msra.mxu0 %v665
        %699 = vmatprep.subr.mxu0 0.0
        %700 = vmatpush1.msra.mxu0 %v666
        %701 = vmatprep.subr.mxu0 0.0
        %702 = vmatpush1.msra.mxu0 %v667
        %703 = vmatprep.subr.mxu0 0.0
        %704 = vmatpush1.msra.mxu0 %v668
        %705 = vmatprep.subr.mxu0 0.0
        %706 = vmatpush1.msra.mxu0 %v669
        %707 = vmatprep.subr.mxu0 0.0
        %708 = vmatpush1.msra.mxu0 0.0
        %709 = vmatprep.subr.mxu0 0.0
        %710 = vmatpush1.msra.mxu0 0.0
        %711 = vmatprep.subr.mxu0 0.0
        %712 = vmatpush1.msra.mxu0 0.0
        %713 = vmatprep.subr.mxu0 0.0
        %714 = vmatpush1.msra.mxu0 0.0
        %715 = vmatprep.subr.mxu0 0.0
        %716 = vmatpush1.msra.mxu0 0.0
        %717 = vmatprep.subr.mxu0 0.0
        %718 = vmatpush1.msra.mxu0 0.0
        %719 = vmatprep.subr.mxu0 0.0
        %720 = vmatpush1.msra.mxu0 0.0
        %721 = vmatprep.subr.mxu0 0.0
        %722 = vmatpush1.msra.mxu0 0.0
        %723 = vmatprep.subr.mxu0 0.0
        %724 = vmatpush1.msra.mxu0 0.0
        %725 = vmatprep.subr.mxu0 0.0
        %726 = vmatpush1.msra.mxu0 0.0
        %727 = vmatprep.subr.mxu0 0.0
        %728 = vmatpush1.msra.mxu0 0.0
        %729 = vmatprep.subr.mxu0 0.0
        %730 = vmatpush1.msra.mxu0 0.0
        %731 = vmatprep.subr.mxu0 0.0
        %732 = vmatpush1.msra.mxu0 0.0
        %733 = vmatprep.subr.mxu0 0.0
        %734 = vmatpush1.msra.mxu0 0.0
        %735 = vmatprep.subr.mxu0 0.0
        %736 = vmatpush1.msra.mxu0 0.0
        %737 = vmatprep.subr.mxu0 0.0
        %738 = vmatpush1.msra.mxu0 0.0
        %739 = vmatprep.mubr.f32.mxu0 0.0
        %740 = vmatmul.mubr.f32.gmra.mrb[0].mxu0 %v673
        %v741 = vpop.f32.mrb[0].mxu0
        %v742 = vadd.f32 0.0, %v741
        %v743 = vpop.f32.mrb[0].mxu0
        %744 = vdwg.mxu0
        %v745 = vadd.f32 %v650, %v742
        %v746 = vld [vmem:[%s171 + $0x6] sm:$0x1]
        %v747 = vld [vmem:[%s171 + $0xe] sm:$0x1]
        %s748 = scalar_lea.vmem %s177, 768
        %v749 = vld [vmem:[%s748] sm:$0xff]
        %v750 = vld [vmem:[%s748 + $0x8] sm:$0xff]
        %v751 = vld [vmem:[%s748 + $0x10] sm:$0xff]
        %v752 = vld [vmem:[%s748 + $0x18] sm:$0xff]
        %v753 = vld [vmem:[%s748 + $0x20] sm:$0xff]
        %v754 = vld [vmem:[%s748 + $0x28] sm:$0xff]
        %v755 = vld [vmem:[%s748 + $0x30] sm:$0xff]
        %v756 = vld [vmem:[%s748 + $0x38] sm:$0xff]
        %v757 = vld [vmem:[%s748 + $0x40] sm:$0xff]
        %v758 = vld [vmem:[%s748 + $0x48] sm:$0xff]
        %v759 = vld [vmem:[%s748 + $0x50] sm:$0xff]
        %v760 = vld [vmem:[%s748 + $0x58] sm:$0xff]
        %v761 = vld [vmem:[%s748 + $0x60] sm:$0xff]
        %v762 = vld [vmem:[%s748 + $0x68] sm:$0xff]
        %v763 = vld [vmem:[%s748 + $0x70] sm:$0xff]
        %v764 = vld [vmem:[%s748 + $0x78] sm:$0xff]
        %v767 = vrot.slane %v747, 7
        %v768 = vsel %vm218, %v767, %v746
        %770 = vmatprep.subr.mxu0 0.0
        %771 = vmatpush1.msra.mxu0 %v749
        %772 = vmatprep.subr.mxu0 0.0
        %773 = vmatpush1.msra.mxu0 %v750
        %774 = vmatprep.subr.mxu0 0.0
        %775 = vmatpush1.msra.mxu0 %v751
        %776 = vmatprep.subr.mxu0 0.0
        %777 = vmatpush1.msra.mxu0 %v752
        %778 = vmatprep.subr.mxu0 0.0
        %779 = vmatpush1.msra.mxu0 %v753
        %780 = vmatprep.subr.mxu0 0.0
        %781 = vmatpush1.msra.mxu0 %v754
        %782 = vmatprep.subr.mxu0 0.0
        %783 = vmatpush1.msra.mxu0 %v755
        %784 = vmatprep.subr.mxu0 0.0
        %785 = vmatpush1.msra.mxu0 %v756
        %786 = vmatprep.subr.mxu0 0.0
        %787 = vmatpush1.msra.mxu0 %v757
        %788 = vmatprep.subr.mxu0 0.0
        %789 = vmatpush1.msra.mxu0 %v758
        %790 = vmatprep.subr.mxu0 0.0
        %791 = vmatpush1.msra.mxu0 %v759
        %792 = vmatprep.subr.mxu0 0.0
        %793 = vmatpush1.msra.mxu0 %v760
        %794 = vmatprep.subr.mxu0 0.0
        %795 = vmatpush1.msra.mxu0 %v761
        %796 = vmatprep.subr.mxu0 0.0
        %797 = vmatpush1.msra.mxu0 %v762
        %798 = vmatprep.subr.mxu0 0.0
        %799 = vmatpush1.msra.mxu0 %v763
        %800 = vmatprep.subr.mxu0 0.0
        %801 = vmatpush1.msra.mxu0 %v764
        %802 = vmatprep.subr.mxu0 0.0
        %803 = vmatpush1.msra.mxu0 0.0
        %804 = vmatprep.subr.mxu0 0.0
        %805 = vmatpush1.msra.mxu0 0.0
        %806 = vmatprep.subr.mxu0 0.0
        %807 = vmatpush1.msra.mxu0 0.0
        %808 = vmatprep.subr.mxu0 0.0
        %809 = vmatpush1.msra.mxu0 0.0
        %810 = vmatprep.subr.mxu0 0.0
        %811 = vmatpush1.msra.mxu0 0.0
        %812 = vmatprep.subr.mxu0 0.0
        %813 = vmatpush1.msra.mxu0 0.0
        %814 = vmatprep.subr.mxu0 0.0
        %815 = vmatpush1.msra.mxu0 0.0
        %816 = vmatprep.subr.mxu0 0.0
        %817 = vmatpush1.msra.mxu0 0.0
        %818 = vmatprep.subr.mxu0 0.0
        %819 = vmatpush1.msra.mxu0 0.0
        %820 = vmatprep.subr.mxu0 0.0
        %821 = vmatpush1.msra.mxu0 0.0
        %822 = vmatprep.subr.mxu0 0.0
        %823 = vmatpush1.msra.mxu0 0.0
        %824 = vmatprep.subr.mxu0 0.0
        %825 = vmatpush1.msra.mxu0 0.0
        %826 = vmatprep.subr.mxu0 0.0
        %827 = vmatpush1.msra.mxu0 0.0
        %828 = vmatprep.subr.mxu0 0.0
        %829 = vmatpush1.msra.mxu0 0.0
        %830 = vmatprep.subr.mxu0 0.0
        %831 = vmatpush1.msra.mxu0 0.0
        %832 = vmatprep.subr.mxu0 0.0
        %833 = vmatpush1.msra.mxu0 0.0
        %834 = vmatprep.mubr.f32.mxu0 0.0
        %835 = vmatmul.mubr.f32.gmra.mrb[0].mxu0 %v768
        %v836 = vpop.f32.mrb[0].mxu0
        %v837 = vadd.f32 0.0, %v836
        %v838 = vpop.f32.mrb[0].mxu0
        %839 = vdwg.mxu0
        %v840 = vadd.f32 %v745, %v837
        %v841 = vld [vmem:[%s171 + $0x7] sm:$0x1]
        %v842 = vld [vmem:[%s171 + $0xf] sm:$0x1]
        %s843 = scalar_lea.vmem %s177, 896
        %v844 = vld [vmem:[%s843] sm:$0xff]
        %v845 = vld [vmem:[%s843 + $0x8] sm:$0xff]
        %v846 = vld [vmem:[%s843 + $0x10] sm:$0xff]
        %v847 = vld [vmem:[%s843 + $0x18] sm:$0xff]
        %v848 = vld [vmem:[%s843 + $0x20] sm:$0xff]
        %v849 = vld [vmem:[%s843 + $0x28] sm:$0xff]
        %v850 = vld [vmem:[%s843 + $0x30] sm:$0xff]
        %v851 = vld [vmem:[%s843 + $0x38] sm:$0xff]
        %v852 = vld [vmem:[%s843 + $0x40] sm:$0xff]
        %v853 = vld [vmem:[%s843 + $0x48] sm:$0xff]
        %v854 = vld [vmem:[%s843 + $0x50] sm:$0xff]
        %v855 = vld [vmem:[%s843 + $0x58] sm:$0xff]
        %v856 = vld [vmem:[%s843 + $0x60] sm:$0xff]
        %v857 = vld [vmem:[%s843 + $0x68] sm:$0xff]
        %v858 = vld [vmem:[%s843 + $0x70] sm:$0xff]
        %v859 = vld [vmem:[%s843 + $0x78] sm:$0xff]
        %v862 = vrot.slane %v842, 7
        %v863 = vsel %vm218, %v862, %v841
        %865 = vmatprep.subr.mxu0 0.0
        %866 = vmatpush1.msra.mxu0 %v844
        %867 = vmatprep.subr.mxu0 0.0
        %868 = vmatpush1.msra.mxu0 %v845
        %869 = vmatprep.subr.mxu0 0.0
        %870 = vmatpush1.msra.mxu0 %v846
        %871 = vmatprep.subr.mxu0 0.0
        %872 = vmatpush1.msra.mxu0 %v847
        %873 = vmatprep.subr.mxu0 0.0
        %874 = vmatpush1.msra.mxu0 %v848
        %875 = vmatprep.subr.mxu0 0.0
        %876 = vmatpush1.msra.mxu0 %v849
        %877 = vmatprep.subr.mxu0 0.0
        %878 = vmatpush1.msra.mxu0 %v850
        %879 = vmatprep.subr.mxu0 0.0
        %880 = vmatpush1.msra.mxu0 %v851
        %881 = vmatprep.subr.mxu0 0.0
        %882 = vmatpush1.msra.mxu0 %v852
        %883 = vmatprep.subr.mxu0 0.0
        %884 = vmatpush1.msra.mxu0 %v853
        %885 = vmatprep.subr.mxu0 0.0
        %886 = vmatpush1.msra.mxu0 %v854
        %887 = vmatprep.subr.mxu0 0.0
        %888 = vmatpush1.msra.mxu0 %v855
        %889 = vmatprep.subr.mxu0 0.0
        %890 = vmatpush1.msra.mxu0 %v856
        %891 = vmatprep.subr.mxu0 0.0
        %892 = vmatpush1.msra.mxu0 %v857
        %893 = vmatprep.subr.mxu0 0.0
        %894 = vmatpush1.msra.mxu0 %v858
        %895 = vmatprep.subr.mxu0 0.0
        %896 = vmatpush1.msra.mxu0 %v859
        %897 = vmatprep.subr.mxu0 0.0
        %898 = vmatpush1.msra.mxu0 0.0
        %899 = vmatprep.subr.mxu0 0.0
        %900 = vmatpush1.msra.mxu0 0.0
        %901 = vmatprep.subr.mxu0 0.0
        %902 = vmatpush1.msra.mxu0 0.0
        %903 = vmatprep.subr.mxu0 0.0
        %904 = vmatpush1.msra.mxu0 0.0
        %905 = vmatprep.subr.mxu0 0.0
        %906 = vmatpush1.msra.mxu0 0.0
        %907 = vmatprep.subr.mxu0 0.0
        %908 = vmatpush1.msra.mxu0 0.0
        %909 = vmatprep.subr.mxu0 0.0
        %910 = vmatpush1.msra.mxu0 0.0
        %911 = vmatprep.subr.mxu0 0.0
        %912 = vmatpush1.msra.mxu0 0.0
        %913 = vmatprep.subr.mxu0 0.0
        %914 = vmatpush1.msra.mxu0 0.0
        %915 = vmatprep.subr.mxu0 0.0
        %916 = vmatpush1.msra.mxu0 0.0
        %917 = vmatprep.subr.mxu0 0.0
        %918 = vmatpush1.msra.mxu0 0.0
        %919 = vmatprep.subr.mxu0 0.0
        %920 = vmatpush1.msra.mxu0 0.0
        %921 = vmatprep.subr.mxu0 0.0
        %922 = vmatpush1.msra.mxu0 0.0
        %923 = vmatprep.subr.mxu0 0.0
        %924 = vmatpush1.msra.mxu0 0.0
        %925 = vmatprep.subr.mxu0 0.0
        %926 = vmatpush1.msra.mxu0 0.0
        %927 = vmatprep.subr.mxu0 0.0
        %928 = vmatpush1.msra.mxu0 0.0
        %929 = vmatprep.mubr.f32.mxu0 0.0
        %930 = vmatmul.mubr.f32.gmra.mrb[0].mxu0 %v863
        %v931 = vpop.f32.mrb[0].mxu0
        %v932 = vadd.f32 0.0, %v931
        %v933 = vpop.f32.mrb[0].mxu0
        %934 = vdwg.mxu0
        %v935 = vadd.f32 %v840, %v932
        %v936 = vmul.f32 %v935, 0.0078125
        %v937 = vmul.f32 %v936, %v936
        %vm938 = vcmask 123904
        %v939 = vsel %vm938, %v937, 0.0
        %940 = vadd.xlane.f32.xlu0 %v939
        %v941 = vpop.xlane.xlu0 %940
        %v942 = vrsqrt.pop %v941
        %v943 = vmul.f32 %v941, %v942
        %vm944 = vcmp.eq.f32.partialorder %v941, inf
        %v945 = vsel %vm944, %v941, %v943
        %vm946 = vcmp.eq.f32.partialorder %v941, 0.0
        %v947 = vand.u32 %v941, 2147483648
        %v948 = vsel %vm946, %v947, %v945
        %v949 = vadd.f32 %v941, 1.0
        %v950 = vrcp.pop %v949
        %v951 = vmul.f32 %v948, %v950
        %v952 = vmul.f32 %v936, %v951
        %vm953 = vcmask 130048
        %v955 = vsel %vm953, %v952, 0
        %v958 = vsel %vm953, %v180, 0
        %v961 = vsel %vm953, %v181, 0
        %v964 = vsel %vm953, %v182, 0
        %v967 = vsel %vm953, %v183, 0
        %v970 = vsel %vm953, %v184, 0
        %v973 = vsel %vm953, %v185, 0
        %v976 = vsel %vm953, %v186, 0
        %v979 = vsel %vm953, %v187, 0
        %v982 = vsel %vm953, %v188, 0
        %v985 = vsel %vm953, %v189, 0
        %v988 = vsel %vm953, %v190, 0
        %v991 = vsel %vm953, %v191, 0
        %v994 = vsel %vm953, %v192, 0
        %v997 = vsel %vm953, %v193, 0
        %v1000 = vsel %vm953, %v194, 0
        %v1003 = vsel %vm953, %v195, 0
        %1005 = vmatprep.subr.mxu0 0.0
        %1006 = vmatpush1.xpose.msra.mxu0 %v958
        %1007 = vmatprep.subr.mxu0 0.0
        %1008 = vmatpush1.xpose.msra.mxu0 %v961
        %1009 = vmatprep.subr.mxu0 0.0
        %1010 = vmatpush1.xpose.msra.mxu0 %v964
        %1011 = vmatprep.subr.mxu0 0.0
        %1012 = vmatpush1.xpose.msra.mxu0 %v967
        %1013 = vmatprep.subr.mxu0 0.0
        %1014 = vmatpush1.xpose.msra.mxu0 %v970
        %1015 = vmatprep.subr.mxu0 0.0
        %1016 = vmatpush1.xpose.msra.mxu0 %v973
        %1017 = vmatprep.subr.mxu0 0.0
        %1018 = vmatpush1.xpose.msra.mxu0 %v976
        %1019 = vmatprep.subr.mxu0 0.0
        %1020 = vmatpush1.xpose.msra.mxu0 %v979
        %1021 = vmatprep.subr.mxu0 0.0
        %1022 = vmatpush1.xpose.msra.mxu0 %v982
        %1023 = vmatprep.subr.mxu0 0.0
        %1024 = vmatpush1.xpose.msra.mxu0 %v985
        %1025 = vmatprep.subr.mxu0 0.0
        %1026 = vmatpush1.xpose.msra.mxu0 %v988
        %1027 = vmatprep.subr.mxu0 0.0
        %1028 = vmatpush1.xpose.msra.mxu0 %v991
        %1029 = vmatprep.subr.mxu0 0.0
        %1030 = vmatpush1.xpose.msra.mxu0 %v994
        %1031 = vmatprep.subr.mxu0 0.0
        %1032 = vmatpush1.xpose.msra.mxu0 %v997
        %1033 = vmatprep.subr.mxu0 0.0
        %1034 = vmatpush1.xpose.msra.mxu0 %v1000
        %1035 = vmatprep.subr.mxu0 0.0
        %1036 = vmatpush1.xpose.msra.mxu0 %v1003
        %1037 = vmatprep.subr.mxu0 0.0
        %1038 = vmatpush1.xpose.msra.mxu0 0.0
        %1039 = vmatprep.subr.mxu0 0.0
        %1040 = vmatpush1.xpose.msra.mxu0 0.0
        %1041 = vmatprep.subr.mxu0 0.0
        %1042 = vmatpush1.xpose.msra.mxu0 0.0
        %1043 = vmatprep.subr.mxu0 0.0
        %1044 = vmatpush1.xpose.msra.mxu0 0.0
        %1045 = vmatprep.subr.mxu0 0.0
        %1046 = vmatpush1.xpose.msra.mxu0 0.0
        %1047 = vmatprep.subr.mxu0 0.0
        %1048 = vmatpush1.xpose.msra.mxu0 0.0
        %1049 = vmatprep.subr.mxu0 0.0
        %1050 = vmatpush1.xpose.msra.mxu0 0.0
        %1051 = vmatprep.subr.mxu0 0.0
        %1052 = vmatpush1.xpose.msra.mxu0 0.0
        %1053 = vmatprep.subr.mxu0 0.0
        %1054 = vmatpush1.xpose.msra.mxu0 0.0
        %1055 = vmatprep.subr.mxu0 0.0
        %1056 = vmatpush1.xpose.msra.mxu0 0.0
        %1057 = vmatprep.subr.mxu0 0.0
        %1058 = vmatpush1.xpose.msra.mxu0 0.0
        %1059 = vmatprep.subr.mxu0 0.0
        %1060 = vmatpush1.xpose.msra.mxu0 0.0
        %1061 = vmatprep.subr.mxu0 0.0
        %1062 = vmatpush1.xpose.msra.mxu0 0.0
        %1063 = vmatprep.subr.mxu0 0.0
        %1064 = vmatpush1.xpose.msra.mxu0 0.0
        %1065 = vmatprep.subr.mxu0 0.0
        %1066 = vmatpush1.xpose.msra.mxu0 0.0
        %1067 = vmatprep.subr.mxu0 0.0
        %1068 = vmatpush1.xpose.msra.mxu0 0.0
        %1069 = vmatprep.mubr.f32.mxu0 0.0
        %1070 = vmatmul.mubr.f32.gmra.mrb[0].mxu0 %v955
        %v1071 = vpop.f32.mrb[0].mxu0
        %v1072 = vadd.f32 0.0, %v1071
        %v1073 = vpop.f32.mrb[0].mxu0
        %1074 = vdwg.mxu0
        %v1075 = vmul.f32 %v1072, %v294
        %v1077 = vsel %vm953, %v199, 0
        %v1080 = vsel %vm953, %v200, 0
        %v1083 = vsel %vm953, %v201, 0
        %v1086 = vsel %vm953, %v202, 0
        %v1089 = vsel %vm953, %v203, 0
        %v1092 = vsel %vm953, %v204, 0
        %v1095 = vsel %vm953, %v205, 0
        %v1098 = vsel %vm953, %v206, 0
        %v1101 = vsel %vm953, %v207, 0
        %v1104 = vsel %vm953, %v208, 0
        %v1107 = vsel %vm953, %v209, 0
        %v1110 = vsel %vm953, %v210, 0
        %v1113 = vsel %vm953, %v211, 0
        %v1116 = vsel %vm953, %v212, 0
        %v1119 = vsel %vm953, %v213, 0
        %v1122 = vsel %vm953, %v214, 0
        %1124 = vmatprep.subr.mxu0 0.0
        %1125 = vmatpush1.xpose.msra.mxu0 %v1077
        %1126 = vmatprep.subr.mxu0 0.0
        %1127 = vmatpush1.xpose.msra.mxu0 %v1080
        %1128 = vmatprep.subr.mxu0 0.0
        %1129 = vmatpush1.xpose.msra.mxu0 %v1083
        %1130 = vmatprep.subr.mxu0 0.0
        %1131 = vmatpush1.xpose.msra.mxu0 %v1086
        %1132 = vmatprep.subr.mxu0 0.0
        %1133 = vmatpush1.xpose.msra.mxu0 %v1089
        %1134 = vmatprep.subr.mxu0 0.0
        %1135 = vmatpush1.xpose.msra.mxu0 %v1092
        %1136 = vmatprep.subr.mxu0 0.0
        %1137 = vmatpush1.xpose.msra.mxu0 %v1095
        %1138 = vmatprep.subr.mxu0 0.0
        %1139 = vmatpush1.xpose.msra.mxu0 %v1098
        %1140 = vmatprep.subr.mxu0 0.0
        %1141 = vmatpush1.xpose.msra.mxu0 %v1101
        %1142 = vmatprep.subr.mxu0 0.0
        %1143 = vmatpush1.xpose.msra.mxu0 %v1104
        %1144 = vmatprep.subr.mxu0 0.0
        %1145 = vmatpush1.xpose.msra.mxu0 %v1107
        %1146 = vmatprep.subr.mxu0 0.0
        %1147 = vmatpush1.xpose.msra.mxu0 %v1110
        %1148 = vmatprep.subr.mxu0 0.0
        %1149 = vmatpush1.xpose.msra.mxu0 %v1113
        %1150 = vmatprep.subr.mxu0 0.0
        %1151 = vmatpush1.xpose.msra.mxu0 %v1116
        %1152 = vmatprep.subr.mxu0 0.0
        %1153 = vmatpush1.xpose.msra.mxu0 %v1119
        %1154 = vmatprep.subr.mxu0 0.0
        %1155 = vmatpush1.xpose.msra.mxu0 %v1122
        %1156 = vmatprep.subr.mxu0 0.0
        %1157 = vmatpush1.xpose.msra.mxu0 0.0
        %1158 = vmatprep.subr.mxu0 0.0
        %1159 = vmatpush1.xpose.msra.mxu0 0.0
        %1160 = vmatprep.subr.mxu0 0.0
        %1161 = vmatpush1.xpose.msra.mxu0 0.0
        %1162 = vmatprep.subr.mxu0 0.0
        %1163 = vmatpush1.xpose.msra.mxu0 0.0
        %1164 = vmatprep.subr.mxu0 0.0
        %1165 = vmatpush1.xpose.msra.mxu0 0.0
        %1166 = vmatprep.subr.mxu0 0.0
        %1167 = vmatpush1.xpose.msra.mxu0 0.0
        %1168 = vmatprep.subr.mxu0 0.0
        %1169 = vmatpush1.xpose.msra.mxu0 0.0
        %1170 = vmatprep.subr.mxu0 0.0
        %1171 = vmatpush1.xpose.msra.mxu0 0.0
        %1172 = vmatprep.subr.mxu0 0.0
        %1173 = vmatpush1.xpose.msra.mxu0 0.0
        %1174 = vmatprep.subr.mxu0 0.0
        %1175 = vmatpush1.xpose.msra.mxu0 0.0
        %1176 = vmatprep.subr.mxu0 0.0
        %1177 = vmatpush1.xpose.msra.mxu0 0.0
        %1178 = vmatprep.subr.mxu0 0.0
        %1179 = vmatpush1.xpose.msra.mxu0 0.0
        %1180 = vmatprep.subr.mxu0 0.0
        %1181 = vmatpush1.xpose.msra.mxu0 0.0
        %1182 = vmatprep.subr.mxu0 0.0
        %1183 = vmatpush1.xpose.msra.mxu0 0.0
        %1184 = vmatprep.subr.mxu0 0.0
        %1185 = vmatpush1.xpose.msra.mxu0 0.0
        %1186 = vmatprep.subr.mxu0 0.0
        %1187 = vmatpush1.xpose.msra.mxu0 0.0
        %1188 = vmatprep.mubr.f32.mxu0 0.0
        %1189 = vmatmul.mubr.f32.gmra.mrb[0].mxu0 %v955
        %v1190 = vpop.f32.mrb[0].mxu0
        %v1191 = vadd.f32 0.0, %v1190
        %v1192 = vpop.f32.mrb[0].mxu0
        %1193 = vdwg.mxu0
        %v1194 = vmul.f32 %v1191, %v219
        %v1195 = vadd.f32 %v1075, %v1194
        %v1197 = vsel %vm953, %v369, 0
        %v1200 = vsel %vm953, %v370, 0
        %v1203 = vsel %vm953, %v371, 0
        %v1206 = vsel %vm953, %v372, 0
        %v1209 = vsel %vm953, %v373, 0
        %v1212 = vsel %vm953, %v374, 0
        %v1215 = vsel %vm953, %v375, 0
        %v1218 = vsel %vm953, %v376, 0
        %v1221 = vsel %vm953, %v377, 0
        %v1224 = vsel %vm953, %v378, 0
        %v1227 = vsel %vm953, %v379, 0
        %v1230 = vsel %vm953, %v380, 0
        %v1233 = vsel %vm953, %v381, 0
        %v1236 = vsel %vm953, %v382, 0
        %v1239 = vsel %vm953, %v383, 0
        %v1242 = vsel %vm953, %v384, 0
        %1244 = vmatprep.subr.mxu0 0.0
        %1245 = vmatpush1.xpose.msra.mxu0 %v1197
        %1246 = vmatprep.subr.mxu0 0.0
        %1247 = vmatpush1.xpose.msra.mxu0 %v1200
        %1248 = vmatprep.subr.mxu0 0.0
        %1249 = vmatpush1.xpose.msra.mxu0 %v1203
        %1250 = vmatprep.subr.mxu0 0.0
        %1251 = vmatpush1.xpose.msra.mxu0 %v1206
        %1252 = vmatprep.subr.mxu0 0.0
        %1253 = vmatpush1.xpose.msra.mxu0 %v1209
        %1254 = vmatprep.subr.mxu0 0.0
        %1255 = vmatpush1.xpose.msra.mxu0 %v1212
        %1256 = vmatprep.subr.mxu0 0.0
        %1257 = vmatpush1.xpose.msra.mxu0 %v1215
        %1258 = vmatprep.subr.mxu0 0.0
        %1259 = vmatpush1.xpose.msra.mxu0 %v1218
        %1260 = vmatprep.subr.mxu0 0.0
        %1261 = vmatpush1.xpose.msra.mxu0 %v1221
        %1262 = vmatprep.subr.mxu0 0.0
        %1263 = vmatpush1.xpose.msra.mxu0 %v1224
        %1264 = vmatprep.subr.mxu0 0.0
        %1265 = vmatpush1.xpose.msra.mxu0 %v1227
        %1266 = vmatprep.subr.mxu0 0.0
        %1267 = vmatpush1.xpose.msra.mxu0 %v1230
        %1268 = vmatprep.subr.mxu0 0.0
        %1269 = vmatpush1.xpose.msra.mxu0 %v1233
        %1270 = vmatprep.subr.mxu0 0.0
        %1271 = vmatpush1.xpose.msra.mxu0 %v1236
        %1272 = vmatprep.subr.mxu0 0.0
        %1273 = vmatpush1.xpose.msra.mxu0 %v1239
        %1274 = vmatprep.subr.mxu0 0.0
        %1275 = vmatpush1.xpose.msra.mxu0 %v1242
        %1276 = vmatprep.subr.mxu0 0.0
        %1277 = vmatpush1.xpose.msra.mxu0 0.0
        %1278 = vmatprep.subr.mxu0 0.0
        %1279 = vmatpush1.xpose.msra.mxu0 0.0
        %1280 = vmatprep.subr.mxu0 0.0
        %1281 = vmatpush1.xpose.msra.mxu0 0.0
        %1282 = vmatprep.subr.mxu0 0.0
        %1283 = vmatpush1.xpose.msra.mxu0 0.0
        %1284 = vmatprep.subr.mxu0 0.0
        %1285 = vmatpush1.xpose.msra.mxu0 0.0
        %1286 = vmatprep.subr.mxu0 0.0
        %1287 = vmatpush1.xpose.msra.mxu0 0.0
        %1288 = vmatprep.subr.mxu0 0.0
        %1289 = vmatpush1.xpose.msra.mxu0 0.0
        %1290 = vmatprep.subr.mxu0 0.0
        %1291 = vmatpush1.xpose.msra.mxu0 0.0
        %1292 = vmatprep.subr.mxu0 0.0
        %1293 = vmatpush1.xpose.msra.mxu0 0.0
        %1294 = vmatprep.subr.mxu0 0.0
        %1295 = vmatpush1.xpose.msra.mxu0 0.0
        %1296 = vmatprep.subr.mxu0 0.0
        %1297 = vmatpush1.xpose.msra.mxu0 0.0
        %1298 = vmatprep.subr.mxu0 0.0
        %1299 = vmatpush1.xpose.msra.mxu0 0.0
        %1300 = vmatprep.subr.mxu0 0.0
        %1301 = vmatpush1.xpose.msra.mxu0 0.0
        %1302 = vmatprep.subr.mxu0 0.0
        %1303 = vmatpush1.xpose.msra.mxu0 0.0
        %1304 = vmatprep.subr.mxu0 0.0
        %1305 = vmatpush1.xpose.msra.mxu0 0.0
        %1306 = vmatprep.subr.mxu0 0.0
        %1307 = vmatpush1.xpose.msra.mxu0 0.0
        %1308 = vmatprep.mubr.f32.mxu0 0.0
        %1309 = vmatmul.mubr.f32.gmra.mrb[0].mxu0 %v955
        %v1310 = vpop.f32.mrb[0].mxu0
        %v1311 = vadd.f32 0.0, %v1310
        %v1312 = vpop.f32.mrb[0].mxu0
        %1313 = vdwg.mxu0
        %v1314 = vmul.f32 %v1311, %v388
        %v1315 = vadd.f32 %v1195, %v1314
        %v1317 = vsel %vm953, %v464, 0
        %v1320 = vsel %vm953, %v465, 0
        %v1323 = vsel %vm953, %v466, 0
        %v1326 = vsel %vm953, %v467, 0
        %v1329 = vsel %vm953, %v468, 0
        %v1332 = vsel %vm953, %v469, 0
        %v1335 = vsel %vm953, %v470, 0
        %v1338 = vsel %vm953, %v471, 0
        %v1341 = vsel %vm953, %v472, 0
        %v1344 = vsel %vm953, %v473, 0
        %v1347 = vsel %vm953, %v474, 0
        %v1350 = vsel %vm953, %v475, 0
        %v1353 = vsel %vm953, %v476, 0
        %v1356 = vsel %vm953, %v477, 0
        %v1359 = vsel %vm953, %v478, 0
        %v1362 = vsel %vm953, %v479, 0
        %1364 = vmatprep.subr.mxu0 0.0
        %1365 = vmatpush1.xpose.msra.mxu0 %v1317
        %1366 = vmatprep.subr.mxu0 0.0
        %1367 = vmatpush1.xpose.msra.mxu0 %v1320
        %1368 = vmatprep.subr.mxu0 0.0
        %1369 = vmatpush1.xpose.msra.mxu0 %v1323
        %1370 = vmatprep.subr.mxu0 0.0
        %1371 = vmatpush1.xpose.msra.mxu0 %v1326
        %1372 = vmatprep.subr.mxu0 0.0
        %1373 = vmatpush1.xpose.msra.mxu0 %v1329
        %1374 = vmatprep.subr.mxu0 0.0
        %1375 = vmatpush1.xpose.msra.mxu0 %v1332
        %1376 = vmatprep.subr.mxu0 0.0
        %1377 = vmatpush1.xpose.msra.mxu0 %v1335
        %1378 = vmatprep.subr.mxu0 0.0
        %1379 = vmatpush1.xpose.msra.mxu0 %v1338
        %1380 = vmatprep.subr.mxu0 0.0
        %1381 = vmatpush1.xpose.msra.mxu0 %v1341
        %1382 = vmatprep.subr.mxu0 0.0
        %1383 = vmatpush1.xpose.msra.mxu0 %v1344
        %1384 = vmatprep.subr.mxu0 0.0
        %1385 = vmatpush1.xpose.msra.mxu0 %v1347
        %1386 = vmatprep.subr.mxu0 0.0
        %1387 = vmatpush1.xpose.msra.mxu0 %v1350
        %1388 = vmatprep.subr.mxu0 0.0
        %1389 = vmatpush1.xpose.msra.mxu0 %v1353
        %1390 = vmatprep.subr.mxu0 0.0
        %1391 = vmatpush1.xpose.msra.mxu0 %v1356
        %1392 = vmatprep.subr.mxu0 0.0
        %1393 = vmatpush1.xpose.msra.mxu0 %v1359
        %1394 = vmatprep.subr.mxu0 0.0
        %1395 = vmatpush1.xpose.msra.mxu0 %v1362
        %1396 = vmatprep.subr.mxu0 0.0
        %1397 = vmatpush1.xpose.msra.mxu0 0.0
        %1398 = vmatprep.subr.mxu0 0.0
        %1399 = vmatpush1.xpose.msra.mxu0 0.0
        %1400 = vmatprep.subr.mxu0 0.0
        %1401 = vmatpush1.xpose.msra.mxu0 0.0
        %1402 = vmatprep.subr.mxu0 0.0
        %1403 = vmatpush1.xpose.msra.mxu0 0.0
        %1404 = vmatprep.subr.mxu0 0.0
        %1405 = vmatpush1.xpose.msra.mxu0 0.0
        %1406 = vmatprep.subr.mxu0 0.0
        %1407 = vmatpush1.xpose.msra.mxu0 0.0
        %1408 = vmatprep.subr.mxu0 0.0
        %1409 = vmatpush1.xpose.msra.mxu0 0.0
        %1410 = vmatprep.subr.mxu0 0.0
        %1411 = vmatpush1.xpose.msra.mxu0 0.0
        %1412 = vmatprep.subr.mxu0 0.0
        %1413 = vmatpush1.xpose.msra.mxu0 0.0
        %1414 = vmatprep.subr.mxu0 0.0
        %1415 = vmatpush1.xpose.msra.mxu0 0.0
        %1416 = vmatprep.subr.mxu0 0.0
        %1417 = vmatpush1.xpose.msra.mxu0 0.0
        %1418 = vmatprep.subr.mxu0 0.0
        %1419 = vmatpush1.xpose.msra.mxu0 0.0
        %1420 = vmatprep.subr.mxu0 0.0
        %1421 = vmatpush1.xpose.msra.mxu0 0.0
        %1422 = vmatprep.subr.mxu0 0.0
        %1423 = vmatpush1.xpose.msra.mxu0 0.0
        %1424 = vmatprep.subr.mxu0 0.0
        %1425 = vmatpush1.xpose.msra.mxu0 0.0
        %1426 = vmatprep.subr.mxu0 0.0
        %1427 = vmatpush1.xpose.msra.mxu0 0.0
        %1428 = vmatprep.mubr.f32.mxu0 0.0
        %1429 = vmatmul.mubr.f32.gmra.mrb[0].mxu0 %v955
        %v1430 = vpop.f32.mrb[0].mxu0
        %v1431 = vadd.f32 0.0, %v1430
        %v1432 = vpop.f32.mrb[0].mxu0
        %1433 = vdwg.mxu0
        %v1434 = vmul.f32 %v1431, %v483
        %v1435 = vadd.f32 %v1315, %v1434
        %v1437 = vsel %vm953, %v559, 0
        %v1440 = vsel %vm953, %v560, 0
        %v1443 = vsel %vm953, %v561, 0
        %v1446 = vsel %vm953, %v562, 0
        %v1449 = vsel %vm953, %v563, 0
        %v1452 = vsel %vm953, %v564, 0
        %v1455 = vsel %vm953, %v565, 0
        %v1458 = vsel %vm953, %v566, 0
        %v1461 = vsel %vm953, %v567, 0
        %v1464 = vsel %vm953, %v568, 0
        %v1467 = vsel %vm953, %v569, 0
        %v1470 = vsel %vm953, %v570, 0
        %v1473 = vsel %vm953, %v571, 0
        %v1476 = vsel %vm953, %v572, 0
        %v1479 = vsel %vm953, %v573, 0
        %v1482 = vsel %vm953, %v574, 0
        %1484 = vmatprep.subr.mxu0 0.0
        %1485 = vmatpush1.xpose.msra.mxu0 %v1437
        %1486 = vmatprep.subr.mxu0 0.0
        %1487 = vmatpush1.xpose.msra.mxu0 %v1440
        %1488 = vmatprep.subr.mxu0 0.0
        %1489 = vmatpush1.xpose.msra.mxu0 %v1443
        %1490 = vmatprep.subr.mxu0 0.0
        %1491 = vmatpush1.xpose.msra.mxu0 %v1446
        %1492 = vmatprep.subr.mxu0 0.0
        %1493 = vmatpush1.xpose.msra.mxu0 %v1449
        %1494 = vmatprep.subr.mxu0 0.0
        %1495 = vmatpush1.xpose.msra.mxu0 %v1452
        %1496 = vmatprep.subr.mxu0 0.0
        %1497 = vmatpush1.xpose.msra.mxu0 %v1455
        %1498 = vmatprep.subr.mxu0 0.0
        %1499 = vmatpush1.xpose.msra.mxu0 %v1458
        %1500 = vmatprep.subr.mxu0 0.0
        %1501 = vmatpush1.xpose.msra.mxu0 %v1461
        %1502 = vmatprep.subr.mxu0 0.0
        %1503 = vmatpush1.xpose.msra.mxu0 %v1464
        %1504 = vmatprep.subr.mxu0 0.0
        %1505 = vmatpush1.xpose.msra.mxu0 %v1467
        %1506 = vmatprep.subr.mxu0 0.0
        %1507 = vmatpush1.xpose.msra.mxu0 %v1470
        %1508 = vmatprep.subr.mxu0 0.0
        %1509 = vmatpush1.xpose.msra.mxu0 %v1473
        %1510 = vmatprep.subr.mxu0 0.0
        %1511 = vmatpush1.xpose.msra.mxu0 %v1476
        %1512 = vmatprep.subr.mxu0 0.0
        %1513 = vmatpush1.xpose.msra.mxu0 %v1479
        %1514 = vmatprep.subr.mxu0 0.0
        %1515 = vmatpush1.xpose.msra.mxu0 %v1482
        %1516 = vmatprep.subr.mxu0 0.0
        %1517 = vmatpush1.xpose.msra.mxu0 0.0
        %1518 = vmatprep.subr.mxu0 0.0
        %1519 = vmatpush1.xpose.msra.mxu0 0.0
        %1520 = vmatprep.subr.mxu0 0.0
        %1521 = vmatpush1.xpose.msra.mxu0 0.0
        %1522 = vmatprep.subr.mxu0 0.0
        %1523 = vmatpush1.xpose.msra.mxu0 0.0
        %1524 = vmatprep.subr.mxu0 0.0
        %1525 = vmatpush1.xpose.msra.mxu0 0.0
        %1526 = vmatprep.subr.mxu0 0.0
        %1527 = vmatpush1.xpose.msra.mxu0 0.0
        %1528 = vmatprep.subr.mxu0 0.0
        %1529 = vmatpush1.xpose.msra.mxu0 0.0
        %1530 = vmatprep.subr.mxu0 0.0
        %1531 = vmatpush1.xpose.msra.mxu0 0.0
        %1532 = vmatprep.subr.mxu0 0.0
        %1533 = vmatpush1.xpose.msra.mxu0 0.0
        %1534 = vmatprep.subr.mxu0 0.0
        %1535 = vmatpush1.xpose.msra.mxu0 0.0
        %1536 = vmatprep.subr.mxu0 0.0
        %1537 = vmatpush1.xpose.msra.mxu0 0.0
        %1538 = vmatprep.subr.mxu0 0.0
        %1539 = vmatpush1.xpose.msra.mxu0 0.0
        %1540 = vmatprep.subr.mxu0 0.0
        %1541 = vmatpush1.xpose.msra.mxu0 0.0
        %1542 = vmatprep.subr.mxu0 0.0
        %1543 = vmatpush1.xpose.msra.mxu0 0.0
        %1544 = vmatprep.subr.mxu0 0.0
        %1545 = vmatpush1.xpose.msra.mxu0 0.0
        %1546 = vmatprep.subr.mxu0 0.0
        %1547 = vmatpush1.xpose.msra.mxu0 0.0
        %1548 = vmatprep.mubr.f32.mxu0 0.0
        %1549 = vmatmul.mubr.f32.gmra.mrb[0].mxu0 %v955
        %v1550 = vpop.f32.mrb[0].mxu0
        %v1551 = vadd.f32 0.0, %v1550
        %v1552 = vpop.f32.mrb[0].mxu0
        %1553 = vdwg.mxu0
        %v1554 = vmul.f32 %v1551, %v578
        %v1555 = vadd.f32 %v1435, %v1554
        %v1557 = vsel %vm953, %v654, 0
        %v1560 = vsel %vm953, %v655, 0
        %v1563 = vsel %vm953, %v656, 0
        %v1566 = vsel %vm953, %v657, 0
        %v1569 = vsel %vm953, %v658, 0
        %v1572 = vsel %vm953, %v659, 0
        %v1575 = vsel %vm953, %v660, 0
        %v1578 = vsel %vm953, %v661, 0
        %v1581 = vsel %vm953, %v662, 0
        %v1584 = vsel %vm953, %v663, 0
        %v1587 = vsel %vm953, %v664, 0
        %v1590 = vsel %vm953, %v665, 0
        %v1593 = vsel %vm953, %v666, 0
        %v1596 = vsel %vm953, %v667, 0
        %v1599 = vsel %vm953, %v668, 0
        %v1602 = vsel %vm953, %v669, 0
        %1604 = vmatprep.subr.mxu0 0.0
        %1605 = vmatpush1.xpose.msra.mxu0 %v1557
        %1606 = vmatprep.subr.mxu0 0.0
        %1607 = vmatpush1.xpose.msra.mxu0 %v1560
        %1608 = vmatprep.subr.mxu0 0.0
        %1609 = vmatpush1.xpose.msra.mxu0 %v1563
        %1610 = vmatprep.subr.mxu0 0.0
        %1611 = vmatpush1.xpose.msra.mxu0 %v1566
        %1612 = vmatprep.subr.mxu0 0.0
        %1613 = vmatpush1.xpose.msra.mxu0 %v1569
        %1614 = vmatprep.subr.mxu0 0.0
        %1615 = vmatpush1.xpose.msra.mxu0 %v1572
        %1616 = vmatprep.subr.mxu0 0.0
        %1617 = vmatpush1.xpose.msra.mxu0 %v1575
        %1618 = vmatprep.subr.mxu0 0.0
        %1619 = vmatpush1.xpose.msra.mxu0 %v1578
        %1620 = vmatprep.subr.mxu0 0.0
        %1621 = vmatpush1.xpose.msra.mxu0 %v1581
        %1622 = vmatprep.subr.mxu0 0.0
        %1623 = vmatpush1.xpose.msra.mxu0 %v1584
        %1624 = vmatprep.subr.mxu0 0.0
        %1625 = vmatpush1.xpose.msra.mxu0 %v1587
        %1626 = vmatprep.subr.mxu0 0.0
        %1627 = vmatpush1.xpose.msra.mxu0 %v1590
        %1628 = vmatprep.subr.mxu0 0.0
        %1629 = vmatpush1.xpose.msra.mxu0 %v1593
        %1630 = vmatprep.subr.mxu0 0.0
        %1631 = vmatpush1.xpose.msra.mxu0 %v1596
        %1632 = vmatprep.subr.mxu0 0.0
        %1633 = vmatpush1.xpose.msra.mxu0 %v1599
        %1634 = vmatprep.subr.mxu0 0.0
        %1635 = vmatpush1.xpose.msra.mxu0 %v1602
        %1636 = vmatprep.subr.mxu0 0.0
        %1637 = vmatpush1.xpose.msra.mxu0 0.0
        %1638 = vmatprep.subr.mxu0 0.0
        %1639 = vmatpush1.xpose.msra.mxu0 0.0
        %1640 = vmatprep.subr.mxu0 0.0
        %1641 = vmatpush1.xpose.msra.mxu0 0.0
        %1642 = vmatprep.subr.mxu0 0.0
        %1643 = vmatpush1.xpose.msra.mxu0 0.0
        %1644 = vmatprep.subr.mxu0 0.0
        %1645 = vmatpush1.xpose.msra.mxu0 0.0
        %1646 = vmatprep.subr.mxu0 0.0
        %1647 = vmatpush1.xpose.msra.mxu0 0.0
        %1648 = vmatprep.subr.mxu0 0.0
        %1649 = vmatpush1.xpose.msra.mxu0 0.0
        %1650 = vmatprep.subr.mxu0 0.0
        %1651 = vmatpush1.xpose.msra.mxu0 0.0
        %1652 = vmatprep.subr.mxu0 0.0
        %1653 = vmatpush1.xpose.msra.mxu0 0.0
        %1654 = vmatprep.subr.mxu0 0.0
        %1655 = vmatpush1.xpose.msra.mxu0 0.0
        %1656 = vmatprep.subr.mxu0 0.0
        %1657 = vmatpush1.xpose.msra.mxu0 0.0
        %1658 = vmatprep.subr.mxu0 0.0
        %1659 = vmatpush1.xpose.msra.mxu0 0.0
        %1660 = vmatprep.subr.mxu0 0.0
        %1661 = vmatpush1.xpose.msra.mxu0 0.0
        %1662 = vmatprep.subr.mxu0 0.0
        %1663 = vmatpush1.xpose.msra.mxu0 0.0
        %1664 = vmatprep.subr.mxu0 0.0
        %1665 = vmatpush1.xpose.msra.mxu0 0.0
        %1666 = vmatprep.subr.mxu0 0.0
        %1667 = vmatpush1.xpose.msra.mxu0 0.0
        %1668 = vmatprep.mubr.f32.mxu0 0.0
        %1669 = vmatmul.mubr.f32.gmra.mrb[0].mxu0 %v955
        %v1670 = vpop.f32.mrb[0].mxu0
        %v1671 = vadd.f32 0.0, %v1670
        %v1672 = vpop.f32.mrb[0].mxu0
        %1673 = vdwg.mxu0
        %v1674 = vmul.f32 %v1671, %v673
        %v1675 = vadd.f32 %v1555, %v1674
        %v1677 = vsel %vm953, %v749, 0
        %v1680 = vsel %vm953, %v750, 0
        %v1683 = vsel %vm953, %v751, 0
        %v1686 = vsel %vm953, %v752, 0
        %v1689 = vsel %vm953, %v753, 0
        %v1692 = vsel %vm953, %v754, 0
        %v1695 = vsel %vm953, %v755, 0
        %v1698 = vsel %vm953, %v756, 0
        %v1701 = vsel %vm953, %v757, 0
        %v1704 = vsel %vm953, %v758, 0
        %v1707 = vsel %vm953, %v759, 0
        %v1710 = vsel %vm953, %v760, 0
        %v1713 = vsel %vm953, %v761, 0
        %v1716 = vsel %vm953, %v762, 0
        %v1719 = vsel %vm953, %v763, 0
        %v1722 = vsel %vm953, %v764, 0
        %1724 = vmatprep.subr.mxu0 0.0
        %1725 = vmatpush1.xpose.msra.mxu0 %v1677
        %1726 = vmatprep.subr.mxu0 0.0
        %1727 = vmatpush1.xpose.msra.mxu0 %v1680
        %1728 = vmatprep.subr.mxu0 0.0
        %1729 = vmatpush1.xpose.msra.mxu0 %v1683
        %1730 = vmatprep.subr.mxu0 0.0
        %1731 = vmatpush1.xpose.msra.mxu0 %v1686
        %1732 = vmatprep.subr.mxu0 0.0
        %1733 = vmatpush1.xpose.msra.mxu0 %v1689
        %1734 = vmatprep.subr.mxu0 0.0
        %1735 = vmatpush1.xpose.msra.mxu0 %v1692
        %1736 = vmatprep.subr.mxu0 0.0
        %1737 = vmatpush1.xpose.msra.mxu0 %v1695
        %1738 = vmatprep.subr.mxu0 0.0
        %1739 = vmatpush1.xpose.msra.mxu0 %v1698
        %1740 = vmatprep.subr.mxu0 0.0
        %1741 = vmatpush1.xpose.msra.mxu0 %v1701
        %1742 = vmatprep.subr.mxu0 0.0
        %1743 = vmatpush1.xpose.msra.mxu0 %v1704
        %1744 = vmatprep.subr.mxu0 0.0
        %1745 = vmatpush1.xpose.msra.mxu0 %v1707
        %1746 = vmatprep.subr.mxu0 0.0
        %1747 = vmatpush1.xpose.msra.mxu0 %v1710
        %1748 = vmatprep.subr.mxu0 0.0
        %1749 = vmatpush1.xpose.msra.mxu0 %v1713
        %1750 = vmatprep.subr.mxu0 0.0
        %1751 = vmatpush1.xpose.msra.mxu0 %v1716
        %1752 = vmatprep.subr.mxu0 0.0
        %1753 = vmatpush1.xpose.msra.mxu0 %v1719
        %1754 = vmatprep.subr.mxu0 0.0
        %1755 = vmatpush1.xpose.msra.mxu0 %v1722
        %1756 = vmatprep.subr.mxu0 0.0
        %1757 = vmatpush1.xpose.msra.mxu0 0.0
        %1758 = vmatprep.subr.mxu0 0.0
        %1759 = vmatpush1.xpose.msra.mxu0 0.0
        %1760 = vmatprep.subr.mxu0 0.0
        %1761 = vmatpush1.xpose.msra.mxu0 0.0
        %1762 = vmatprep.subr.mxu0 0.0
        %1763 = vmatpush1.xpose.msra.mxu0 0.0
        %1764 = vmatprep.subr.mxu0 0.0
        %1765 = vmatpush1.xpose.msra.mxu0 0.0
        %1766 = vmatprep.subr.mxu0 0.0
        %1767 = vmatpush1.xpose.msra.mxu0 0.0
        %1768 = vmatprep.subr.mxu0 0.0
        %1769 = vmatpush1.xpose.msra.mxu0 0.0
        %1770 = vmatprep.subr.mxu0 0.0
        %1771 = vmatpush1.xpose.msra.mxu0 0.0
        %1772 = vmatprep.subr.mxu0 0.0
        %1773 = vmatpush1.xpose.msra.mxu0 0.0
        %1774 = vmatprep.subr.mxu0 0.0
        %1775 = vmatpush1.xpose.msra.mxu0 0.0
        %1776 = vmatprep.subr.mxu0 0.0
        %1777 = vmatpush1.xpose.msra.mxu0 0.0
        %1778 = vmatprep.subr.mxu0 0.0
        %1779 = vmatpush1.xpose.msra.mxu0 0.0
        %1780 = vmatprep.subr.mxu0 0.0
        %1781 = vmatpush1.xpose.msra.mxu0 0.0
        %1782 = vmatprep.subr.mxu0 0.0
        %1783 = vmatpush1.xpose.msra.mxu0 0.0
        %1784 = vmatprep.subr.mxu0 0.0
        %1785 = vmatpush1.xpose.msra.mxu0 0.0
        %1786 = vmatprep.subr.mxu0 0.0
        %1787 = vmatpush1.xpose.msra.mxu0 0.0
        %1788 = vmatprep.mubr.f32.mxu0 0.0
        %1789 = vmatmul.mubr.f32.gmra.mrb[0].mxu0 %v955
        %v1790 = vpop.f32.mrb[0].mxu0
        %v1791 = vadd.f32 0.0, %v1790
        %v1792 = vpop.f32.mrb[0].mxu0
        %1793 = vdwg.mxu0
        %v1794 = vmul.f32 %v1791, %v768
        %v1795 = vadd.f32 %v1675, %v1794
        %v1797 = vsel %vm953, %v844, 0
        %v1800 = vsel %vm953, %v845, 0
        %v1803 = vsel %vm953, %v846, 0
        %v1806 = vsel %vm953, %v847, 0
        %v1809 = vsel %vm953, %v848, 0
        %v1812 = vsel %vm953, %v849, 0
        %v1815 = vsel %vm953, %v850, 0
        %v1818 = vsel %vm953, %v851, 0
        %v1821 = vsel %vm953, %v852, 0
        %v1824 = vsel %vm953, %v853, 0
        %v1827 = vsel %vm953, %v854, 0
        %v1830 = vsel %vm953, %v855, 0
        %v1833 = vsel %vm953, %v856, 0
        %v1836 = vsel %vm953, %v857, 0
        %v1839 = vsel %vm953, %v858, 0
        %v1842 = vsel %vm953, %v859, 0
        %1844 = vmatprep.subr.mxu0 0.0
        %1845 = vmatpush1.xpose.msra.mxu0 %v1797
        %1846 = vmatprep.subr.mxu0 0.0
        %1847 = vmatpush1.xpose.msra.mxu0 %v1800
        %1848 = vmatprep.subr.mxu0 0.0
        %1849 = vmatpush1.xpose.msra.mxu0 %v1803
        %1850 = vmatprep.subr.mxu0 0.0
        %1851 = vmatpush1.xpose.msra.mxu0 %v1806
        %1852 = vmatprep.subr.mxu0 0.0
        %1853 = vmatpush1.xpose.msra.mxu0 %v1809
        %1854 = vmatprep.subr.mxu0 0.0
        %1855 = vmatpush1.xpose.msra.mxu0 %v1812
        %1856 = vmatprep.subr.mxu0 0.0
        %1857 = vmatpush1.xpose.msra.mxu0 %v1815
        %1858 = vmatprep.subr.mxu0 0.0
        %1859 = vmatpush1.xpose.msra.mxu0 %v1818
        %1860 = vmatprep.subr.mxu0 0.0
        %1861 = vmatpush1.xpose.msra.mxu0 %v1821
        %1862 = vmatprep.subr.mxu0 0.0
        %1863 = vmatpush1.xpose.msra.mxu0 %v1824
        %1864 = vmatprep.subr.mxu0 0.0
        %1865 = vmatpush1.xpose.msra.mxu0 %v1827
        %1866 = vmatprep.subr.mxu0 0.0
        %1867 = vmatpush1.xpose.msra.mxu0 %v1830
        %1868 = vmatprep.subr.mxu0 0.0
        %1869 = vmatpush1.xpose.msra.mxu0 %v1833
        %1870 = vmatprep.subr.mxu0 0.0
        %1871 = vmatpush1.xpose.msra.mxu0 %v1836
        %1872 = vmatprep.subr.mxu0 0.0
        %1873 = vmatpush1.xpose.msra.mxu0 %v1839
        %1874 = vmatprep.subr.mxu0 0.0
        %1875 = vmatpush1.xpose.msra.mxu0 %v1842
        %1876 = vmatprep.subr.mxu0 0.0
        %1877 = vmatpush1.xpose.msra.mxu0 0.0
        %1878 = vmatprep.subr.mxu0 0.0
        %1879 = vmatpush1.xpose.msra.mxu0 0.0
        %1880 = vmatprep.subr.mxu0 0.0
        %1881 = vmatpush1.xpose.msra.mxu0 0.0
        %1882 = vmatprep.subr.mxu0 0.0
        %1883 = vmatpush1.xpose.msra.mxu0 0.0
        %1884 = vmatprep.subr.mxu0 0.0
        %1885 = vmatpush1.xpose.msra.mxu0 0.0
        %1886 = vmatprep.subr.mxu0 0.0
        %1887 = vmatpush1.xpose.msra.mxu0 0.0
        %1888 = vmatprep.subr.mxu0 0.0
        %1889 = vmatpush1.xpose.msra.mxu0 0.0
        %1890 = vmatprep.subr.mxu0 0.0
        %1891 = vmatpush1.xpose.msra.mxu0 0.0
        %1892 = vmatprep.subr.mxu0 0.0
        %1893 = vmatpush1.xpose.msra.mxu0 0.0
        %1894 = vmatprep.subr.mxu0 0.0
        %1895 = vmatpush1.xpose.msra.mxu0 0.0
        %1896 = vmatprep.subr.mxu0 0.0
        %1897 = vmatpush1.xpose.msra.mxu0 0.0
        %1898 = vmatprep.subr.mxu0 0.0
        %1899 = vmatpush1.xpose.msra.mxu0 0.0
        %1900 = vmatprep.subr.mxu0 0.0
        %1901 = vmatpush1.xpose.msra.mxu0 0.0
        %1902 = vmatprep.subr.mxu0 0.0
        %1903 = vmatpush1.xpose.msra.mxu0 0.0
        %1904 = vmatprep.subr.mxu0 0.0
        %1905 = vmatpush1.xpose.msra.mxu0 0.0
        %1906 = vmatprep.subr.mxu0 0.0
        %1907 = vmatpush1.xpose.msra.mxu0 0.0
        %1908 = vmatprep.mubr.f32.mxu0 0.0
        %1909 = vmatmul.mubr.f32.gmra.mrb[0].mxu0 %v955
        %v1910 = vpop.f32.mrb[0].mxu0
        %v1911 = vadd.f32 0.0, %v1910
        %v1912 = vpop.f32.mrb[0].mxu0
        %1913 = vdwg.mxu0
        %v1914 = vmul.f32 %v1911, %v863
        %v1915 = vadd.f32 %v1795, %v1914
        %vm1916 = vcmask 1041408
        %v1917 = vsel %vm1916, %v1915, -inf
        %1918 = vmax.xlane.f32.xlu0 %v1917
        %v1919 = vpop.xlane.xlu0 %1918
        %v1920 = vsub.f32 %v1915, %v1919
        %v1921 = vmul.f32 %v1920, 1.442695
        %v1922 = vpow.pop %v1921
        %v1923 = vsel %vm1916, %v1922, 0.0
        %1924 = vadd.xlane.f32.xlu0 %v1923
        %v1925 = vpop.xlane.xlu0 %1924
        %v1926 = vrcp.pop %v1925
        %v1927 = vmul.f32 %v1922, %v1926
        %v1928 = vmul.f32 %v1927, %v294
        %v1929 = vmul.f32 %v1927, %v219
        %1930 = vmatprep.subr.mxu0 0.0
        %1931 = vmatpush1.msra.mxu0 %v199
        %1932 = vmatprep.subr.mxu0 0.0
        %1933 = vmatpush1.msra.mxu0 %v200
        %1934 = vmatprep.subr.mxu0 0.0
        %1935 = vmatpush1.msra.mxu0 %v201
        %1936 = vmatprep.subr.mxu0 0.0
        %1937 = vmatpush1.msra.mxu0 %v202
        %1938 = vmatprep.subr.mxu0 0.0
        %1939 = vmatpush1.msra.mxu0 %v203
        %1940 = vmatprep.subr.mxu0 0.0
        %1941 = vmatpush1.msra.mxu0 %v204
        %1942 = vmatprep.subr.mxu0 0.0
        %1943 = vmatpush1.msra.mxu0 %v205
        %1944 = vmatprep.subr.mxu0 0.0
        %1945 = vmatpush1.msra.mxu0 %v206
        %1946 = vmatprep.subr.mxu0 0.0
        %1947 = vmatpush1.msra.mxu0 %v207
        %1948 = vmatprep.subr.mxu0 0.0
        %1949 = vmatpush1.msra.mxu0 %v208
        %1950 = vmatprep.subr.mxu0 0.0
        %1951 = vmatpush1.msra.mxu0 %v209
        %1952 = vmatprep.subr.mxu0 0.0
        %1953 = vmatpush1.msra.mxu0 %v210
        %1954 = vmatprep.subr.mxu0 0.0
        %1955 = vmatpush1.msra.mxu0 %v211
        %1956 = vmatprep.subr.mxu0 0.0
        %1957 = vmatpush1.msra.mxu0 %v212
        %1958 = vmatprep.subr.mxu0 0.0
        %1959 = vmatpush1.msra.mxu0 %v213
        %1960 = vmatprep.subr.mxu0 0.0
        %1961 = vmatpush1.msra.mxu0 %v214
        %1962 = vmatprep.subr.mxu0 0.0
        %1963 = vmatpush1.msra.mxu0 0.0
        %1964 = vmatprep.subr.mxu0 0.0
        %1965 = vmatpush1.msra.mxu0 0.0
        %1966 = vmatprep.subr.mxu0 0.0
        %1967 = vmatpush1.msra.mxu0 0.0
        %1968 = vmatprep.subr.mxu0 0.0
        %1969 = vmatpush1.msra.mxu0 0.0
        %1970 = vmatprep.subr.mxu0 0.0
        %1971 = vmatpush1.msra.mxu0 0.0
        %1972 = vmatprep.subr.mxu0 0.0
        %1973 = vmatpush1.msra.mxu0 0.0
        %1974 = vmatprep.subr.mxu0 0.0
        %1975 = vmatpush1.msra.mxu0 0.0
        %1976 = vmatprep.subr.mxu0 0.0
        %1977 = vmatpush1.msra.mxu0 0.0
        %1978 = vmatprep.subr.mxu0 0.0
        %1979 = vmatpush1.msra.mxu0 0.0
        %1980 = vmatprep.subr.mxu0 0.0
        %1981 = vmatpush1.msra.mxu0 0.0
        %1982 = vmatprep.subr.mxu0 0.0
        %1983 = vmatpush1.msra.mxu0 0.0
        %1984 = vmatprep.subr.mxu0 0.0
        %1985 = vmatpush1.msra.mxu0 0.0
        %1986 = vmatprep.subr.mxu0 0.0
        %1987 = vmatpush1.msra.mxu0 0.0
        %1988 = vmatprep.subr.mxu0 0.0
        %1989 = vmatpush1.msra.mxu0 0.0
        %1990 = vmatprep.subr.mxu0 0.0
        %1991 = vmatpush1.msra.mxu0 0.0
        %1992 = vmatprep.subr.mxu0 0.0
        %1993 = vmatpush1.msra.mxu0 0.0
        %1994 = vmatprep.mubr.f32.mxu0 0.0
        %1995 = vmatmul.mubr.f32.gmra.mrb[0].mxu0 %v1929
        %v1996 = vpop.f32.mrb[0].mxu0
        %v1997 = vadd.f32 0.0, %v1996
        %v1998 = vpop.f32.mrb[0].mxu0
        %1999 = vdwg.mxu0
        %2000 = vmatprep.subr.mxu0 0.0
        %2001 = vmatpush1.msra.mxu0 %v180
        %2002 = vmatprep.subr.mxu0 0.0
        %2003 = vmatpush1.msra.mxu0 %v181
        %2004 = vmatprep.subr.mxu0 0.0
        %2005 = vmatpush1.msra.mxu0 %v182
        %2006 = vmatprep.subr.mxu0 0.0
        %2007 = vmatpush1.msra.mxu0 %v183
        %2008 = vmatprep.subr.mxu0 0.0
        %2009 = vmatpush1.msra.mxu0 %v184
        %2010 = vmatprep.subr.mxu0 0.0
        %2011 = vmatpush1.msra.mxu0 %v185
        %2012 = vmatprep.subr.mxu0 0.0
        %2013 = vmatpush1.msra.mxu0 %v186
        %2014 = vmatprep.subr.mxu0 0.0
        %2015 = vmatpush1.msra.mxu0 %v187
        %2016 = vmatprep.subr.mxu0 0.0
        %2017 = vmatpush1.msra.mxu0 %v188
        %2018 = vmatprep.subr.mxu0 0.0
        %2019 = vmatpush1.msra.mxu0 %v189
        %2020 = vmatprep.subr.mxu0 0.0
        %2021 = vmatpush1.msra.mxu0 %v190
        %2022 = vmatprep.subr.mxu0 0.0
        %2023 = vmatpush1.msra.mxu0 %v191
        %2024 = vmatprep.subr.mxu0 0.0
        %2025 = vmatpush1.msra.mxu0 %v192
        %2026 = vmatprep.subr.mxu0 0.0
        %2027 = vmatpush1.msra.mxu0 %v193
        %2028 = vmatprep.subr.mxu0 0.0
        %2029 = vmatpush1.msra.mxu0 %v194
        %2030 = vmatprep.subr.mxu0 0.0
        %2031 = vmatpush1.msra.mxu0 %v195
        %2032 = vmatprep.subr.mxu0 0.0
        %2033 = vmatpush1.msra.mxu0 0.0
        %2034 = vmatprep.subr.mxu0 0.0
        %2035 = vmatpush1.msra.mxu0 0.0
        %2036 = vmatprep.subr.mxu0 0.0
        %2037 = vmatpush1.msra.mxu0 0.0
        %2038 = vmatprep.subr.mxu0 0.0
        %2039 = vmatpush1.msra.mxu0 0.0
        %2040 = vmatprep.subr.mxu0 0.0
        %2041 = vmatpush1.msra.mxu0 0.0
        %2042 = vmatprep.subr.mxu0 0.0
        %2043 = vmatpush1.msra.mxu0 0.0
        %2044 = vmatprep.subr.mxu0 0.0
        %2045 = vmatpush1.msra.mxu0 0.0
        %2046 = vmatprep.subr.mxu0 0.0
        %2047 = vmatpush1.msra.mxu0 0.0
        %2048 = vmatprep.subr.mxu0 0.0
        %2049 = vmatpush1.msra.mxu0 0.0
        %2050 = vmatprep.subr.mxu0 0.0
        %2051 = vmatpush1.msra.mxu0 0.0
        %2052 = vmatprep.subr.mxu0 0.0
        %2053 = vmatpush1.msra.mxu0 0.0
        %2054 = vmatprep.subr.mxu0 0.0
        %2055 = vmatpush1.msra.mxu0 0.0
        %2056 = vmatprep.subr.mxu0 0.0
        %2057 = vmatpush1.msra.mxu0 0.0
        %2058 = vmatprep.subr.mxu0 0.0
        %2059 = vmatpush1.msra.mxu0 0.0
        %2060 = vmatprep.subr.mxu0 0.0
        %2061 = vmatpush1.msra.mxu0 0.0
        %2062 = vmatprep.subr.mxu0 0.0
        %2063 = vmatpush1.msra.mxu0 0.0
        %2064 = vmatprep.mubr.f32.mxu0 0.0
        %2065 = vmatmul.mubr.f32.gmra.mrb[0].mxu0 %v1928
        %v2066 = vpop.f32.mrb[0].mxu0
        %v2067 = vadd.f32 %v1997, %v2066
        %v2068 = vpop.f32.mrb[0].mxu0
        %2069 = vdwg.mxu0
        %v2070 = vmul.f32 %v1927, %v388
        %2071 = vmatprep.subr.mxu0 0.0
        %2072 = vmatpush1.msra.mxu0 %v369
        %2073 = vmatprep.subr.mxu0 0.0
        %2074 = vmatpush1.msra.mxu0 %v370
        %2075 = vmatprep.subr.mxu0 0.0
        %2076 = vmatpush1.msra.mxu0 %v371
        %2077 = vmatprep.subr.mxu0 0.0
        %2078 = vmatpush1.msra.mxu0 %v372
        %2079 = vmatprep.subr.mxu0 0.0
        %2080 = vmatpush1.msra.mxu0 %v373
        %2081 = vmatprep.subr.mxu0 0.0
        %2082 = vmatpush1.msra.mxu0 %v374
        %2083 = vmatprep.subr.mxu0 0.0
        %2084 = vmatpush1.msra.mxu0 %v375
        %2085 = vmatprep.subr.mxu0 0.0
        %2086 = vmatpush1.msra.mxu0 %v376
        %2087 = vmatprep.subr.mxu0 0.0
        %2088 = vmatpush1.msra.mxu0 %v377
        %2089 = vmatprep.subr.mxu0 0.0
        %2090 = vmatpush1.msra.mxu0 %v378
        %2091 = vmatprep.subr.mxu0 0.0
        %2092 = vmatpush1.msra.mxu0 %v379
        %2093 = vmatprep.subr.mxu0 0.0
        %2094 = vmatpush1.msra.mxu0 %v380
        %2095 = vmatprep.subr.mxu0 0.0
        %2096 = vmatpush1.msra.mxu0 %v381
        %2097 = vmatprep.subr.mxu0 0.0
        %2098 = vmatpush1.msra.mxu0 %v382
        %2099 = vmatprep.subr.mxu0 0.0
        %2100 = vmatpush1.msra.mxu0 %v383
        %2101 = vmatprep.subr.mxu0 0.0
        %2102 = vmatpush1.msra.mxu0 %v384
        %2103 = vmatprep.subr.mxu0 0.0
        %2104 = vmatpush1.msra.mxu0 0.0
        %2105 = vmatprep.subr.mxu0 0.0
        %2106 = vmatpush1.msra.mxu0 0.0
        %2107 = vmatprep.subr.mxu0 0.0
        %2108 = vmatpush1.msra.mxu0 0.0
        %2109 = vmatprep.subr.mxu0 0.0
        %2110 = vmatpush1.msra.mxu0 0.0
        %2111 = vmatprep.subr.mxu0 0.0
        %2112 = vmatpush1.msra.mxu0 0.0
        %2113 = vmatprep.subr.mxu0 0.0
        %2114 = vmatpush1.msra.mxu0 0.0
        %2115 = vmatprep.subr.mxu0 0.0
        %2116 = vmatpush1.msra.mxu0 0.0
        %2117 = vmatprep.subr.mxu0 0.0
        %2118 = vmatpush1.msra.mxu0 0.0
        %2119 = vmatprep.subr.mxu0 0.0
        %2120 = vmatpush1.msra.mxu0 0.0
        %2121 = vmatprep.subr.mxu0 0.0
        %2122 = vmatpush1.msra.mxu0 0.0
        %2123 = vmatprep.subr.mxu0 0.0
        %2124 = vmatpush1.msra.mxu0 0.0
        %2125 = vmatprep.subr.mxu0 0.0
        %2126 = vmatpush1.msra.mxu0 0.0
        %2127 = vmatprep.subr.mxu0 0.0
        %2128 = vmatpush1.msra.mxu0 0.0
        %2129 = vmatprep.subr.mxu0 0.0
        %2130 = vmatpush1.msra.mxu0 0.0
        %2131 = vmatprep.subr.mxu0 0.0
        %2132 = vmatpush1.msra.mxu0 0.0
        %2133 = vmatprep.subr.mxu0 0.0
        %2134 = vmatpush1.msra.mxu0 0.0
        %2135 = vmatprep.mubr.f32.mxu0 0.0
        %2136 = vmatmul.mubr.f32.gmra.mrb[0].mxu0 %v2070
        %v2137 = vpop.f32.mrb[0].mxu0
        %v2138 = vadd.f32 0.0, %v2137
        %v2139 = vpop.f32.mrb[0].mxu0
        %2140 = vdwg.mxu0
        %v2141 = vadd.f32 %v2067, %v2138
        %v2142 = vmul.f32 %v1927, %v483
        %2143 = vmatprep.subr.mxu0 0.0
        %2144 = vmatpush1.msra.mxu0 %v464
        %2145 = vmatprep.subr.mxu0 0.0
        %2146 = vmatpush1.msra.mxu0 %v465
        %2147 = vmatprep.subr.mxu0 0.0
        %2148 = vmatpush1.msra.mxu0 %v466
        %2149 = vmatprep.subr.mxu0 0.0
        %2150 = vmatpush1.msra.mxu0 %v467
        %2151 = vmatprep.subr.mxu0 0.0
        %2152 = vmatpush1.msra.mxu0 %v468
        %2153 = vmatprep.subr.mxu0 0.0
        %2154 = vmatpush1.msra.mxu0 %v469
        %2155 = vmatprep.subr.mxu0 0.0
        %2156 = vmatpush1.msra.mxu0 %v470
        %2157 = vmatprep.subr.mxu0 0.0
        %2158 = vmatpush1.msra.mxu0 %v471
        %2159 = vmatprep.subr.mxu0 0.0
        %2160 = vmatpush1.msra.mxu0 %v472
        %2161 = vmatprep.subr.mxu0 0.0
        %2162 = vmatpush1.msra.mxu0 %v473
        %2163 = vmatprep.subr.mxu0 0.0
        %2164 = vmatpush1.msra.mxu0 %v474
        %2165 = vmatprep.subr.mxu0 0.0
        %2166 = vmatpush1.msra.mxu0 %v475
        %2167 = vmatprep.subr.mxu0 0.0
        %2168 = vmatpush1.msra.mxu0 %v476
        %2169 = vmatprep.subr.mxu0 0.0
        %2170 = vmatpush1.msra.mxu0 %v477
        %2171 = vmatprep.subr.mxu0 0.0
        %2172 = vmatpush1.msra.mxu0 %v478
        %2173 = vmatprep.subr.mxu0 0.0
        %2174 = vmatpush1.msra.mxu0 %v479
        %2175 = vmatprep.subr.mxu0 0.0
        %2176 = vmatpush1.msra.mxu0 0.0
        %2177 = vmatprep.subr.mxu0 0.0
        %2178 = vmatpush1.msra.mxu0 0.0
        %2179 = vmatprep.subr.mxu0 0.0
        %2180 = vmatpush1.msra.mxu0 0.0
        %2181 = vmatprep.subr.mxu0 0.0
        %2182 = vmatpush1.msra.mxu0 0.0
        %2183 = vmatprep.subr.mxu0 0.0
        %2184 = vmatpush1.msra.mxu0 0.0
        %2185 = vmatprep.subr.mxu0 0.0
        %2186 = vmatpush1.msra.mxu0 0.0
        %2187 = vmatprep.subr.mxu0 0.0
        %2188 = vmatpush1.msra.mxu0 0.0
        %2189 = vmatprep.subr.mxu0 0.0
        %2190 = vmatpush1.msra.mxu0 0.0
        %2191 = vmatprep.subr.mxu0 0.0
        %2192 = vmatpush1.msra.mxu0 0.0
        %2193 = vmatprep.subr.mxu0 0.0
        %2194 = vmatpush1.msra.mxu0 0.0
        %2195 = vmatprep.subr.mxu0 0.0
        %2196 = vmatpush1.msra.mxu0 0.0
        %2197 = vmatprep.subr.mxu0 0.0
        %2198 = vmatpush1.msra.mxu0 0.0
        %2199 = vmatprep.subr.mxu0 0.0
        %2200 = vmatpush1.msra.mxu0 0.0
        %2201 = vmatprep.subr.mxu0 0.0
        %2202 = vmatpush1.msra.mxu0 0.0
        %2203 = vmatprep.subr.mxu0 0.0
        %2204 = vmatpush1.msra.mxu0 0.0
        %2205 = vmatprep.subr.mxu0 0.0
        %2206 = vmatpush1.msra.mxu0 0.0
        %2207 = vmatprep.mubr.f32.mxu0 0.0
        %2208 = vmatmul.mubr.f32.gmra.mrb[0].mxu0 %v2142
        %v2209 = vpop.f32.mrb[0].mxu0
        %v2210 = vadd.f32 0.0, %v2209
        %v2211 = vpop.f32.mrb[0].mxu0
        %2212 = vdwg.mxu0
        %v2213 = vadd.f32 %v2141, %v2210
        %v2214 = vmul.f32 %v1927, %v578
        %2215 = vmatprep.subr.mxu0 0.0
        %2216 = vmatpush1.msra.mxu0 %v559
        %2217 = vmatprep.subr.mxu0 0.0
        %2218 = vmatpush1.msra.mxu0 %v560
        %2219 = vmatprep.subr.mxu0 0.0
        %2220 = vmatpush1.msra.mxu0 %v561
        %2221 = vmatprep.subr.mxu0 0.0
        %2222 = vmatpush1.msra.mxu0 %v562
        %2223 = vmatprep.subr.mxu0 0.0
        %2224 = vmatpush1.msra.mxu0 %v563
        %2225 = vmatprep.subr.mxu0 0.0
        %2226 = vmatpush1.msra.mxu0 %v564
        %2227 = vmatprep.subr.mxu0 0.0
        %2228 = vmatpush1.msra.mxu0 %v565
        %2229 = vmatprep.subr.mxu0 0.0
        %2230 = vmatpush1.msra.mxu0 %v566
        %2231 = vmatprep.subr.mxu0 0.0
        %2232 = vmatpush1.msra.mxu0 %v567
        %2233 = vmatprep.subr.mxu0 0.0
        %2234 = vmatpush1.msra.mxu0 %v568
        %2235 = vmatprep.subr.mxu0 0.0
        %2236 = vmatpush1.msra.mxu0 %v569
        %2237 = vmatprep.subr.mxu0 0.0
        %2238 = vmatpush1.msra.mxu0 %v570
        %2239 = vmatprep.subr.mxu0 0.0
        %2240 = vmatpush1.msra.mxu0 %v571
        %2241 = vmatprep.subr.mxu0 0.0
        %2242 = vmatpush1.msra.mxu0 %v572
        %2243 = vmatprep.subr.mxu0 0.0
        %2244 = vmatpush1.msra.mxu0 %v573
        %2245 = vmatprep.subr.mxu0 0.0
        %2246 = vmatpush1.msra.mxu0 %v574
        %2247 = vmatprep.subr.mxu0 0.0
        %2248 = vmatpush1.msra.mxu0 0.0
        %2249 = vmatprep.subr.mxu0 0.0
        %2250 = vmatpush1.msra.mxu0 0.0
        %2251 = vmatprep.subr.mxu0 0.0
        %2252 = vmatpush1.msra.mxu0 0.0
        %2253 = vmatprep.subr.mxu0 0.0
        %2254 = vmatpush1.msra.mxu0 0.0
        %2255 = vmatprep.subr.mxu0 0.0
        %2256 = vmatpush1.msra.mxu0 0.0
        %2257 = vmatprep.subr.mxu0 0.0
        %2258 = vmatpush1.msra.mxu0 0.0
        %2259 = vmatprep.subr.mxu0 0.0
        %2260 = vmatpush1.msra.mxu0 0.0
        %2261 = vmatprep.subr.mxu0 0.0
        %2262 = vmatpush1.msra.mxu0 0.0
        %2263 = vmatprep.subr.mxu0 0.0
        %2264 = vmatpush1.msra.mxu0 0.0
        %2265 = vmatprep.subr.mxu0 0.0
        %2266 = vmatpush1.msra.mxu0 0.0
        %2267 = vmatprep.subr.mxu0 0.0
        %2268 = vmatpush1.msra.mxu0 0.0
        %2269 = vmatprep.subr.mxu0 0.0
        %2270 = vmatpush1.msra.mxu0 0.0
        %2271 = vmatprep.subr.mxu0 0.0
        %2272 = vmatpush1.msra.mxu0 0.0
        %2273 = vmatprep.subr.mxu0 0.0
        %2274 = vmatpush1.msra.mxu0 0.0
        %2275 = vmatprep.subr.mxu0 0.0
        %2276 = vmatpush1.msra.mxu0 0.0
        %2277 = vmatprep.subr.mxu0 0.0
        %2278 = vmatpush1.msra.mxu0 0.0
        %2279 = vmatprep.mubr.f32.mxu0 0.0
        %2280 = vmatmul.mubr.f32.gmra.mrb[0].mxu0 %v2214
        %v2281 = vpop.f32.mrb[0].mxu0
        %v2282 = vadd.f32 0.0, %v2281
        %v2283 = vpop.f32.mrb[0].mxu0
        %2284 = vdwg.mxu0
        %v2285 = vadd.f32 %v2213, %v2282
        %v2286 = vmul.f32 %v1927, %v673
        %2287 = vmatprep.subr.mxu0 0.0
        %2288 = vmatpush1.msra.mxu0 %v654
        %2289 = vmatprep.subr.mxu0 0.0
        %2290 = vmatpush1.msra.mxu0 %v655
        %2291 = vmatprep.subr.mxu0 0.0
        %2292 = vmatpush1.msra.mxu0 %v656
        %2293 = vmatprep.subr.mxu0 0.0
        %2294 = vmatpush1.msra.mxu0 %v657
        %2295 = vmatprep.subr.mxu0 0.0
        %2296 = vmatpush1.msra.mxu0 %v658
        %2297 = vmatprep.subr.mxu0 0.0
        %2298 = vmatpush1.msra.mxu0 %v659
        %2299 = vmatprep.subr.mxu0 0.0
        %2300 = vmatpush1.msra.mxu0 %v660
        %2301 = vmatprep.subr.mxu0 0.0
        %2302 = vmatpush1.msra.mxu0 %v661
        %2303 = vmatprep.subr.mxu0 0.0
        %2304 = vmatpush1.msra.mxu0 %v662
        %2305 = vmatprep.subr.mxu0 0.0
        %2306 = vmatpush1.msra.mxu0 %v663
        %2307 = vmatprep.subr.mxu0 0.0
        %2308 = vmatpush1.msra.mxu0 %v664
        %2309 = vmatprep.subr.mxu0 0.0
        %2310 = vmatpush1.msra.mxu0 %v665
        %2311 = vmatprep.subr.mxu0 0.0
        %2312 = vmatpush1.msra.mxu0 %v666
        %2313 = vmatprep.subr.mxu0 0.0
        %2314 = vmatpush1.msra.mxu0 %v667
        %2315 = vmatprep.subr.mxu0 0.0
        %2316 = vmatpush1.msra.mxu0 %v668
        %2317 = vmatprep.subr.mxu0 0.0
        %2318 = vmatpush1.msra.mxu0 %v669
        %2319 = vmatprep.subr.mxu0 0.0
        %2320 = vmatpush1.msra.mxu0 0.0
        %2321 = vmatprep.subr.mxu0 0.0
        %2322 = vmatpush1.msra.mxu0 0.0
        %2323 = vmatprep.subr.mxu0 0.0
        %2324 = vmatpush1.msra.mxu0 0.0
        %2325 = vmatprep.subr.mxu0 0.0
        %2326 = vmatpush1.msra.mxu0 0.0
        %2327 = vmatprep.subr.mxu0 0.0
        %2328 = vmatpush1.msra.mxu0 0.0
        %2329 = vmatprep.subr.mxu0 0.0
        %2330 = vmatpush1.msra.mxu0 0.0
        %2331 = vmatprep.subr.mxu0 0.0
        %2332 = vmatpush1.msra.mxu0 0.0
        %2333 = vmatprep.subr.mxu0 0.0
        %2334 = vmatpush1.msra.mxu0 0.0
        %2335 = vmatprep.subr.mxu0 0.0
        %2336 = vmatpush1.msra.mxu0 0.0
        %2337 = vmatprep.subr.mxu0 0.0
        %2338 = vmatpush1.msra.mxu0 0.0
        %2339 = vmatprep.subr.mxu0 0.0
        %2340 = vmatpush1.msra.mxu0 0.0
        %2341 = vmatprep.subr.mxu0 0.0
        %2342 = vmatpush1.msra.mxu0 0.0
        %2343 = vmatprep.subr.mxu0 0.0
        %2344 = vmatpush1.msra.mxu0 0.0
        %2345 = vmatprep.subr.mxu0 0.0
        %2346 = vmatpush1.msra.mxu0 0.0
        %2347 = vmatprep.subr.mxu0 0.0
        %2348 = vmatpush1.msra.mxu0 0.0
        %2349 = vmatprep.subr.mxu0 0.0
        %2350 = vmatpush1.msra.mxu0 0.0
        %2351 = vmatprep.mubr.f32.mxu0 0.0
        %2352 = vmatmul.mubr.f32.gmra.mrb[0].mxu0 %v2286
        %v2353 = vpop.f32.mrb[0].mxu0
        %v2354 = vadd.f32 0.0, %v2353
        %v2355 = vpop.f32.mrb[0].mxu0
        %2356 = vdwg.mxu0
        %v2357 = vadd.f32 %v2285, %v2354
        %v2358 = vmul.f32 %v1927, %v768
        %2359 = vmatprep.subr.mxu0 0.0
        %2360 = vmatpush1.msra.mxu0 %v749
        %2361 = vmatprep.subr.mxu0 0.0
        %2362 = vmatpush1.msra.mxu0 %v750
        %2363 = vmatprep.subr.mxu0 0.0
        %2364 = vmatpush1.msra.mxu0 %v751
        %2365 = vmatprep.subr.mxu0 0.0
        %2366 = vmatpush1.msra.mxu0 %v752
        %2367 = vmatprep.subr.mxu0 0.0
        %2368 = vmatpush1.msra.mxu0 %v753
        %2369 = vmatprep.subr.mxu0 0.0
        %2370 = vmatpush1.msra.mxu0 %v754
        %2371 = vmatprep.subr.mxu0 0.0
        %2372 = vmatpush1.msra.mxu0 %v755
        %2373 = vmatprep.subr.mxu0 0.0
        %2374 = vmatpush1.msra.mxu0 %v756
        %2375 = vmatprep.subr.mxu0 0.0
        %2376 = vmatpush1.msra.mxu0 %v757
        %2377 = vmatprep.subr.mxu0 0.0
        %2378 = vmatpush1.msra.mxu0 %v758
        %2379 = vmatprep.subr.mxu0 0.0
        %2380 = vmatpush1.msra.mxu0 %v759
        %2381 = vmatprep.subr.mxu0 0.0
        %2382 = vmatpush1.msra.mxu0 %v760
        %2383 = vmatprep.subr.mxu0 0.0
        %2384 = vmatpush1.msra.mxu0 %v761
        %2385 = vmatprep.subr.mxu0 0.0
        %2386 = vmatpush1.msra.mxu0 %v762
        %2387 = vmatprep.subr.mxu0 0.0
        %2388 = vmatpush1.msra.mxu0 %v763
        %2389 = vmatprep.subr.mxu0 0.0
        %2390 = vmatpush1.msra.mxu0 %v764
        %2391 = vmatprep.subr.mxu0 0.0
        %2392 = vmatpush1.msra.mxu0 0.0
        %2393 = vmatprep.subr.mxu0 0.0
        %2394 = vmatpush1.msra.mxu0 0.0
        %2395 = vmatprep.subr.mxu0 0.0
        %2396 = vmatpush1.msra.mxu0 0.0
        %2397 = vmatprep.subr.mxu0 0.0
        %2398 = vmatpush1.msra.mxu0 0.0
        %2399 = vmatprep.subr.mxu0 0.0
        %2400 = vmatpush1.msra.mxu0 0.0
        %2401 = vmatprep.subr.mxu0 0.0
        %2402 = vmatpush1.msra.mxu0 0.0
        %2403 = vmatprep.subr.mxu0 0.0
        %2404 = vmatpush1.msra.mxu0 0.0
        %2405 = vmatprep.subr.mxu0 0.0
        %2406 = vmatpush1.msra.mxu0 0.0
        %2407 = vmatprep.subr.mxu0 0.0
        %2408 = vmatpush1.msra.mxu0 0.0
        %2409 = vmatprep.subr.mxu0 0.0
        %2410 = vmatpush1.msra.mxu0 0.0
        %2411 = vmatprep.subr.mxu0 0.0
        %2412 = vmatpush1.msra.mxu0 0.0
        %2413 = vmatprep.subr.mxu0 0.0
        %2414 = vmatpush1.msra.mxu0 0.0
        %2415 = vmatprep.subr.mxu0 0.0
        %2416 = vmatpush1.msra.mxu0 0.0
        %2417 = vmatprep.subr.mxu0 0.0
        %2418 = vmatpush1.msra.mxu0 0.0
        %2419 = vmatprep.subr.mxu0 0.0
        %2420 = vmatpush1.msra.mxu0 0.0
        %2421 = vmatprep.subr.mxu0 0.0
        %2422 = vmatpush1.msra.mxu0 0.0
        %2423 = vmatprep.mubr.f32.mxu0 0.0
        %2424 = vmatmul.mubr.f32.gmra.mrb[0].mxu0 %v2358
        %v2425 = vpop.f32.mrb[0].mxu0
        %v2426 = vadd.f32 0.0, %v2425
        %v2427 = vpop.f32.mrb[0].mxu0
        %2428 = vdwg.mxu0
        %v2429 = vadd.f32 %v2357, %v2426
        %v2430 = vmul.f32 %v1927, %v863
        %2431 = vmatprep.subr.mxu0 0.0
        %2432 = vmatpush1.msra.mxu0 %v844
        %2433 = vmatprep.subr.mxu0 0.0
        %2434 = vmatpush1.msra.mxu0 %v845
        %2435 = vmatprep.subr.mxu0 0.0
        %2436 = vmatpush1.msra.mxu0 %v846
        %2437 = vmatprep.subr.mxu0 0.0
        %2438 = vmatpush1.msra.mxu0 %v847
        %2439 = vmatprep.subr.mxu0 0.0
        %2440 = vmatpush1.msra.mxu0 %v848
        %2441 = vmatprep.subr.mxu0 0.0
        %2442 = vmatpush1.msra.mxu0 %v849
        %2443 = vmatprep.subr.mxu0 0.0
        %2444 = vmatpush1.msra.mxu0 %v850
        %2445 = vmatprep.subr.mxu0 0.0
        %2446 = vmatpush1.msra.mxu0 %v851
        %2447 = vmatprep.subr.mxu0 0.0
        %2448 = vmatpush1.msra.mxu0 %v852
        %2449 = vmatprep.subr.mxu0 0.0
        %2450 = vmatpush1.msra.mxu0 %v853
        %2451 = vmatprep.subr.mxu0 0.0
        %2452 = vmatpush1.msra.mxu0 %v854
        %2453 = vmatprep.subr.mxu0 0.0
        %2454 = vmatpush1.msra.mxu0 %v855
        %2455 = vmatprep.subr.mxu0 0.0
        %2456 = vmatpush1.msra.mxu0 %v856
        %2457 = vmatprep.subr.mxu0 0.0
        %2458 = vmatpush1.msra.mxu0 %v857
        %2459 = vmatprep.subr.mxu0 0.0
        %2460 = vmatpush1.msra.mxu0 %v858
        %2461 = vmatprep.subr.mxu0 0.0
        %2462 = vmatpush1.msra.mxu0 %v859
        %2463 = vmatprep.subr.mxu0 0.0
        %2464 = vmatpush1.msra.mxu0 0.0
        %2465 = vmatprep.subr.mxu0 0.0
        %2466 = vmatpush1.msra.mxu0 0.0
        %2467 = vmatprep.subr.mxu0 0.0
        %2468 = vmatpush1.msra.mxu0 0.0
        %2469 = vmatprep.subr.mxu0 0.0
        %2470 = vmatpush1.msra.mxu0 0.0
        %2471 = vmatprep.subr.mxu0 0.0
        %2472 = vmatpush1.msra.mxu0 0.0
        %2473 = vmatprep.subr.mxu0 0.0
        %2474 = vmatpush1.msra.mxu0 0.0
        %2475 = vmatprep.subr.mxu0 0.0
        %2476 = vmatpush1.msra.mxu0 0.0
        %2477 = vmatprep.subr.mxu0 0.0
        %2478 = vmatpush1.msra.mxu0 0.0
        %2479 = vmatprep.subr.mxu0 0.0
        %2480 = vmatpush1.msra.mxu0 0.0
        %2481 = vmatprep.subr.mxu0 0.0
        %2482 = vmatpush1.msra.mxu0 0.0
        %2483 = vmatprep.subr.mxu0 0.0
        %2484 = vmatpush1.msra.mxu0 0.0
        %2485 = vmatprep.subr.mxu0 0.0
        %2486 = vmatpush1.msra.mxu0 0.0
        %2487 = vmatprep.subr.mxu0 0.0
        %2488 = vmatpush1.msra.mxu0 0.0
        %2489 = vmatprep.subr.mxu0 0.0
        %2490 = vmatpush1.msra.mxu0 0.0
        %2491 = vmatprep.subr.mxu0 0.0
        %2492 = vmatpush1.msra.mxu0 0.0
        %2493 = vmatprep.subr.mxu0 0.0
        %2494 = vmatpush1.msra.mxu0 0.0
        %2495 = vmatprep.mubr.f32.mxu0 0.0
        %2496 = vmatmul.mubr.f32.gmra.mrb[0].mxu0 %v2430
        %v2497 = vpop.f32.mrb[0].mxu0
        %v2498 = vadd.f32 0.0, %v2497
        %v2499 = vpop.f32.mrb[0].mxu0
        %2500 = vdwg.mxu0
        %v2501 = vadd.f32 %v2429, %v2498
        %v2502 = vmul.f32 %v2501, %v2501
        %v2503 = vsel %vm938, %v2502, 0.0
        %2504 = vadd.xlane.f32.xlu0 %v2503
        %v2505 = vpop.xlane.xlu0 %2504
        %v2506 = vrsqrt.pop %v2505
        %v2507 = vmul.f32 %v2505, %v2506
        %vm2508 = vcmp.eq.f32.partialorder %v2505, inf
        %v2509 = vsel %vm2508, %v2505, %v2507
        %vm2510 = vcmp.eq.f32.partialorder %v2505, 0.0
        %v2511 = vand.u32 %v2505, 2147483648
        %v2512 = vsel %vm2510, %v2511, %v2509
        %v2513 = vadd.f32 %v2505, 1.0
        %v2514 = vrcp.pop %v2513
        %v2515 = vmul.f32 %v2512, %v2514
        %v2516 = vmul.f32 %v2501, %v2515
        %v2518 = vsel %vm953, %v2516, 0
        %2520 = vmatprep.subr.mxu0 0.0
        %2521 = vmatpush1.xpose.msra.mxu0 %v958
        %2522 = vmatprep.subr.mxu0 0.0
        %2523 = vmatpush1.xpose.msra.mxu0 %v961
        %2524 = vmatprep.subr.mxu0 0.0
        %2525 = vmatpush1.xpose.msra.mxu0 %v964
        %2526 = vmatprep.subr.mxu0 0.0
        %2527 = vmatpush1.xpose.msra.mxu0 %v967
        %2528 = vmatprep.subr.mxu0 0.0
        %2529 = vmatpush1.xpose.msra.mxu0 %v970
        %2530 = vmatprep.subr.mxu0 0.0
        %2531 = vmatpush1.xpose.msra.mxu0 %v973
        %2532 = vmatprep.subr.mxu0 0.0
        %2533 = vmatpush1.xpose.msra.mxu0 %v976
        %2534 = vmatprep.subr.mxu0 0.0
        %2535 = vmatpush1.xpose.msra.mxu0 %v979
        %2536 = vmatprep.subr.mxu0 0.0
        %2537 = vmatpush1.xpose.msra.mxu0 %v982
        %2538 = vmatprep.subr.mxu0 0.0
        %2539 = vmatpush1.xpose.msra.mxu0 %v985
        %2540 = vmatprep.subr.mxu0 0.0
        %2541 = vmatpush1.xpose.msra.mxu0 %v988
        %2542 = vmatprep.subr.mxu0 0.0
        %2543 = vmatpush1.xpose.msra.mxu0 %v991
        %2544 = vmatprep.subr.mxu0 0.0
        %2545 = vmatpush1.xpose.msra.mxu0 %v994
        %2546 = vmatprep.subr.mxu0 0.0
        %2547 = vmatpush1.xpose.msra.mxu0 %v997
        %2548 = vmatprep.subr.mxu0 0.0
        %2549 = vmatpush1.xpose.msra.mxu0 %v1000
        %2550 = vmatprep.subr.mxu0 0.0
        %2551 = vmatpush1.xpose.msra.mxu0 %v1003
        %2552 = vmatprep.subr.mxu0 0.0
        %2553 = vmatpush1.xpose.msra.mxu0 0.0
        %2554 = vmatprep.subr.mxu0 0.0
        %2555 = vmatpush1.xpose.msra.mxu0 0.0
        %2556 = vmatprep.subr.mxu0 0.0
        %2557 = vmatpush1.xpose.msra.mxu0 0.0
        %2558 = vmatprep.subr.mxu0 0.0
        %2559 = vmatpush1.xpose.msra.mxu0 0.0
        %2560 = vmatprep.subr.mxu0 0.0
        %2561 = vmatpush1.xpose.msra.mxu0 0.0
        %2562 = vmatprep.subr.mxu0 0.0
        %2563 = vmatpush1.xpose.msra.mxu0 0.0
        %2564 = vmatprep.subr.mxu0 0.0
        %2565 = vmatpush1.xpose.msra.mxu0 0.0
        %2566 = vmatprep.subr.mxu0 0.0
        %2567 = vmatpush1.xpose.msra.mxu0 0.0
        %2568 = vmatprep.subr.mxu0 0.0
        %2569 = vmatpush1.xpose.msra.mxu0 0.0
        %2570 = vmatprep.subr.mxu0 0.0
        %2571 = vmatpush1.xpose.msra.mxu0 0.0
        %2572 = vmatprep.subr.mxu0 0.0
        %2573 = vmatpush1.xpose.msra.mxu0 0.0
        %2574 = vmatprep.subr.mxu0 0.0
        %2575 = vmatpush1.xpose.msra.mxu0 0.0
        %2576 = vmatprep.subr.mxu0 0.0
        %2577 = vmatpush1.xpose.msra.mxu0 0.0
        %2578 = vmatprep.subr.mxu0 0.0
        %2579 = vmatpush1.xpose.msra.mxu0 0.0
        %2580 = vmatprep.subr.mxu0 0.0
        %2581 = vmatpush1.xpose.msra.mxu0 0.0
        %2582 = vmatprep.subr.mxu0 0.0
        %2583 = vmatpush1.xpose.msra.mxu0 0.0
        %2584 = vmatprep.mubr.f32.mxu0 0.0
        %2585 = vmatmul.mubr.f32.gmra.mrb[0].mxu0 %v2518
        %v2586 = vpop.f32.mrb[0].mxu0
        %v2587 = vadd.f32 0.0, %v2586
        %v2588 = vpop.f32.mrb[0].mxu0
        %2589 = vdwg.mxu0
        %v2590 = vmul.f32 %v2587, %v294
        %2591 = vmatprep.subr.mxu0 0.0
        %2592 = vmatpush1.xpose.msra.mxu0 %v1077
        %2593 = vmatprep.subr.mxu0 0.0
        %2594 = vmatpush1.xpose.msra.mxu0 %v1080
        %2595 = vmatprep.subr.mxu0 0.0
        %2596 = vmatpush1.xpose.msra.mxu0 %v1083
        %2597 = vmatprep.subr.mxu0 0.0
        %2598 = vmatpush1.xpose.msra.mxu0 %v1086
        %2599 = vmatprep.subr.mxu0 0.0
        %2600 = vmatpush1.xpose.msra.mxu0 %v1089
        %2601 = vmatprep.subr.mxu0 0.0
        %2602 = vmatpush1.xpose.msra.mxu0 %v1092
        %2603 = vmatprep.subr.mxu0 0.0
        %2604 = vmatpush1.xpose.msra.mxu0 %v1095
        %2605 = vmatprep.subr.mxu0 0.0
        %2606 = vmatpush1.xpose.msra.mxu0 %v1098
        %2607 = vmatprep.subr.mxu0 0.0
        %2608 = vmatpush1.xpose.msra.mxu0 %v1101
        %2609 = vmatprep.subr.mxu0 0.0
        %2610 = vmatpush1.xpose.msra.mxu0 %v1104
        %2611 = vmatprep.subr.mxu0 0.0
        %2612 = vmatpush1.xpose.msra.mxu0 %v1107
        %2613 = vmatprep.subr.mxu0 0.0
        %2614 = vmatpush1.xpose.msra.mxu0 %v1110
        %2615 = vmatprep.subr.mxu0 0.0
        %2616 = vmatpush1.xpose.msra.mxu0 %v1113
        %2617 = vmatprep.subr.mxu0 0.0
        %2618 = vmatpush1.xpose.msra.mxu0 %v1116
        %2619 = vmatprep.subr.mxu0 0.0
        %2620 = vmatpush1.xpose.msra.mxu0 %v1119
        %2621 = vmatprep.subr.mxu0 0.0
        %2622 = vmatpush1.xpose.msra.mxu0 %v1122
        %2623 = vmatprep.subr.mxu0 0.0
        %2624 = vmatpush1.xpose.msra.mxu0 0.0
        %2625 = vmatprep.subr.mxu0 0.0
        %2626 = vmatpush1.xpose.msra.mxu0 0.0
        %2627 = vmatprep.subr.mxu0 0.0
        %2628 = vmatpush1.xpose.msra.mxu0 0.0
        %2629 = vmatprep.subr.mxu0 0.0
        %2630 = vmatpush1.xpose.msra.mxu0 0.0
        %2631 = vmatprep.subr.mxu0 0.0
        %2632 = vmatpush1.xpose.msra.mxu0 0.0
        %2633 = vmatprep.subr.mxu0 0.0
        %2634 = vmatpush1.xpose.msra.mxu0 0.0
        %2635 = vmatprep.subr.mxu0 0.0
        %2636 = vmatpush1.xpose.msra.mxu0 0.0
        %2637 = vmatprep.subr.mxu0 0.0
        %2638 = vmatpush1.xpose.msra.mxu0 0.0
        %2639 = vmatprep.subr.mxu0 0.0
        %2640 = vmatpush1.xpose.msra.mxu0 0.0
        %2641 = vmatprep.subr.mxu0 0.0
        %2642 = vmatpush1.xpose.msra.mxu0 0.0
        %2643 = vmatprep.subr.mxu0 0.0
        %2644 = vmatpush1.xpose.msra.mxu0 0.0
        %2645 = vmatprep.subr.mxu0 0.0
        %2646 = vmatpush1.xpose.msra.mxu0 0.0
        %2647 = vmatprep.subr.mxu0 0.0
        %2648 = vmatpush1.xpose.msra.mxu0 0.0
        %2649 = vmatprep.subr.mxu0 0.0
        %2650 = vmatpush1.xpose.msra.mxu0 0.0
        %2651 = vmatprep.subr.mxu0 0.0
        %2652 = vmatpush1.xpose.msra.mxu0 0.0
        %2653 = vmatprep.subr.mxu0 0.0
        %2654 = vmatpush1.xpose.msra.mxu0 0.0
        %2655 = vmatprep.mubr.f32.mxu0 0.0
        %2656 = vmatmul.mubr.f32.gmra.mrb[0].mxu0 %v2518
        %v2657 = vpop.f32.mrb[0].mxu0
        %v2658 = vadd.f32 0.0, %v2657
        %v2659 = vpop.f32.mrb[0].mxu0
        %2660 = vdwg.mxu0
        %v2661 = vmul.f32 %v2658, %v219
        %v2662 = vadd.f32 %v2590, %v2661
        %2663 = vmatprep.subr.mxu0 0.0
        %2664 = vmatpush1.xpose.msra.mxu0 %v1197
        %2665 = vmatprep.subr.mxu0 0.0
        %2666 = vmatpush1.xpose.msra.mxu0 %v1200
        %2667 = vmatprep.subr.mxu0 0.0
        %2668 = vmatpush1.xpose.msra.mxu0 %v1203
        %2669 = vmatprep.subr.mxu0 0.0
        %2670 = vmatpush1.xpose.msra.mxu0 %v1206
        %2671 = vmatprep.subr.mxu0 0.0
        %2672 = vmatpush1.xpose.msra.mxu0 %v1209
        %2673 = vmatprep.subr.mxu0 0.0
        %2674 = vmatpush1.xpose.msra.mxu0 %v1212
        %2675 = vmatprep.subr.mxu0 0.0
        %2676 = vmatpush1.xpose.msra.mxu0 %v1215
        %2677 = vmatprep.subr.mxu0 0.0
        %2678 = vmatpush1.xpose.msra.mxu0 %v1218
        %2679 = vmatprep.subr.mxu0 0.0
        %2680 = vmatpush1.xpose.msra.mxu0 %v1221
        %2681 = vmatprep.subr.mxu0 0.0
        %2682 = vmatpush1.xpose.msra.mxu0 %v1224
        %2683 = vmatprep.subr.mxu0 0.0
        %2684 = vmatpush1.xpose.msra.mxu0 %v1227
        %2685 = vmatprep.subr.mxu0 0.0
        %2686 = vmatpush1.xpose.msra.mxu0 %v1230
        %2687 = vmatprep.subr.mxu0 0.0
        %2688 = vmatpush1.xpose.msra.mxu0 %v1233
        %2689 = vmatprep.subr.mxu0 0.0
        %2690 = vmatpush1.xpose.msra.mxu0 %v1236
        %2691 = vmatprep.subr.mxu0 0.0
        %2692 = vmatpush1.xpose.msra.mxu0 %v1239
        %2693 = vmatprep.subr.mxu0 0.0
        %2694 = vmatpush1.xpose.msra.mxu0 %v1242
        %2695 = vmatprep.subr.mxu0 0.0
        %2696 = vmatpush1.xpose.msra.mxu0 0.0
        %2697 = vmatprep.subr.mxu0 0.0
        %2698 = vmatpush1.xpose.msra.mxu0 0.0
        %2699 = vmatprep.subr.mxu0 0.0
        %2700 = vmatpush1.xpose.msra.mxu0 0.0
        %2701 = vmatprep.subr.mxu0 0.0
        %2702 = vmatpush1.xpose.msra.mxu0 0.0
        %2703 = vmatprep.subr.mxu0 0.0
        %2704 = vmatpush1.xpose.msra.mxu0 0.0
        %2705 = vmatprep.subr.mxu0 0.0
        %2706 = vmatpush1.xpose.msra.mxu0 0.0
        %2707 = vmatprep.subr.mxu0 0.0
        %2708 = vmatpush1.xpose.msra.mxu0 0.0
        %2709 = vmatprep.subr.mxu0 0.0
        %2710 = vmatpush1.xpose.msra.mxu0 0.0
        %2711 = vmatprep.subr.mxu0 0.0
        %2712 = vmatpush1.xpose.msra.mxu0 0.0
        %2713 = vmatprep.subr.mxu0 0.0
        %2714 = vmatpush1.xpose.msra.mxu0 0.0
        %2715 = vmatprep.subr.mxu0 0.0
        %2716 = vmatpush1.xpose.msra.mxu0 0.0
        %2717 = vmatprep.subr.mxu0 0.0
        %2718 = vmatpush1.xpose.msra.mxu0 0.0
        %2719 = vmatprep.subr.mxu0 0.0
        %2720 = vmatpush1.xpose.msra.mxu0 0.0
        %2721 = vmatprep.subr.mxu0 0.0
        %2722 = vmatpush1.xpose.msra.mxu0 0.0
        %2723 = vmatprep.subr.mxu0 0.0
        %2724 = vmatpush1.xpose.msra.mxu0 0.0
        %2725 = vmatprep.subr.mxu0 0.0
        %2726 = vmatpush1.xpose.msra.mxu0 0.0
        %2727 = vmatprep.mubr.f32.mxu0 0.0
        %2728 = vmatmul.mubr.f32.gmra.mrb[0].mxu0 %v2518
        %v2729 = vpop.f32.mrb[0].mxu0
        %v2730 = vadd.f32 0.0, %v2729
        %v2731 = vpop.f32.mrb[0].mxu0
        %2732 = vdwg.mxu0
        %v2733 = vmul.f32 %v2730, %v388
        %v2734 = vadd.f32 %v2662, %v2733
        %2735 = vmatprep.subr.mxu0 0.0
        %2736 = vmatpush1.xpose.msra.mxu0 %v1317
        %2737 = vmatprep.subr.mxu0 0.0
        %2738 = vmatpush1.xpose.msra.mxu0 %v1320
        %2739 = vmatprep.subr.mxu0 0.0
        %2740 = vmatpush1.xpose.msra.mxu0 %v1323
        %2741 = vmatprep.subr.mxu0 0.0
        %2742 = vmatpush1.xpose.msra.mxu0 %v1326
        %2743 = vmatprep.subr.mxu0 0.0
        %2744 = vmatpush1.xpose.msra.mxu0 %v1329
        %2745 = vmatprep.subr.mxu0 0.0
        %2746 = vmatpush1.xpose.msra.mxu0 %v1332
        %2747 = vmatprep.subr.mxu0 0.0
        %2748 = vmatpush1.xpose.msra.mxu0 %v1335
        %2749 = vmatprep.subr.mxu0 0.0
        %2750 = vmatpush1.xpose.msra.mxu0 %v1338
        %2751 = vmatprep.subr.mxu0 0.0
        %2752 = vmatpush1.xpose.msra.mxu0 %v1341
        %2753 = vmatprep.subr.mxu0 0.0
        %2754 = vmatpush1.xpose.msra.mxu0 %v1344
        %2755 = vmatprep.subr.mxu0 0.0
        %2756 = vmatpush1.xpose.msra.mxu0 %v1347
        %2757 = vmatprep.subr.mxu0 0.0
        %2758 = vmatpush1.xpose.msra.mxu0 %v1350
        %2759 = vmatprep.subr.mxu0 0.0
        %2760 = vmatpush1.xpose.msra.mxu0 %v1353
        %2761 = vmatprep.subr.mxu0 0.0
        %2762 = vmatpush1.xpose.msra.mxu0 %v1356
        %2763 = vmatprep.subr.mxu0 0.0
        %2764 = vmatpush1.xpose.msra.mxu0 %v1359
        %2765 = vmatprep.subr.mxu0 0.0
        %2766 = vmatpush1.xpose.msra.mxu0 %v1362
        %2767 = vmatprep.subr.mxu0 0.0
        %2768 = vmatpush1.xpose.msra.mxu0 0.0
        %2769 = vmatprep.subr.mxu0 0.0
        %2770 = vmatpush1.xpose.msra.mxu0 0.0
        %2771 = vmatprep.subr.mxu0 0.0
        %2772 = vmatpush1.xpose.msra.mxu0 0.0
        %2773 = vmatprep.subr.mxu0 0.0
        %2774 = vmatpush1.xpose.msra.mxu0 0.0
        %2775 = vmatprep.subr.mxu0 0.0
        %2776 = vmatpush1.xpose.msra.mxu0 0.0
        %2777 = vmatprep.subr.mxu0 0.0
        %2778 = vmatpush1.xpose.msra.mxu0 0.0
        %2779 = vmatprep.subr.mxu0 0.0
        %2780 = vmatpush1.xpose.msra.mxu0 0.0
        %2781 = vmatprep.subr.mxu0 0.0
        %2782 = vmatpush1.xpose.msra.mxu0 0.0
        %2783 = vmatprep.subr.mxu0 0.0
        %2784 = vmatpush1.xpose.msra.mxu0 0.0
        %2785 = vmatprep.subr.mxu0 0.0
        %2786 = vmatpush1.xpose.msra.mxu0 0.0
        %2787 = vmatprep.subr.mxu0 0.0
        %2788 = vmatpush1.xpose.msra.mxu0 0.0
        %2789 = vmatprep.subr.mxu0 0.0
        %2790 = vmatpush1.xpose.msra.mxu0 0.0
        %2791 = vmatprep.subr.mxu0 0.0
        %2792 = vmatpush1.xpose.msra.mxu0 0.0
        %2793 = vmatprep.subr.mxu0 0.0
        %2794 = vmatpush1.xpose.msra.mxu0 0.0
        %2795 = vmatprep.subr.mxu0 0.0
        %2796 = vmatpush1.xpose.msra.mxu0 0.0
        %2797 = vmatprep.subr.mxu0 0.0
        %2798 = vmatpush1.xpose.msra.mxu0 0.0
        %2799 = vmatprep.mubr.f32.mxu0 0.0
        %2800 = vmatmul.mubr.f32.gmra.mrb[0].mxu0 %v2518
        %v2801 = vpop.f32.mrb[0].mxu0
        %v2802 = vadd.f32 0.0, %v2801
        %v2803 = vpop.f32.mrb[0].mxu0
        %2804 = vdwg.mxu0
        %v2805 = vmul.f32 %v2802, %v483
        %v2806 = vadd.f32 %v2734, %v2805
        %2807 = vmatprep.subr.mxu0 0.0
        %2808 = vmatpush1.xpose.msra.mxu0 %v1437
        %2809 = vmatprep.subr.mxu0 0.0
        %2810 = vmatpush1.xpose.msra.mxu0 %v1440
        %2811 = vmatprep.subr.mxu0 0.0
        %2812 = vmatpush1.xpose.msra.mxu0 %v1443
        %2813 = vmatprep.subr.mxu0 0.0
        %2814 = vmatpush1.xpose.msra.mxu0 %v1446
        %2815 = vmatprep.subr.mxu0 0.0
        %2816 = vmatpush1.xpose.msra.mxu0 %v1449
        %2817 = vmatprep.subr.mxu0 0.0
        %2818 = vmatpush1.xpose.msra.mxu0 %v1452
        %2819 = vmatprep.subr.mxu0 0.0
        %2820 = vmatpush1.xpose.msra.mxu0 %v1455
        %2821 = vmatprep.subr.mxu0 0.0
        %2822 = vmatpush1.xpose.msra.mxu0 %v1458
        %2823 = vmatprep.subr.mxu0 0.0
        %2824 = vmatpush1.xpose.msra.mxu0 %v1461
        %2825 = vmatprep.subr.mxu0 0.0
        %2826 = vmatpush1.xpose.msra.mxu0 %v1464
        %2827 = vmatprep.subr.mxu0 0.0
        %2828 = vmatpush1.xpose.msra.mxu0 %v1467
        %2829 = vmatprep.subr.mxu0 0.0
        %2830 = vmatpush1.xpose.msra.mxu0 %v1470
        %2831 = vmatprep.subr.mxu0 0.0
        %2832 = vmatpush1.xpose.msra.mxu0 %v1473
        %2833 = vmatprep.subr.mxu0 0.0
        %2834 = vmatpush1.xpose.msra.mxu0 %v1476
        %2835 = vmatprep.subr.mxu0 0.0
        %2836 = vmatpush1.xpose.msra.mxu0 %v1479
        %2837 = vmatprep.subr.mxu0 0.0
        %2838 = vmatpush1.xpose.msra.mxu0 %v1482
        %2839 = vmatprep.subr.mxu0 0.0
        %2840 = vmatpush1.xpose.msra.mxu0 0.0
        %2841 = vmatprep.subr.mxu0 0.0
        %2842 = vmatpush1.xpose.msra.mxu0 0.0
        %2843 = vmatprep.subr.mxu0 0.0
        %2844 = vmatpush1.xpose.msra.mxu0 0.0
        %2845 = vmatprep.subr.mxu0 0.0
        %2846 = vmatpush1.xpose.msra.mxu0 0.0
        %2847 = vmatprep.subr.mxu0 0.0
        %2848 = vmatpush1.xpose.msra.mxu0 0.0
        %2849 = vmatprep.subr.mxu0 0.0
        %2850 = vmatpush1.xpose.msra.mxu0 0.0
        %2851 = vmatprep.subr.mxu0 0.0
        %2852 = vmatpush1.xpose.msra.mxu0 0.0
        %2853 = vmatprep.subr.mxu0 0.0
        %2854 = vmatpush1.xpose.msra.mxu0 0.0
        %2855 = vmatprep.subr.mxu0 0.0
        %2856 = vmatpush1.xpose.msra.mxu0 0.0
        %2857 = vmatprep.subr.mxu0 0.0
        %2858 = vmatpush1.xpose.msra.mxu0 0.0
        %2859 = vmatprep.subr.mxu0 0.0
        %2860 = vmatpush1.xpose.msra.mxu0 0.0
        %2861 = vmatprep.subr.mxu0 0.0
        %2862 = vmatpush1.xpose.msra.mxu0 0.0
        %2863 = vmatprep.subr.mxu0 0.0
        %2864 = vmatpush1.xpose.msra.mxu0 0.0
        %2865 = vmatprep.subr.mxu0 0.0
        %2866 = vmatpush1.xpose.msra.mxu0 0.0
        %2867 = vmatprep.subr.mxu0 0.0
        %2868 = vmatpush1.xpose.msra.mxu0 0.0
        %2869 = vmatprep.subr.mxu0 0.0
        %2870 = vmatpush1.xpose.msra.mxu0 0.0
        %2871 = vmatprep.mubr.f32.mxu0 0.0
        %2872 = vmatmul.mubr.f32.gmra.mrb[0].mxu0 %v2518
        %v2873 = vpop.f32.mrb[0].mxu0
        %v2874 = vadd.f32 0.0, %v2873
        %v2875 = vpop.f32.mrb[0].mxu0
        %2876 = vdwg.mxu0
        %v2877 = vmul.f32 %v2874, %v578
        %v2878 = vadd.f32 %v2806, %v2877
        %2879 = vmatprep.subr.mxu0 0.0
        %2880 = vmatpush1.xpose.msra.mxu0 %v1557
        %2881 = vmatprep.subr.mxu0 0.0
        %2882 = vmatpush1.xpose.msra.mxu0 %v1560
        %2883 = vmatprep.subr.mxu0 0.0
        %2884 = vmatpush1.xpose.msra.mxu0 %v1563
        %2885 = vmatprep.subr.mxu0 0.0
        %2886 = vmatpush1.xpose.msra.mxu0 %v1566
        %2887 = vmatprep.subr.mxu0 0.0
        %2888 = vmatpush1.xpose.msra.mxu0 %v1569
        %2889 = vmatprep.subr.mxu0 0.0
        %2890 = vmatpush1.xpose.msra.mxu0 %v1572
        %2891 = vmatprep.subr.mxu0 0.0
        %2892 = vmatpush1.xpose.msra.mxu0 %v1575
        %2893 = vmatprep.subr.mxu0 0.0
        %2894 = vmatpush1.xpose.msra.mxu0 %v1578
        %2895 = vmatprep.subr.mxu0 0.0
        %2896 = vmatpush1.xpose.msra.mxu0 %v1581
        %2897 = vmatprep.subr.mxu0 0.0
        %2898 = vmatpush1.xpose.msra.mxu0 %v1584
        %2899 = vmatprep.subr.mxu0 0.0
        %2900 = vmatpush1.xpose.msra.mxu0 %v1587
        %2901 = vmatprep.subr.mxu0 0.0
        %2902 = vmatpush1.xpose.msra.mxu0 %v1590
        %2903 = vmatprep.subr.mxu0 0.0
        %2904 = vmatpush1.xpose.msra.mxu0 %v1593
        %2905 = vmatprep.subr.mxu0 0.0
        %2906 = vmatpush1.xpose.msra.mxu0 %v1596
        %2907 = vmatprep.subr.mxu0 0.0
        %2908 = vmatpush1.xpose.msra.mxu0 %v1599
        %2909 = vmatprep.subr.mxu0 0.0
        %2910 = vmatpush1.xpose.msra.mxu0 %v1602
        %2911 = vmatprep.subr.mxu0 0.0
        %2912 = vmatpush1.xpose.msra.mxu0 0.0
        %2913 = vmatprep.subr.mxu0 0.0
        %2914 = vmatpush1.xpose.msra.mxu0 0.0
        %2915 = vmatprep.subr.mxu0 0.0
        %2916 = vmatpush1.xpose.msra.mxu0 0.0
        %2917 = vmatprep.subr.mxu0 0.0
        %2918 = vmatpush1.xpose.msra.mxu0 0.0
        %2919 = vmatprep.subr.mxu0 0.0
        %2920 = vmatpush1.xpose.msra.mxu0 0.0
        %2921 = vmatprep.subr.mxu0 0.0
        %2922 = vmatpush1.xpose.msra.mxu0 0.0
        %2923 = vmatprep.subr.mxu0 0.0
        %2924 = vmatpush1.xpose.msra.mxu0 0.0
        %2925 = vmatprep.subr.mxu0 0.0
        %2926 = vmatpush1.xpose.msra.mxu0 0.0
        %2927 = vmatprep.subr.mxu0 0.0
        %2928 = vmatpush1.xpose.msra.mxu0 0.0
        %2929 = vmatprep.subr.mxu0 0.0
        %2930 = vmatpush1.xpose.msra.mxu0 0.0
        %2931 = vmatprep.subr.mxu0 0.0
        %2932 = vmatpush1.xpose.msra.mxu0 0.0
        %2933 = vmatprep.subr.mxu0 0.0
        %2934 = vmatpush1.xpose.msra.mxu0 0.0
        %2935 = vmatprep.subr.mxu0 0.0
        %2936 = vmatpush1.xpose.msra.mxu0 0.0
        %2937 = vmatprep.subr.mxu0 0.0
        %2938 = vmatpush1.xpose.msra.mxu0 0.0
        %2939 = vmatprep.subr.mxu0 0.0
        %2940 = vmatpush1.xpose.msra.mxu0 0.0
        %2941 = vmatprep.subr.mxu0 0.0
        %2942 = vmatpush1.xpose.msra.mxu0 0.0
        %2943 = vmatprep.mubr.f32.mxu0 0.0
        %2944 = vmatmul.mubr.f32.gmra.mrb[0].mxu0 %v2518
        %v2945 = vpop.f32.mrb[0].mxu0
        %v2946 = vadd.f32 0.0, %v2945
        %v2947 = vpop.f32.mrb[0].mxu0
        %2948 = vdwg.mxu0
        %v2949 = vmul.f32 %v2946, %v673
        %v2950 = vadd.f32 %v2878, %v2949
        %2951 = vmatprep.subr.mxu0 0.0
        %2952 = vmatpush1.xpose.msra.mxu0 %v1677
        %2953 = vmatprep.subr.mxu0 0.0
        %2954 = vmatpush1.xpose.msra.mxu0 %v1680
        %2955 = vmatprep.subr.mxu0 0.0
        %2956 = vmatpush1.xpose.msra.mxu0 %v1683
        %2957 = vmatprep.subr.mxu0 0.0
        %2958 = vmatpush1.xpose.msra.mxu0 %v1686
        %2959 = vmatprep.subr.mxu0 0.0
        %2960 = vmatpush1.xpose.msra.mxu0 %v1689
        %2961 = vmatprep.subr.mxu0 0.0
        %2962 = vmatpush1.xpose.msra.mxu0 %v1692
        %2963 = vmatprep.subr.mxu0 0.0
        %2964 = vmatpush1.xpose.msra.mxu0 %v1695
        %2965 = vmatprep.subr.mxu0 0.0
        %2966 = vmatpush1.xpose.msra.mxu0 %v1698
        %2967 = vmatprep.subr.mxu0 0.0
        %2968 = vmatpush1.xpose.msra.mxu0 %v1701
        %2969 = vmatprep.subr.mxu0 0.0
        %2970 = vmatpush1.xpose.msra.mxu0 %v1704
        %2971 = vmatprep.subr.mxu0 0.0
        %2972 = vmatpush1.xpose.msra.mxu0 %v1707
        %2973 = vmatprep.subr.mxu0 0.0
        %2974 = vmatpush1.xpose.msra.mxu0 %v1710
        %2975 = vmatprep.subr.mxu0 0.0
        %2976 = vmatpush1.xpose.msra.mxu0 %v1713
        %2977 = vmatprep.subr.mxu0 0.0
        %2978 = vmatpush1.xpose.msra.mxu0 %v1716
        %2979 = vmatprep.subr.mxu0 0.0
        %2980 = vmatpush1.xpose.msra.mxu0 %v1719
        %2981 = vmatprep.subr.mxu0 0.0
        %2982 = vmatpush1.xpose.msra.mxu0 %v1722
        %2983 = vmatprep.subr.mxu0 0.0
        %2984 = vmatpush1.xpose.msra.mxu0 0.0
        %2985 = vmatprep.subr.mxu0 0.0
        %2986 = vmatpush1.xpose.msra.mxu0 0.0
        %2987 = vmatprep.subr.mxu0 0.0
        %2988 = vmatpush1.xpose.msra.mxu0 0.0
        %2989 = vmatprep.subr.mxu0 0.0
        %2990 = vmatpush1.xpose.msra.mxu0 0.0
        %2991 = vmatprep.subr.mxu0 0.0
        %2992 = vmatpush1.xpose.msra.mxu0 0.0
        %2993 = vmatprep.subr.mxu0 0.0
        %2994 = vmatpush1.xpose.msra.mxu0 0.0
        %2995 = vmatprep.subr.mxu0 0.0
        %2996 = vmatpush1.xpose.msra.mxu0 0.0
        %2997 = vmatprep.subr.mxu0 0.0
        %2998 = vmatpush1.xpose.msra.mxu0 0.0
        %2999 = vmatprep.subr.mxu0 0.0
        %3000 = vmatpush1.xpose.msra.mxu0 0.0
        %3001 = vmatprep.subr.mxu0 0.0
        %3002 = vmatpush1.xpose.msra.mxu0 0.0
        %3003 = vmatprep.subr.mxu0 0.0
        %3004 = vmatpush1.xpose.msra.mxu0 0.0
        %3005 = vmatprep.subr.mxu0 0.0
        %3006 = vmatpush1.xpose.msra.mxu0 0.0
        %3007 = vmatprep.subr.mxu0 0.0
        %3008 = vmatpush1.xpose.msra.mxu0 0.0
        %3009 = vmatprep.subr.mxu0 0.0
        %3010 = vmatpush1.xpose.msra.mxu0 0.0
        %3011 = vmatprep.subr.mxu0 0.0
        %3012 = vmatpush1.xpose.msra.mxu0 0.0
        %3013 = vmatprep.subr.mxu0 0.0
        %3014 = vmatpush1.xpose.msra.mxu0 0.0
        %3015 = vmatprep.mubr.f32.mxu0 0.0
        %3016 = vmatmul.mubr.f32.gmra.mrb[0].mxu0 %v2518
        %v3017 = vpop.f32.mrb[0].mxu0
        %v3018 = vadd.f32 0.0, %v3017
        %v3019 = vpop.f32.mrb[0].mxu0
        %3020 = vdwg.mxu0
        %v3021 = vmul.f32 %v3018, %v768
        %v3022 = vadd.f32 %v2950, %v3021
        %3023 = vmatprep.subr.mxu0 0.0
        %3024 = vmatpush1.xpose.msra.mxu0 %v1797
        %3025 = vmatprep.subr.mxu0 0.0
        %3026 = vmatpush1.xpose.msra.mxu0 %v1800
        %3027 = vmatprep.subr.mxu0 0.0
        %3028 = vmatpush1.xpose.msra.mxu0 %v1803
        %3029 = vmatprep.subr.mxu0 0.0
        %3030 = vmatpush1.xpose.msra.mxu0 %v1806
        %3031 = vmatprep.subr.mxu0 0.0
        %3032 = vmatpush1.xpose.msra.mxu0 %v1809
        %3033 = vmatprep.subr.mxu0 0.0
        %3034 = vmatpush1.xpose.msra.mxu0 %v1812
        %3035 = vmatprep.subr.mxu0 0.0
        %3036 = vmatpush1.xpose.msra.mxu0 %v1815
        %3037 = vmatprep.subr.mxu0 0.0
        %3038 = vmatpush1.xpose.msra.mxu0 %v1818
        %3039 = vmatprep.subr.mxu0 0.0
        %3040 = vmatpush1.xpose.msra.mxu0 %v1821
        %3041 = vmatprep.subr.mxu0 0.0
        %3042 = vmatpush1.xpose.msra.mxu0 %v1824
        %3043 = vmatprep.subr.mxu0 0.0
        %3044 = vmatpush1.xpose.msra.mxu0 %v1827
        %3045 = vmatprep.subr.mxu0 0.0
        %3046 = vmatpush1.xpose.msra.mxu0 %v1830
        %3047 = vmatprep.subr.mxu0 0.0
        %3048 = vmatpush1.xpose.msra.mxu0 %v1833
        %3049 = vmatprep.subr.mxu0 0.0
        %3050 = vmatpush1.xpose.msra.mxu0 %v1836
        %3051 = vmatprep.subr.mxu0 0.0
        %3052 = vmatpush1.xpose.msra.mxu0 %v1839
        %3053 = vmatprep.subr.mxu0 0.0
        %3054 = vmatpush1.xpose.msra.mxu0 %v1842
        %3055 = vmatprep.subr.mxu0 0.0
        %3056 = vmatpush1.xpose.msra.mxu0 0.0
        %3057 = vmatprep.subr.mxu0 0.0
        %3058 = vmatpush1.xpose.msra.mxu0 0.0
        %3059 = vmatprep.subr.mxu0 0.0
        %3060 = vmatpush1.xpose.msra.mxu0 0.0
        %3061 = vmatprep.subr.mxu0 0.0
        %3062 = vmatpush1.xpose.msra.mxu0 0.0
        %3063 = vmatprep.subr.mxu0 0.0
        %3064 = vmatpush1.xpose.msra.mxu0 0.0
        %3065 = vmatprep.subr.mxu0 0.0
        %3066 = vmatpush1.xpose.msra.mxu0 0.0
        %3067 = vmatprep.subr.mxu0 0.0
        %3068 = vmatpush1.xpose.msra.mxu0 0.0
        %3069 = vmatprep.subr.mxu0 0.0
        %3070 = vmatpush1.xpose.msra.mxu0 0.0
        %3071 = vmatprep.subr.mxu0 0.0
        %3072 = vmatpush1.xpose.msra.mxu0 0.0
        %3073 = vmatprep.subr.mxu0 0.0
        %3074 = vmatpush1.xpose.msra.mxu0 0.0
        %3075 = vmatprep.subr.mxu0 0.0
        %3076 = vmatpush1.xpose.msra.mxu0 0.0
        %3077 = vmatprep.subr.mxu0 0.0
        %3078 = vmatpush1.xpose.msra.mxu0 0.0
        %3079 = vmatprep.subr.mxu0 0.0
        %3080 = vmatpush1.xpose.msra.mxu0 0.0
        %3081 = vmatprep.subr.mxu0 0.0
        %3082 = vmatpush1.xpose.msra.mxu0 0.0
        %3083 = vmatprep.subr.mxu0 0.0
        %3084 = vmatpush1.xpose.msra.mxu0 0.0
        %3085 = vmatprep.subr.mxu0 0.0
        %3086 = vmatpush1.xpose.msra.mxu0 0.0
        %3087 = vmatprep.mubr.f32.mxu0 0.0
        %3088 = vmatmul.mubr.f32.gmra.mrb[0].mxu0 %v2518
        %v3089 = vpop.f32.mrb[0].mxu0
        %v3090 = vadd.f32 0.0, %v3089
        %v3091 = vpop.f32.mrb[0].mxu0
        %3092 = vdwg.mxu0
        %v3093 = vmul.f32 %v3090, %v863
        %v3094 = vadd.f32 %v3022, %v3093
        %v3095 = vadd.f32 %v1915, %v3094
        %v3096 = vsel %vm1916, %v3095, -inf
        %3097 = vmax.xlane.f32.xlu0 %v3096
        %v3098 = vpop.xlane.xlu0 %3097
        %v3099 = vsub.f32 %v3095, %v3098
        %v3100 = vmul.f32 %v3099, 1.442695
        %v3101 = vpow.pop %v3100
        %v3102 = vsel %vm1916, %v3101, 0.0
        %3103 = vadd.xlane.f32.xlu0 %v3102
        %v3104 = vpop.xlane.xlu0 %3103
        %v3105 = vrcp.pop %v3104
        %v3106 = vmul.f32 %v3101, %v3105
        %v3107 = vmul.f32 %v3106, %v294
        %v3108 = vmul.f32 %v3106, %v219
        %3109 = vmatprep.subr.mxu0 0.0
        %3110 = vmatpush1.msra.mxu0 %v199
        %3111 = vmatprep.subr.mxu0 0.0
        %3112 = vmatpush1.msra.mxu0 %v200
        %3113 = vmatprep.subr.mxu0 0.0
        %3114 = vmatpush1.msra.mxu0 %v201
        %3115 = vmatprep.subr.mxu0 0.0
        %3116 = vmatpush1.msra.mxu0 %v202
        %3117 = vmatprep.subr.mxu0 0.0
        %3118 = vmatpush1.msra.mxu0 %v203
        %3119 = vmatprep.subr.mxu0 0.0
        %3120 = vmatpush1.msra.mxu0 %v204
        %3121 = vmatprep.subr.mxu0 0.0
        %3122 = vmatpush1.msra.mxu0 %v205
        %3123 = vmatprep.subr.mxu0 0.0
        %3124 = vmatpush1.msra.mxu0 %v206
        %3125 = vmatprep.subr.mxu0 0.0
        %3126 = vmatpush1.msra.mxu0 %v207
        %3127 = vmatprep.subr.mxu0 0.0
        %3128 = vmatpush1.msra.mxu0 %v208
        %3129 = vmatprep.subr.mxu0 0.0
        %3130 = vmatpush1.msra.mxu0 %v209
        %3131 = vmatprep.subr.mxu0 0.0
        %3132 = vmatpush1.msra.mxu0 %v210
        %3133 = vmatprep.subr.mxu0 0.0
        %3134 = vmatpush1.msra.mxu0 %v211
        %3135 = vmatprep.subr.mxu0 0.0
        %3136 = vmatpush1.msra.mxu0 %v212
        %3137 = vmatprep.subr.mxu0 0.0
        %3138 = vmatpush1.msra.mxu0 %v213
        %3139 = vmatprep.subr.mxu0 0.0
        %3140 = vmatpush1.msra.mxu0 %v214
        %3141 = vmatprep.subr.mxu0 0.0
        %3142 = vmatpush1.msra.mxu0 0.0
        %3143 = vmatprep.subr.mxu0 0.0
        %3144 = vmatpush1.msra.mxu0 0.0
        %3145 = vmatprep.subr.mxu0 0.0
        %3146 = vmatpush1.msra.mxu0 0.0
        %3147 = vmatprep.subr.mxu0 0.0
        %3148 = vmatpush1.msra.mxu0 0.0
        %3149 = vmatprep.subr.mxu0 0.0
        %3150 = vmatpush1.msra.mxu0 0.0
        %3151 = vmatprep.subr.mxu0 0.0
        %3152 = vmatpush1.msra.mxu0 0.0
        %3153 = vmatprep.subr.mxu0 0.0
        %3154 = vmatpush1.msra.mxu0 0.0
        %3155 = vmatprep.subr.mxu0 0.0
        %3156 = vmatpush1.msra.mxu0 0.0
        %3157 = vmatprep.subr.mxu0 0.0
        %3158 = vmatpush1.msra.mxu0 0.0
        %3159 = vmatprep.subr.mxu0 0.0
        %3160 = vmatpush1.msra.mxu0 0.0
        %3161 = vmatprep.subr.mxu0 0.0
        %3162 = vmatpush1.msra.mxu0 0.0
        %3163 = vmatprep.subr.mxu0 0.0
        %3164 = vmatpush1.msra.mxu0 0.0
        %3165 = vmatprep.subr.mxu0 0.0
        %3166 = vmatpush1.msra.mxu0 0.0
        %3167 = vmatprep.subr.mxu0 0.0
        %3168 = vmatpush1.msra.mxu0 0.0
        %3169 = vmatprep.subr.mxu0 0.0
        %3170 = vmatpush1.msra.mxu0 0.0
        %3171 = vmatprep.subr.mxu0 0.0
        %3172 = vmatpush1.msra.mxu0 0.0
        %3173 = vmatprep.mubr.f32.mxu0 0.0
        %3174 = vmatmul.mubr.f32.gmra.mrb[0].mxu0 %v3108
        %v3175 = vpop.f32.mrb[0].mxu0
        %v3176 = vadd.f32 0.0, %v3175
        %v3177 = vpop.f32.mrb[0].mxu0
        %3178 = vdwg.mxu0
        %3179 = vmatprep.subr.mxu0 0.0
        %3180 = vmatpush1.msra.mxu0 %v180
        %3181 = vmatprep.subr.mxu0 0.0
        %3182 = vmatpush1.msra.mxu0 %v181
        %3183 = vmatprep.subr.mxu0 0.0
        %3184 = vmatpush1.msra.mxu0 %v182
        %3185 = vmatprep.subr.mxu0 0.0
        %3186 = vmatpush1.msra.mxu0 %v183
        %3187 = vmatprep.subr.mxu0 0.0
        %3188 = vmatpush1.msra.mxu0 %v184
        %3189 = vmatprep.subr.mxu0 0.0
        %3190 = vmatpush1.msra.mxu0 %v185
        %3191 = vmatprep.subr.mxu0 0.0
        %3192 = vmatpush1.msra.mxu0 %v186
        %3193 = vmatprep.subr.mxu0 0.0
        %3194 = vmatpush1.msra.mxu0 %v187
        %3195 = vmatprep.subr.mxu0 0.0
        %3196 = vmatpush1.msra.mxu0 %v188
        %3197 = vmatprep.subr.mxu0 0.0
        %3198 = vmatpush1.msra.mxu0 %v189
        %3199 = vmatprep.subr.mxu0 0.0
        %3200 = vmatpush1.msra.mxu0 %v190
        %3201 = vmatprep.subr.mxu0 0.0
        %3202 = vmatpush1.msra.mxu0 %v191
        %3203 = vmatprep.subr.mxu0 0.0
        %3204 = vmatpush1.msra.mxu0 %v192
        %3205 = vmatprep.subr.mxu0 0.0
        %3206 = vmatpush1.msra.mxu0 %v193
        %3207 = vmatprep.subr.mxu0 0.0
        %3208 = vmatpush1.msra.mxu0 %v194
        %3209 = vmatprep.subr.mxu0 0.0
        %3210 = vmatpush1.msra.mxu0 %v195
        %3211 = vmatprep.subr.mxu0 0.0
        %3212 = vmatpush1.msra.mxu0 0.0
        %3213 = vmatprep.subr.mxu0 0.0
        %3214 = vmatpush1.msra.mxu0 0.0
        %3215 = vmatprep.subr.mxu0 0.0
        %3216 = vmatpush1.msra.mxu0 0.0
        %3217 = vmatprep.subr.mxu0 0.0
        %3218 = vmatpush1.msra.mxu0 0.0
        %3219 = vmatprep.subr.mxu0 0.0
        %3220 = vmatpush1.msra.mxu0 0.0
        %3221 = vmatprep.subr.mxu0 0.0
        %3222 = vmatpush1.msra.mxu0 0.0
        %3223 = vmatprep.subr.mxu0 0.0
        %3224 = vmatpush1.msra.mxu0 0.0
        %3225 = vmatprep.subr.mxu0 0.0
        %3226 = vmatpush1.msra.mxu0 0.0
        %3227 = vmatprep.subr.mxu0 0.0
        %3228 = vmatpush1.msra.mxu0 0.0
        %3229 = vmatprep.subr.mxu0 0.0
        %3230 = vmatpush1.msra.mxu0 0.0
        %3231 = vmatprep.subr.mxu0 0.0
        %3232 = vmatpush1.msra.mxu0 0.0
        %3233 = vmatprep.subr.mxu0 0.0
        %3234 = vmatpush1.msra.mxu0 0.0
        %3235 = vmatprep.subr.mxu0 0.0
        %3236 = vmatpush1.msra.mxu0 0.0
        %3237 = vmatprep.subr.mxu0 0.0
        %3238 = vmatpush1.msra.mxu0 0.0
        %3239 = vmatprep.subr.mxu0 0.0
        %3240 = vmatpush1.msra.mxu0 0.0
        %3241 = vmatprep.subr.mxu0 0.0
        %3242 = vmatpush1.msra.mxu0 0.0
        %3243 = vmatprep.mubr.f32.mxu0 0.0
        %3244 = vmatmul.mubr.f32.gmra.mrb[0].mxu0 %v3107
        %v3245 = vpop.f32.mrb[0].mxu0
        %v3246 = vadd.f32 %v3176, %v3245
        %v3247 = vpop.f32.mrb[0].mxu0
        %3248 = vdwg.mxu0
        %v3249 = vmul.f32 %v3106, %v388
        %3250 = vmatprep.subr.mxu0 0.0
        %3251 = vmatpush1.msra.mxu0 %v369
        %3252 = vmatprep.subr.mxu0 0.0
        %3253 = vmatpush1.msra.mxu0 %v370
        %3254 = vmatprep.subr.mxu0 0.0
        %3255 = vmatpush1.msra.mxu0 %v371
        %3256 = vmatprep.subr.mxu0 0.0
        %3257 = vmatpush1.msra.mxu0 %v372
        %3258 = vmatprep.subr.mxu0 0.0
        %3259 = vmatpush1.msra.mxu0 %v373
        %3260 = vmatprep.subr.mxu0 0.0
        %3261 = vmatpush1.msra.mxu0 %v374
        %3262 = vmatprep.subr.mxu0 0.0
        %3263 = vmatpush1.msra.mxu0 %v375
        %3264 = vmatprep.subr.mxu0 0.0
        %3265 = vmatpush1.msra.mxu0 %v376
        %3266 = vmatprep.subr.mxu0 0.0
        %3267 = vmatpush1.msra.mxu0 %v377
        %3268 = vmatprep.subr.mxu0 0.0
        %3269 = vmatpush1.msra.mxu0 %v378
        %3270 = vmatprep.subr.mxu0 0.0
        %3271 = vmatpush1.msra.mxu0 %v379
        %3272 = vmatprep.subr.mxu0 0.0
        %3273 = vmatpush1.msra.mxu0 %v380
        %3274 = vmatprep.subr.mxu0 0.0
        %3275 = vmatpush1.msra.mxu0 %v381
        %3276 = vmatprep.subr.mxu0 0.0
        %3277 = vmatpush1.msra.mxu0 %v382
        %3278 = vmatprep.subr.mxu0 0.0
        %3279 = vmatpush1.msra.mxu0 %v383
        %3280 = vmatprep.subr.mxu0 0.0
        %3281 = vmatpush1.msra.mxu0 %v384
        %3282 = vmatprep.subr.mxu0 0.0
        %3283 = vmatpush1.msra.mxu0 0.0
        %3284 = vmatprep.subr.mxu0 0.0
        %3285 = vmatpush1.msra.mxu0 0.0
        %3286 = vmatprep.subr.mxu0 0.0
        %3287 = vmatpush1.msra.mxu0 0.0
        %3288 = vmatprep.subr.mxu0 0.0
        %3289 = vmatpush1.msra.mxu0 0.0
        %3290 = vmatprep.subr.mxu0 0.0
        %3291 = vmatpush1.msra.mxu0 0.0
        %3292 = vmatprep.subr.mxu0 0.0
        %3293 = vmatpush1.msra.mxu0 0.0
        %3294 = vmatprep.subr.mxu0 0.0
        %3295 = vmatpush1.msra.mxu0 0.0
        %3296 = vmatprep.subr.mxu0 0.0
        %3297 = vmatpush1.msra.mxu0 0.0
        %3298 = vmatprep.subr.mxu0 0.0
        %3299 = vmatpush1.msra.mxu0 0.0
        %3300 = vmatprep.subr.mxu0 0.0
        %3301 = vmatpush1.msra.mxu0 0.0
        %3302 = vmatprep.subr.mxu0 0.0
        %3303 = vmatpush1.msra.mxu0 0.0
        %3304 = vmatprep.subr.mxu0 0.0
        %3305 = vmatpush1.msra.mxu0 0.0
        %3306 = vmatprep.subr.mxu0 0.0
        %3307 = vmatpush1.msra.mxu0 0.0
        %3308 = vmatprep.subr.mxu0 0.0
        %3309 = vmatpush1.msra.mxu0 0.0
        %3310 = vmatprep.subr.mxu0 0.0
        %3311 = vmatpush1.msra.mxu0 0.0
        %3312 = vmatprep.subr.mxu0 0.0
        %3313 = vmatpush1.msra.mxu0 0.0
        %3314 = vmatprep.mubr.f32.mxu0 0.0
        %3315 = vmatmul.mubr.f32.gmra.mrb[0].mxu0 %v3249
        %v3316 = vpop.f32.mrb[0].mxu0
        %v3317 = vadd.f32 0.0, %v3316
        %v3318 = vpop.f32.mrb[0].mxu0
        %3319 = vdwg.mxu0
        %v3320 = vadd.f32 %v3246, %v3317
        %v3321 = vmul.f32 %v3106, %v483
        %3322 = vmatprep.subr.mxu0 0.0
        %3323 = vmatpush1.msra.mxu0 %v464
        %3324 = vmatprep.subr.mxu0 0.0
        %3325 = vmatpush1.msra.mxu0 %v465
        %3326 = vmatprep.subr.mxu0 0.0
        %3327 = vmatpush1.msra.mxu0 %v466
        %3328 = vmatprep.subr.mxu0 0.0
        %3329 = vmatpush1.msra.mxu0 %v467
        %3330 = vmatprep.subr.mxu0 0.0
        %3331 = vmatpush1.msra.mxu0 %v468
        %3332 = vmatprep.subr.mxu0 0.0
        %3333 = vmatpush1.msra.mxu0 %v469
        %3334 = vmatprep.subr.mxu0 0.0
        %3335 = vmatpush1.msra.mxu0 %v470
        %3336 = vmatprep.subr.mxu0 0.0
        %3337 = vmatpush1.msra.mxu0 %v471
        %3338 = vmatprep.subr.mxu0 0.0
        %3339 = vmatpush1.msra.mxu0 %v472
        %3340 = vmatprep.subr.mxu0 0.0
        %3341 = vmatpush1.msra.mxu0 %v473
        %3342 = vmatprep.subr.mxu0 0.0
        %3343 = vmatpush1.msra.mxu0 %v474
        %3344 = vmatprep.subr.mxu0 0.0
        %3345 = vmatpush1.msra.mxu0 %v475
        %3346 = vmatprep.subr.mxu0 0.0
        %3347 = vmatpush1.msra.mxu0 %v476
        %3348 = vmatprep.subr.mxu0 0.0
        %3349 = vmatpush1.msra.mxu0 %v477
        %3350 = vmatprep.subr.mxu0 0.0
        %3351 = vmatpush1.msra.mxu0 %v478
        %3352 = vmatprep.subr.mxu0 0.0
        %3353 = vmatpush1.msra.mxu0 %v479
        %3354 = vmatprep.subr.mxu0 0.0
        %3355 = vmatpush1.msra.mxu0 0.0
        %3356 = vmatprep.subr.mxu0 0.0
        %3357 = vmatpush1.msra.mxu0 0.0
        %3358 = vmatprep.subr.mxu0 0.0
        %3359 = vmatpush1.msra.mxu0 0.0
        %3360 = vmatprep.subr.mxu0 0.0
        %3361 = vmatpush1.msra.mxu0 0.0
        %3362 = vmatprep.subr.mxu0 0.0
        %3363 = vmatpush1.msra.mxu0 0.0
        %3364 = vmatprep.subr.mxu0 0.0
        %3365 = vmatpush1.msra.mxu0 0.0
        %3366 = vmatprep.subr.mxu0 0.0
        %3367 = vmatpush1.msra.mxu0 0.0
        %3368 = vmatprep.subr.mxu0 0.0
        %3369 = vmatpush1.msra.mxu0 0.0
        %3370 = vmatprep.subr.mxu0 0.0
        %3371 = vmatpush1.msra.mxu0 0.0
        %3372 = vmatprep.subr.mxu0 0.0
        %3373 = vmatpush1.msra.mxu0 0.0
        %3374 = vmatprep.subr.mxu0 0.0
        %3375 = vmatpush1.msra.mxu0 0.0
        %3376 = vmatprep.subr.mxu0 0.0
        %3377 = vmatpush1.msra.mxu0 0.0
        %3378 = vmatprep.subr.mxu0 0.0
        %3379 = vmatpush1.msra.mxu0 0.0
        %3380 = vmatprep.subr.mxu0 0.0
        %3381 = vmatpush1.msra.mxu0 0.0
        %3382 = vmatprep.subr.mxu0 0.0
        %3383 = vmatpush1.msra.mxu0 0.0
        %3384 = vmatprep.subr.mxu0 0.0
        %3385 = vmatpush1.msra.mxu0 0.0
        %3386 = vmatprep.mubr.f32.mxu0 0.0
        %3387 = vmatmul.mubr.f32.gmra.mrb[0].mxu0 %v3321
        %v3388 = vpop.f32.mrb[0].mxu0
        %v3389 = vadd.f32 0.0, %v3388
        %v3390 = vpop.f32.mrb[0].mxu0
        %3391 = vdwg.mxu0
        %v3392 = vadd.f32 %v3320, %v3389
        %v3393 = vmul.f32 %v3106, %v578
        %3394 = vmatprep.subr.mxu0 0.0
        %3395 = vmatpush1.msra.mxu0 %v559
        %3396 = vmatprep.subr.mxu0 0.0
        %3397 = vmatpush1.msra.mxu0 %v560
        %3398 = vmatprep.subr.mxu0 0.0
        %3399 = vmatpush1.msra.mxu0 %v561
        %3400 = vmatprep.subr.mxu0 0.0
        %3401 = vmatpush1.msra.mxu0 %v562
        %3402 = vmatprep.subr.mxu0 0.0
        %3403 = vmatpush1.msra.mxu0 %v563
        %3404 = vmatprep.subr.mxu0 0.0
        %3405 = vmatpush1.msra.mxu0 %v564
        %3406 = vmatprep.subr.mxu0 0.0
        %3407 = vmatpush1.msra.mxu0 %v565
        %3408 = vmatprep.subr.mxu0 0.0
        %3409 = vmatpush1.msra.mxu0 %v566
        %3410 = vmatprep.subr.mxu0 0.0
        %3411 = vmatpush1.msra.mxu0 %v567
        %3412 = vmatprep.subr.mxu0 0.0
        %3413 = vmatpush1.msra.mxu0 %v568
        %3414 = vmatprep.subr.mxu0 0.0
        %3415 = vmatpush1.msra.mxu0 %v569
        %3416 = vmatprep.subr.mxu0 0.0
        %3417 = vmatpush1.msra.mxu0 %v570
        %3418 = vmatprep.subr.mxu0 0.0
        %3419 = vmatpush1.msra.mxu0 %v571
        %3420 = vmatprep.subr.mxu0 0.0
        %3421 = vmatpush1.msra.mxu0 %v572
        %3422 = vmatprep.subr.mxu0 0.0
        %3423 = vmatpush1.msra.mxu0 %v573
        %3424 = vmatprep.subr.mxu0 0.0
        %3425 = vmatpush1.msra.mxu0 %v574
        %3426 = vmatprep.subr.mxu0 0.0
        %3427 = vmatpush1.msra.mxu0 0.0
        %3428 = vmatprep.subr.mxu0 0.0
        %3429 = vmatpush1.msra.mxu0 0.0
        %3430 = vmatprep.subr.mxu0 0.0
        %3431 = vmatpush1.msra.mxu0 0.0
        %3432 = vmatprep.subr.mxu0 0.0
        %3433 = vmatpush1.msra.mxu0 0.0
        %3434 = vmatprep.subr.mxu0 0.0
        %3435 = vmatpush1.msra.mxu0 0.0
        %3436 = vmatprep.subr.mxu0 0.0
        %3437 = vmatpush1.msra.mxu0 0.0
        %3438 = vmatprep.subr.mxu0 0.0
        %3439 = vmatpush1.msra.mxu0 0.0
        %3440 = vmatprep.subr.mxu0 0.0
        %3441 = vmatpush1.msra.mxu0 0.0
        %3442 = vmatprep.subr.mxu0 0.0
        %3443 = vmatpush1.msra.mxu0 0.0
        %3444 = vmatprep.subr.mxu0 0.0
        %3445 = vmatpush1.msra.mxu0 0.0
        %3446 = vmatprep.subr.mxu0 0.0
        %3447 = vmatpush1.msra.mxu0 0.0
        %3448 = vmatprep.subr.mxu0 0.0
        %3449 = vmatpush1.msra.mxu0 0.0
        %3450 = vmatprep.subr.mxu0 0.0
        %3451 = vmatpush1.msra.mxu0 0.0
        %3452 = vmatprep.subr.mxu0 0.0
        %3453 = vmatpush1.msra.mxu0 0.0
        %3454 = vmatprep.subr.mxu0 0.0
        %3455 = vmatpush1.msra.mxu0 0.0
        %3456 = vmatprep.subr.mxu0 0.0
        %3457 = vmatpush1.msra.mxu0 0.0
        %3458 = vmatprep.mubr.f32.mxu0 0.0
        %3459 = vmatmul.mubr.f32.gmra.mrb[0].mxu0 %v3393
        %v3460 = vpop.f32.mrb[0].mxu0
        %v3461 = vadd.f32 0.0, %v3460
        %v3462 = vpop.f32.mrb[0].mxu0
        %3463 = vdwg.mxu0
        %v3464 = vadd.f32 %v3392, %v3461
        %v3465 = vmul.f32 %v3106, %v673
        %3466 = vmatprep.subr.mxu0 0.0
        %3467 = vmatpush1.msra.mxu0 %v654
        %3468 = vmatprep.subr.mxu0 0.0
        %3469 = vmatpush1.msra.mxu0 %v655
        %3470 = vmatprep.subr.mxu0 0.0
        %3471 = vmatpush1.msra.mxu0 %v656
        %3472 = vmatprep.subr.mxu0 0.0
        %3473 = vmatpush1.msra.mxu0 %v657
        %3474 = vmatprep.subr.mxu0 0.0
        %3475 = vmatpush1.msra.mxu0 %v658
        %3476 = vmatprep.subr.mxu0 0.0
        %3477 = vmatpush1.msra.mxu0 %v659
        %3478 = vmatprep.subr.mxu0 0.0
        %3479 = vmatpush1.msra.mxu0 %v660
        %3480 = vmatprep.subr.mxu0 0.0
        %3481 = vmatpush1.msra.mxu0 %v661
        %3482 = vmatprep.subr.mxu0 0.0
        %3483 = vmatpush1.msra.mxu0 %v662
        %3484 = vmatprep.subr.mxu0 0.0
        %3485 = vmatpush1.msra.mxu0 %v663
        %3486 = vmatprep.subr.mxu0 0.0
        %3487 = vmatpush1.msra.mxu0 %v664
        %3488 = vmatprep.subr.mxu0 0.0
        %3489 = vmatpush1.msra.mxu0 %v665
        %3490 = vmatprep.subr.mxu0 0.0
        %3491 = vmatpush1.msra.mxu0 %v666
        %3492 = vmatprep.subr.mxu0 0.0
        %3493 = vmatpush1.msra.mxu0 %v667
        %3494 = vmatprep.subr.mxu0 0.0
        %3495 = vmatpush1.msra.mxu0 %v668
        %3496 = vmatprep.subr.mxu0 0.0
        %3497 = vmatpush1.msra.mxu0 %v669
        %3498 = vmatprep.subr.mxu0 0.0
        %3499 = vmatpush1.msra.mxu0 0.0
        %3500 = vmatprep.subr.mxu0 0.0
        %3501 = vmatpush1.msra.mxu0 0.0
        %3502 = vmatprep.subr.mxu0 0.0
        %3503 = vmatpush1.msra.mxu0 0.0
        %3504 = vmatprep.subr.mxu0 0.0
        %3505 = vmatpush1.msra.mxu0 0.0
        %3506 = vmatprep.subr.mxu0 0.0
        %3507 = vmatpush1.msra.mxu0 0.0
        %3508 = vmatprep.subr.mxu0 0.0
        %3509 = vmatpush1.msra.mxu0 0.0
        %3510 = vmatprep.subr.mxu0 0.0
        %3511 = vmatpush1.msra.mxu0 0.0
        %3512 = vmatprep.subr.mxu0 0.0
        %3513 = vmatpush1.msra.mxu0 0.0
        %3514 = vmatprep.subr.mxu0 0.0
        %3515 = vmatpush1.msra.mxu0 0.0
        %3516 = vmatprep.subr.mxu0 0.0
        %3517 = vmatpush1.msra.mxu0 0.0
        %3518 = vmatprep.subr.mxu0 0.0
        %3519 = vmatpush1.msra.mxu0 0.0
        %3520 = vmatprep.subr.mxu0 0.0
        %3521 = vmatpush1.msra.mxu0 0.0
        %3522 = vmatprep.subr.mxu0 0.0
        %3523 = vmatpush1.msra.mxu0 0.0
        %3524 = vmatprep.subr.mxu0 0.0
        %3525 = vmatpush1.msra.mxu0 0.0
        %3526 = vmatprep.subr.mxu0 0.0
        %3527 = vmatpush1.msra.mxu0 0.0
        %3528 = vmatprep.subr.mxu0 0.0
        %3529 = vmatpush1.msra.mxu0 0.0
        %3530 = vmatprep.mubr.f32.mxu0 0.0
        %3531 = vmatmul.mubr.f32.gmra.mrb[0].mxu0 %v3465
        %v3532 = vpop.f32.mrb[0].mxu0
        %v3533 = vadd.f32 0.0, %v3532
        %v3534 = vpop.f32.mrb[0].mxu0
        %3535 = vdwg.mxu0
        %v3536 = vadd.f32 %v3464, %v3533
        %v3537 = vmul.f32 %v3106, %v768
        %3538 = vmatprep.subr.mxu0 0.0
        %3539 = vmatpush1.msra.mxu0 %v749
        %3540 = vmatprep.subr.mxu0 0.0
        %3541 = vmatpush1.msra.mxu0 %v750
        %3542 = vmatprep.subr.mxu0 0.0
        %3543 = vmatpush1.msra.mxu0 %v751
        %3544 = vmatprep.subr.mxu0 0.0
        %3545 = vmatpush1.msra.mxu0 %v752
        %3546 = vmatprep.subr.mxu0 0.0
        %3547 = vmatpush1.msra.mxu0 %v753
        %3548 = vmatprep.subr.mxu0 0.0
        %3549 = vmatpush1.msra.mxu0 %v754
        %3550 = vmatprep.subr.mxu0 0.0
        %3551 = vmatpush1.msra.mxu0 %v755
        %3552 = vmatprep.subr.mxu0 0.0
        %3553 = vmatpush1.msra.mxu0 %v756
        %3554 = vmatprep.subr.mxu0 0.0
        %3555 = vmatpush1.msra.mxu0 %v757
        %3556 = vmatprep.subr.mxu0 0.0
        %3557 = vmatpush1.msra.mxu0 %v758
        %3558 = vmatprep.subr.mxu0 0.0
        %3559 = vmatpush1.msra.mxu0 %v759
        %3560 = vmatprep.subr.mxu0 0.0
        %3561 = vmatpush1.msra.mxu0 %v760
        %3562 = vmatprep.subr.mxu0 0.0
        %3563 = vmatpush1.msra.mxu0 %v761
        %3564 = vmatprep.subr.mxu0 0.0
        %3565 = vmatpush1.msra.mxu0 %v762
        %3566 = vmatprep.subr.mxu0 0.0
        %3567 = vmatpush1.msra.mxu0 %v763
        %3568 = vmatprep.subr.mxu0 0.0
        %3569 = vmatpush1.msra.mxu0 %v764
        %3570 = vmatprep.subr.mxu0 0.0
        %3571 = vmatpush1.msra.mxu0 0.0
        %3572 = vmatprep.subr.mxu0 0.0
        %3573 = vmatpush1.msra.mxu0 0.0
        %3574 = vmatprep.subr.mxu0 0.0
        %3575 = vmatpush1.msra.mxu0 0.0
        %3576 = vmatprep.subr.mxu0 0.0
        %3577 = vmatpush1.msra.mxu0 0.0
        %3578 = vmatprep.subr.mxu0 0.0
        %3579 = vmatpush1.msra.mxu0 0.0
        %3580 = vmatprep.subr.mxu0 0.0
        %3581 = vmatpush1.msra.mxu0 0.0
        %3582 = vmatprep.subr.mxu0 0.0
        %3583 = vmatpush1.msra.mxu0 0.0
        %3584 = vmatprep.subr.mxu0 0.0
        %3585 = vmatpush1.msra.mxu0 0.0
        %3586 = vmatprep.subr.mxu0 0.0
        %3587 = vmatpush1.msra.mxu0 0.0
        %3588 = vmatprep.subr.mxu0 0.0
        %3589 = vmatpush1.msra.mxu0 0.0
        %3590 = vmatprep.subr.mxu0 0.0
        %3591 = vmatpush1.msra.mxu0 0.0
        %3592 = vmatprep.subr.mxu0 0.0
        %3593 = vmatpush1.msra.mxu0 0.0
        %3594 = vmatprep.subr.mxu0 0.0
        %3595 = vmatpush1.msra.mxu0 0.0
        %3596 = vmatprep.subr.mxu0 0.0
        %3597 = vmatpush1.msra.mxu0 0.0
        %3598 = vmatprep.subr.mxu0 0.0
        %3599 = vmatpush1.msra.mxu0 0.0
        %3600 = vmatprep.subr.mxu0 0.0
        %3601 = vmatpush1.msra.mxu0 0.0
        %3602 = vmatprep.mubr.f32.mxu0 0.0
        %3603 = vmatmul.mubr.f32.gmra.mrb[0].mxu0 %v3537
        %v3604 = vpop.f32.mrb[0].mxu0
        %v3605 = vadd.f32 0.0, %v3604
        %v3606 = vpop.f32.mrb[0].mxu0
        %3607 = vdwg.mxu0
        %v3608 = vadd.f32 %v3536, %v3605
        %v3609 = vmul.f32 %v3106, %v863
        %3610 = vmatprep.subr.mxu0 0.0
        %3611 = vmatpush1.msra.mxu0 %v844
        %3612 = vmatprep.subr.mxu0 0.0
        %3613 = vmatpush1.msra.mxu0 %v845
        %3614 = vmatprep.subr.mxu0 0.0
        %3615 = vmatpush1.msra.mxu0 %v846
        %3616 = vmatprep.subr.mxu0 0.0
        %3617 = vmatpush1.msra.mxu0 %v847
        %3618 = vmatprep.subr.mxu0 0.0
        %3619 = vmatpush1.msra.mxu0 %v848
        %3620 = vmatprep.subr.mxu0 0.0
        %3621 = vmatpush1.msra.mxu0 %v849
        %3622 = vmatprep.subr.mxu0 0.0
        %3623 = vmatpush1.msra.mxu0 %v850
        %3624 = vmatprep.subr.mxu0 0.0
        %3625 = vmatpush1.msra.mxu0 %v851
        %3626 = vmatprep.subr.mxu0 0.0
        %3627 = vmatpush1.msra.mxu0 %v852
        %3628 = vmatprep.subr.mxu0 0.0
        %3629 = vmatpush1.msra.mxu0 %v853
        %3630 = vmatprep.subr.mxu0 0.0
        %3631 = vmatpush1.msra.mxu0 %v854
        %3632 = vmatprep.subr.mxu0 0.0
        %3633 = vmatpush1.msra.mxu0 %v855
        %3634 = vmatprep.subr.mxu0 0.0
        %3635 = vmatpush1.msra.mxu0 %v856
        %3636 = vmatprep.subr.mxu0 0.0
        %3637 = vmatpush1.msra.mxu0 %v857
        %3638 = vmatprep.subr.mxu0 0.0
        %3639 = vmatpush1.msra.mxu0 %v858
        %3640 = vmatprep.subr.mxu0 0.0
        %3641 = vmatpush1.msra.mxu0 %v859
        %3642 = vmatprep.subr.mxu0 0.0
        %3643 = vmatpush1.msra.mxu0 0.0
        %3644 = vmatprep.subr.mxu0 0.0
        %3645 = vmatpush1.msra.mxu0 0.0
        %3646 = vmatprep.subr.mxu0 0.0
        %3647 = vmatpush1.msra.mxu0 0.0
        %3648 = vmatprep.subr.mxu0 0.0
        %3649 = vmatpush1.msra.mxu0 0.0
        %3650 = vmatprep.subr.mxu0 0.0
        %3651 = vmatpush1.msra.mxu0 0.0
        %3652 = vmatprep.subr.mxu0 0.0
        %3653 = vmatpush1.msra.mxu0 0.0
        %3654 = vmatprep.subr.mxu0 0.0
        %3655 = vmatpush1.msra.mxu0 0.0
        %3656 = vmatprep.subr.mxu0 0.0
        %3657 = vmatpush1.msra.mxu0 0.0
        %3658 = vmatprep.subr.mxu0 0.0
        %3659 = vmatpush1.msra.mxu0 0.0
        %3660 = vmatprep.subr.mxu0 0.0
        %3661 = vmatpush1.msra.mxu0 0.0
        %3662 = vmatprep.subr.mxu0 0.0
        %3663 = vmatpush1.msra.mxu0 0.0
        %3664 = vmatprep.subr.mxu0 0.0
        %3665 = vmatpush1.msra.mxu0 0.0
        %3666 = vmatprep.subr.mxu0 0.0
        %3667 = vmatpush1.msra.mxu0 0.0
        %3668 = vmatprep.subr.mxu0 0.0
        %3669 = vmatpush1.msra.mxu0 0.0
        %3670 = vmatprep.subr.mxu0 0.0
        %3671 = vmatpush1.msra.mxu0 0.0
        %3672 = vmatprep.subr.mxu0 0.0
        %3673 = vmatpush1.msra.mxu0 0.0
        %3674 = vmatprep.mubr.f32.mxu0 0.0
        %3675 = vmatmul.mubr.f32.gmra.mrb[0].mxu0 %v3609
        %v3676 = vpop.f32.mrb[0].mxu0
        %v3677 = vadd.f32 0.0, %v3676
        %v3678 = vpop.f32.mrb[0].mxu0
        %3679 = vdwg.mxu0
        %v3680 = vadd.f32 %v3608, %v3677
        %v3681 = vmul.f32 %v3680, %v3680
        %v3682 = vsel %vm938, %v3681, 0.0
        %3683 = vadd.xlane.f32.xlu0 %v3682
        %v3684 = vpop.xlane.xlu0 %3683
        %v3685 = vrsqrt.pop %v3684
        %v3686 = vmul.f32 %v3684, %v3685
        %vm3687 = vcmp.eq.f32.partialorder %v3684, inf
        %v3688 = vsel %vm3687, %v3684, %v3686
        %vm3689 = vcmp.eq.f32.partialorder %v3684, 0.0
        %v3690 = vand.u32 %v3684, 2147483648
        %v3691 = vsel %vm3689, %v3690, %v3688
        %v3692 = vadd.f32 %v3684, 1.0
        %v3693 = vrcp.pop %v3692
        %v3694 = vmul.f32 %v3691, %v3693
        %v3695 = vmul.f32 %v3680, %v3694
        %3696 = vst.msk [vmem:[%s166] sm:$0x3] %vm938, %v3695
        %s3697 = sand.u32 %s90, 1
        %s3698 = scalar_lea.sflag [#allocation3], %s3697
        %s3699 = sand.u32 %s90, 1
        %s3700 = smul.addr %s3699, 2
        %s3701 = scalar_lea.vmem [#allocation2], %s3700
        // Predicated region
        $region29: #{tpu_custom_call.1} parent=27 // pred_check
          %p3702 = pneg %p100
        $region30: #{tpu_custom_call.1} parent=27 // pred_check_branch
          %3704 = sbr.rel (%p3702) target = $region32
        $region31: #{tpu_custom_call.1} parent=27 // pred_region
          %s3706 = ssub.s32 32, 32
          %3707 = vsyncadd %s3698, %s3706
          %s3708 = sadd.s32 %s20, %s21
          %s3709 = smul.addr %s3708, 32
          %s3710 = scalar_lea.hbm %s2, %s3709
          %s3712 = sshll.u32 %s3701, 4
          %s3713 = int_to_ptr.vmem [resolvable:$true] %s3712
          %3715 = dma.vmem_to_hbm [thread:$0]  %s3713, 32, %s3710, %s3698
        $region32: #{tpu_custom_call.1} parent=27 // pred_fallthru
          _
      $region28: #{tpu_custom_call.1} parent=5 // pred_fallthru
        _
      %p3716 = scmp.le.s32.totalorder 2, %s11
      // Predicated region
      $region33: #{tpu_custom_call.1} parent=5 // pred_check
        %p3717 = pneg %p3716
      $region34: #{tpu_custom_call.1} parent=5 // pred_check_branch
        %3719 = sbr.rel (%p3717) target = $region36
      $region35: #{tpu_custom_call.1} parent=5 // pred_region
        %s3720 = ssub.s32 %s11, 2
        // Predicated region
        $region37: #{tpu_custom_call.1} parent=35 // pred_check
          %p3721 = pneg %p106
        $region38: #{tpu_custom_call.1} parent=35 // pred_check_branch
          %3723 = sbr.rel (%p3721) target = $region40
        $region39: #{tpu_custom_call.1} parent=35 // pred_region
          %s3724 = sand.u32 %s91, 1
          %s3725 = scalar_lea.sflag [#allocation3], %s3724
          %s3726 = sand.u32 %s91, 1
          %s3727 = smul.addr %s3726, 2
          %s3728 = scalar_lea.vmem [#allocation2], %s3727
          %3729 = dma.done %s3725, 32
        $region40: #{tpu_custom_call.1} parent=35 // pred_fallthru
          _
      $region36: #{tpu_custom_call.1} parent=5 // pred_fallthru
        _
    $region6: #{tpu_custom_call.1} parent=1 // loop_footer
      %s15 = sadd.s32 1, %s11
    $region7: #{tpu_custom_call.1} parent=1 // loop_footer_branch
      %10 = sbr.rel target = $region3
    $region8: #{tpu_custom_call.1} parent=1 // loop_exit
      _
    %3730 = vsyncpa [#allocation3], 1
    %s3731 = scalar_lea.sflag [#allocation3], 1
    %3732 = vsyncpa %s3731, 1

</llo_original>
